<compile_context>
chip_gen: v7x
topology: tpu7x:2x2x1
jax: 0.10.0
libtpu: 0.0.40
codegen_flags: <defaults>
</compile_context>

<pallas_src>
import functools

import jax
import jax.numpy as jnp
import numpy as np
from jax.experimental import pallas as pl
from jax.experimental.pallas import tpu as pltpu


# ----------------------------- helpers ---------------------------------------


def _layernorm(x, g, b, eps=1e-5):
    # PyTorch nn.LayerNorm semantics: biased variance over last dim, eps inside sqrt.
    x = x.astype(jnp.float32)
    mu = jnp.mean(x, axis=-1, keepdims=True)
    var = jnp.mean((x - mu) ** 2, axis=-1, keepdims=True)
    return (x - mu) * jax.lax.rsqrt(var + eps) * g + b


# ----------------------------- kernel ----------------------------------------


def perceiver_attention_kernel(
    x_ref,        # (TB, N_x, dim)
    lat_ref,      # (TB, N_l, dim)
    ng_ref,       # (1, dim)   norm.weight
    nb_ref,       # (1, dim)   norm.bias
    nlg_ref,      # (1, dim)   norm_latents.weight
    nlb_ref,      # (1, dim)   norm_latents.bias
    wq_ref,       # (dim, inner)
    wkv_ref,      # (dim, 2*inner)
    wo_ref,       # (inner, dim)
    og_ref,       # (1, dim)   to_out LayerNorm weight
    ob_ref,       # (1, dim)   to_out LayerNorm bias
    o_ref,        # (TB, N_l, dim)  output
    *,
    heads: int,
    dim_head: int,
    compute_dtype,
):
    tb, n_x, dim = x_ref.shape
    _, n_l, _ = lat_ref.shape
    n_kv = n_x + n_l
    inner = heads * dim_head
    scale = dim_head ** -0.5
    cdt = compute_dtype
    exact_recip = jnp.dtype(cdt) == jnp.dtype(jnp.float32)

    # ---- input LayerNorms (f32 VPU math) over flattened rows. ----
    xn = _layernorm(x_ref[...].reshape(tb * n_x, dim), ng_ref[...], nb_ref[...])
    latn = _layernorm(lat_ref[...].reshape(tb * n_l, dim), nlg_ref[...], nlb_ref[...])
    xn3 = xn.reshape(tb, n_x, dim)
    latn3 = latn.reshape(tb, n_l, dim)

    # kv input per-batch contiguous: one concat along the sequence axis.
    kv_in = jnp.concatenate([xn3, latn3], axis=1).reshape(tb * n_kv, dim).astype(cdt)
    lat_flat = latn.astype(cdt)                                  # (tb*n_l, dim)

    # ---- projections: wide MXU matmuls, f32 accumulation. ----
    q = jnp.dot(lat_flat, wq_ref[...], preferred_element_type=jnp.float32) * scale
    if inner % 128 == 0:
        # Lane-aligned (production): single fused kv matmul, free lane slice.
        kv = jnp.dot(kv_in, wkv_ref[...], preferred_element_type=jnp.float32)
        k, v = kv[:, :inner], kv[:, inner:]
    else:
        # Unaligned inner: two matmuls on weight-column views (avoids slicing the
        # large kv result at a sub-128 lane boundary).
        w_kv = wkv_ref[...]
        k = jnp.dot(kv_in, w_kv[:, :inner], preferred_element_type=jnp.float32)
        v = jnp.dot(kv_in, w_kv[:, inner:], preferred_element_type=jnp.float32)

    q = q.astype(cdt)    # (tb*n_l,  inner)
    k = k.astype(cdt)    # (tb*n_kv, inner)
    v = v.astype(cdt)

    # (batch*heads)-major stacks so the attention einsums have one LEADING
    # batch dim (the batched dot_general form Mosaic reliably lowers).
    def to_bh(t, n):  # (tb*n, heads*dim_head) -> (tb*heads, n, dim_head)
        return jnp.stack(
            [t[b * n:(b + 1) * n, h * dim_head:(h + 1) * dim_head]
             for b in range(tb) for h in range(heads)], axis=0)

    q3 = to_bh(q, n_l)     # (tb*heads, n_l,  d)
    k3 = to_bh(k, n_kv)    # (tb*heads, n_kv, d)
    v3 = to_bh(v, n_kv)    # (tb*heads, n_kv, d)

    # ---- batched attention; softmax in f32. ----
    sim = jnp.einsum("bqd,bkd->bqk", q3, k3,
                     preferred_element_type=jnp.float32)         # (tb*heads, n_l, n_kv)
    sim = sim - jnp.max(sim, axis=-1, keepdims=True)
    p = jnp.exp(sim)
    denom = jnp.sum(p, axis=-1, keepdims=True)
    p = p * pl.reciprocal(denom, approx=not exact_recip)
    o3 = jnp.einsum("bqk,bkd->bqd", p.astype(cdt), v3,
                    preferred_element_type=jnp.float32)          # (tb*heads, n_l, d)

    # '(b h) q d -> (b q) (h d)'
    per_batch = [jnp.concatenate([o3[b * heads + h] for h in range(heads)], axis=-1)
                 for b in range(tb)]
    out_flat = per_batch[0] if tb == 1 else jnp.concatenate(per_batch, axis=0)

    # ---- to_out: Linear(inner -> dim, bias=False) then LayerNorm(dim). ----
    o = jnp.dot(out_flat.astype(cdt), wo_ref[...],
                preferred_element_type=jnp.float32)
    o = _layernorm(o, og_ref[...], ob_ref[...])
    o_ref[...] = o.reshape(tb, n_l, dim).astype(o_ref.dtype)


# ----------------------------- wrapper ----------------------------------------


def perceiver_attention(x, latents, params, *, heads, dim_head,
                        block_b=1, compute_dtype=jnp.bfloat16):
    B, n_x, dim = x.shape
    _, n_l, _ = latents.shape
    n_kv = n_x + n_l
    inner = heads * dim_head
    assert B % block_b == 0, "block_b must divide the batch size"
    # NOTE: keep grid = B // block_b >= 2 on v7x (2 TensorCores per chip).

    # Cast matmul weights to the compute dtype on the host (halves weight DMA
    # bytes for bf16); LayerNorm params stay f32.
    wq = params["wq"].astype(compute_dtype)
    wkv = params["wkv"].astype(compute_dtype)
    wo = params["wo"].astype(compute_dtype)

    kernel = functools.partial(
        perceiver_attention_kernel,
        heads=heads, dim_head=dim_head, compute_dtype=compute_dtype)

    # Chip-aware VMEM budget: ~7/8 of physical (112 MiB v5e/v6e, 56 MiB v7x).
    try:
        vmem_cap = int(pltpu.get_tpu_info().vmem_capacity_bytes)
    except Exception:
        vmem_cap = 64 * 1024 * 1024
    vmem_limit = min(vmem_cap * 7 // 8, 112 * 1024 * 1024)

    # Advisory cost estimate for the XLA scheduler.
    w_item = jnp.dtype(compute_dtype).itemsize
    flops = 2 * B * (n_l * dim * inner            # q projection
                     + n_kv * dim * 2 * inner     # kv projection
                     + 2 * heads * n_l * n_kv * dim_head   # qk + av
                     + n_l * inner * dim)         # out projection
    transcendentals = B * heads * n_l * n_kv      # exp
    bytes_accessed = ((x.size + latents.size + B * n_l * dim) * x.dtype.itemsize
                      + (wq.size + wkv.size + wo.size) * w_item
                      + 6 * dim * 4)
    cost = pl.CostEstimate(flops=flops, transcendentals=transcendentals,
                           bytes_accessed=bytes_accessed)

    def _run(single_buffer_params):
        def const_spec(shape):
            idx = lambda b: (0,) * len(shape)
            if single_buffer_params:
                # Constant index map -> fetched once; single-buffer to halve
                # its VMEM footprint (matters most under v7x's 64 MiB).
                return pl.BlockSpec(shape, idx, pipeline_mode=pl.Buffered(1))
            return pl.BlockSpec(shape, idx)

        grid_spec = pltpu.PrefetchScalarGridSpec(
            num_scalar_prefetch=0,
            grid=(B // block_b,),
            in_specs=[
                pl.BlockSpec((block_b, n_x, dim), lambda b: (b, 0, 0)),   # x
                pl.BlockSpec((block_b, n_l, dim), lambda b: (b, 0, 0)),   # latents
                const_spec((1, dim)), const_spec((1, dim)),               # norm g, b
                const_spec((1, dim)), const_spec((1, dim)),               # norm_latents g, b
                const_spec((dim, inner)),                                 # to_q
                const_spec((dim, 2 * inner)),                             # to_kv
                const_spec((inner, dim)),                                 # to_out linear
                const_spec((1, dim)), const_spec((1, dim)),               # to_out LN g, b
            ],
            out_specs=pl.BlockSpec((block_b, n_l, dim), lambda b: (b, 0, 0)),
        )

        return pl.pallas_call(
            kernel,
            out_shape=jax.ShapeDtypeStruct((B, n_l, dim), x.dtype),
            grid_spec=grid_spec,
            compiler_params=pltpu.CompilerParams(
                dimension_semantics=("parallel",),
                vmem_limit_bytes=vmem_limit),
            cost_estimate=cost,
        )(x, latents,
          params["norm_g"], params["norm_b"],
          params["norm_lat_g"], params["norm_lat_b"],
          wq, wkv, wo,
          params["out_norm_g"], params["out_norm_b"])

    try:
        return _run(True)
    except Exception:
        # Fallback if this jax build rejects pipeline_mode=pl.Buffered(1);
        # genuine kernel errors re-raise from the fallback unchanged.
        return _run(False)


# ----------------------------- pure-JAX reference -----------------------------


def perceiver_attention_ref(x, latents, p, *, heads, dim_head,
                            matmul_dtype=jnp.float32):
    inner = heads * dim_head
    scale = dim_head ** -0.5
    md = matmul_dtype
    xn = _layernorm(x, p["norm_g"], p["norm_b"])
    ln = _layernorm(latents, p["norm_lat_g"], p["norm_lat_b"])
    wq = p["wq"].astype(md)
    wkv = p["wkv"].astype(md)
    wo = p["wo"].astype(md)

    q = jnp.einsum("bnd,df->bnf", ln.astype(md), wq,
                   preferred_element_type=jnp.float32) * scale
    kv_in = jnp.concatenate([xn, ln], axis=1).astype(md)
    kv = jnp.einsum("bnd,df->bnf", kv_in, wkv,
                    preferred_element_type=jnp.float32)
    k, v = kv[..., :inner], kv[..., inner:]

    def split(t):
        b, n, _ = t.shape
        return t.reshape(b, n, heads, dim_head).transpose(0, 2, 1, 3)

    q, k, v = split(q), split(k), split(v)
    sim = jnp.einsum("bhid,bhjd->bhij", q.astype(md), k.astype(md),
                     preferred_element_type=jnp.float32)
    attn = jax.nn.softmax(sim, axis=-1)
    out = jnp.einsum("bhij,bhjd->bhid", attn.astype(md), v.astype(md),
                     preferred_element_type=jnp.float32)
    out = out.transpose(0, 2, 1, 3).reshape(x.shape[0], -1, inner)
    out = jnp.einsum("bnf,fd->bnd", out.astype(md), wo,
                     preferred_element_type=jnp.float32)
    return _layernorm(out, p["out_norm_g"], p["out_norm_b"])


# ----------------------------- main --------------------------------------------


if __name__ == "__main__":
    B, n_x, n_l = 2, 16, 8
    dim, heads, dim_head = 32, 4, 16
    inner = heads * dim_head

    key = jax.random.PRNGKey(0)
    ks = jax.random.split(key, 12)

    x = jax.random.normal(ks[0], (B, n_x, dim), jnp.float32)
    latents = jax.random.normal(ks[1], (B, n_l, dim), jnp.float32)

    params = {
        "norm_g":     1.0 + 0.1 * jax.random.normal(ks[2], (1, dim), jnp.float32),
        "norm_b":     0.1 * jax.random.normal(ks[3], (1, dim), jnp.float32),
        "norm_lat_g": 1.0 + 0.1 * jax.random.normal(ks[4], (1, dim), jnp.float32),
        "norm_lat_b": 0.1 * jax.random.normal(ks[5], (1, dim), jnp.float32),
        "wq":         0.05 * jax.random.normal(ks[6], (dim, inner), jnp.float32),
        "wkv":        0.05 * jax.random.normal(ks[7], (dim, 2 * inner), jnp.float32),
        "wo":         0.05 * jax.random.normal(ks[8], (inner, dim), jnp.float32),
        "out_norm_g": 1.0 + 0.1 * jax.random.normal(ks[9], (1, dim), jnp.float32),
        "out_norm_b": 0.1 * jax.random.normal(ks[10], (1, dim), jnp.float32),
    }

    # 1) exact f32 matmul path, grid=(2,) ("parallel" -> both v7x cores busy).
    out_f32 = perceiver_attention(x, latents, params, heads=heads,
                                  dim_head=dim_head, block_b=1,
                                  compute_dtype=jnp.float32)
    out_f32 = jax.block_until_ready(out_f32)
    ref_f32 = perceiver_attention_ref(x, latents, params,
                                      heads=heads, dim_head=dim_head)
    np.testing.assert_allclose(np.asarray(out_f32), np.asarray(ref_f32),
                               atol=5e-3, rtol=5e-3)

    # 2) default bf16 matmul operands (f32 accumulation), grid=(2,).
    out_bf16 = perceiver_attention(x, latents, params, heads=heads,
                                   dim_head=dim_head, block_b=1)
    out_bf16 = jax.block_until_ready(out_bf16)
    ref_bf16 = perceiver_attention_ref(x, latents, params, heads=heads,
                                       dim_head=dim_head,
                                       matmul_dtype=jnp.bfloat16)
    np.testing.assert_allclose(np.asarray(out_bf16), np.asarray(ref_bf16),
                               atol=5e-2, rtol=5e-2)

    # 3) batch-blocked path (block_b=2) to exercise the multi-batch block code.
    out_blk = perceiver_attention(x, latents, params, heads=heads,
                                  dim_head=dim_head, block_b=2)
    out_blk = jax.block_until_ready(out_blk)
    np.testing.assert_allclose(np.asarray(out_blk), np.asarray(ref_bf16),
                               atol=5e-2, rtol=5e-2)

    print("KERNEL_OK")
</pallas_src>

<mosaic_0001>
module attributes {stable_mosaic.version = 11 : i64} {
  func.func @perceiver_attention_kernel(%arg0: i32, %arg1: memref<1x16x32xf32, #tpu.memory_space<vmem>>, %arg2: memref<1x8x32xf32, #tpu.memory_space<vmem>>, %arg3: memref<1x32xf32, #tpu.memory_space<vmem>>, %arg4: memref<1x32xf32, #tpu.memory_space<vmem>>, %arg5: memref<1x32xf32, #tpu.memory_space<vmem>>, %arg6: memref<1x32xf32, #tpu.memory_space<vmem>>, %arg7: memref<32x64xf32, #tpu.memory_space<vmem>>, %arg8: memref<32x128xf32, #tpu.memory_space<vmem>>, %arg9: memref<64x32xf32, #tpu.memory_space<vmem>>, %arg10: memref<1x32xf32, #tpu.memory_space<vmem>>, %arg11: memref<1x32xf32, #tpu.memory_space<vmem>>, %arg12: memref<1x8x32xf32, #tpu.memory_space<vmem>>) attributes {dimension_semantics = [#tpu.dimension_semantics<parallel>], iteration_bounds = array<i64: 2>, scalar_prefetch = 0 : i64, scratch_operands = 0 : i64, tpu.core_type = #tpu.core_type<tc>, window_params = [{transform_indices = @transform_0, window_bounds = array<i64: 1, 16, 32>}, {transform_indices = @transform_1, window_bounds = array<i64: 1, 8, 32>}, {pipeline_mode = #tpu.pipeline_mode<synchronous>, transform_indices = @transform_2, window_bounds = array<i64: 1, 32>}, {pipeline_mode = #tpu.pipeline_mode<synchronous>, transform_indices = @transform_3, window_bounds = array<i64: 1, 32>}, {pipeline_mode = #tpu.pipeline_mode<synchronous>, transform_indices = @transform_4, window_bounds = array<i64: 1, 32>}, {pipeline_mode = #tpu.pipeline_mode<synchronous>, transform_indices = @transform_5, window_bounds = array<i64: 1, 32>}, {pipeline_mode = #tpu.pipeline_mode<synchronous>, transform_indices = @transform_6, window_bounds = array<i64: 32, 64>}, {pipeline_mode = #tpu.pipeline_mode<synchronous>, transform_indices = @transform_7, window_bounds = array<i64: 32, 128>}, {pipeline_mode = #tpu.pipeline_mode<synchronous>, transform_indices = @transform_8, window_bounds = array<i64: 64, 32>}, {pipeline_mode = #tpu.pipeline_mode<synchronous>, transform_indices = @transform_9, window_bounds = array<i64: 1, 32>}, {pipeline_mode = #tpu.pipeline_mode<synchronous>, transform_indices = @transform_10, window_bounds = array<i64: 1, 32>}, {transform_indices = @transform_11, window_bounds = array<i64: 1, 8, 32>}]} {
    %c0 = arith.constant 0 : index
    %c0_0 = arith.constant 0 : index
    %c0_1 = arith.constant 0 : index
    %0 = vector.load %arg1[%c0, %c0_0, %c0_1] : memref<1x16x32xf32, #tpu.memory_space<vmem>>, vector<1x16x32xf32>
    %1 = vector.shape_cast %0 : vector<1x16x32xf32> to vector<16x32xf32>
    %c0_2 = arith.constant 0 : index
    %c0_3 = arith.constant 0 : index
    %2 = vector.load %arg3[%c0_2, %c0_3] : memref<1x32xf32, #tpu.memory_space<vmem>>, vector<1x32xf32>
    %c0_4 = arith.constant 0 : index
    %c0_5 = arith.constant 0 : index
    %3 = vector.load %arg4[%c0_4, %c0_5] : memref<1x32xf32, #tpu.memory_space<vmem>>, vector<1x32xf32>
    %cst = arith.constant dense<0.000000e+00> : vector<16xf32>
    %4 = vector.multi_reduction <add>, %1, %cst [1] : vector<16x32xf32> to vector<16xf32>
    %5 = vector.shape_cast %4 : vector<16xf32> to vector<16x1xf32>
    %cst_6 = arith.constant 3.200000e+01 : f32
    %6 = vector.broadcast %cst_6 : f32 to vector<16x1xf32>
    %7 = arith.divf %5, %6 : vector<16x1xf32>
    %8 = vector.broadcast %7 : vector<16x1xf32> to vector<16x32xf32>
    %9 = arith.subf %1, %8 : vector<16x32xf32>
    %10 = arith.mulf %9, %9 : vector<16x32xf32>
    %cst_7 = arith.constant dense<0.000000e+00> : vector<16xf32>
    %11 = vector.multi_reduction <add>, %10, %cst_7 [1] : vector<16x32xf32> to vector<16xf32>
    %12 = vector.shape_cast %11 : vector<16xf32> to vector<16x1xf32>
    %cst_8 = arith.constant 3.200000e+01 : f32
    %13 = vector.broadcast %cst_8 : f32 to vector<16x1xf32>
    %14 = arith.divf %12, %13 : vector<16x1xf32>
    %15 = vector.broadcast %7 : vector<16x1xf32> to vector<16x32xf32>
    %16 = arith.subf %1, %15 : vector<16x32xf32>
    %cst_9 = arith.constant 9.99999974E-6 : f32
    %17 = vector.broadcast %cst_9 : f32 to vector<16x1xf32>
    %18 = arith.addf %14, %17 : vector<16x1xf32>
    %19 = math.rsqrt %18 : vector<16x1xf32>
    %20 = vector.broadcast %19 : vector<16x1xf32> to vector<16x32xf32>
    %21 = arith.mulf %16, %20 : vector<16x32xf32>
    %22 = vector.broadcast %2 : vector<1x32xf32> to vector<16x32xf32>
    %23 = arith.mulf %21, %22 : vector<16x32xf32>
    %24 = vector.broadcast %3 : vector<1x32xf32> to vector<16x32xf32>
    %25 = arith.addf %23, %24 : vector<16x32xf32>
    %c0_10 = arith.constant 0 : index
    %c0_11 = arith.constant 0 : index
    %c0_12 = arith.constant 0 : index
    %26 = vector.load %arg2[%c0_10, %c0_11, %c0_12] : memref<1x8x32xf32, #tpu.memory_space<vmem>>, vector<1x8x32xf32>
    %27 = vector.shape_cast %26 : vector<1x8x32xf32> to vector<8x32xf32>
    %c0_13 = arith.constant 0 : index
    %c0_14 = arith.constant 0 : index
    %28 = vector.load %arg5[%c0_13, %c0_14] : memref<1x32xf32, #tpu.memory_space<vmem>>, vector<1x32xf32>
    %c0_15 = arith.constant 0 : index
    %c0_16 = arith.constant 0 : index
    %29 = vector.load %arg6[%c0_15, %c0_16] : memref<1x32xf32, #tpu.memory_space<vmem>>, vector<1x32xf32>
    %cst_17 = arith.constant dense<0.000000e+00> : vector<8xf32>
    %30 = vector.multi_reduction <add>, %27, %cst_17 [1] : vector<8x32xf32> to vector<8xf32>
    %31 = vector.shape_cast %30 : vector<8xf32> to vector<8x1xf32>
    %cst_18 = arith.constant 3.200000e+01 : f32
    %32 = vector.broadcast %cst_18 : f32 to vector<8x1xf32>
    %33 = arith.divf %31, %32 : vector<8x1xf32>
    %34 = vector.broadcast %33 : vector<8x1xf32> to vector<8x32xf32>
    %35 = arith.subf %27, %34 : vector<8x32xf32>
    %36 = arith.mulf %35, %35 : vector<8x32xf32>
    %cst_19 = arith.constant dense<0.000000e+00> : vector<8xf32>
    %37 = vector.multi_reduction <add>, %36, %cst_19 [1] : vector<8x32xf32> to vector<8xf32>
    %38 = vector.shape_cast %37 : vector<8xf32> to vector<8x1xf32>
    %cst_20 = arith.constant 3.200000e+01 : f32
    %39 = vector.broadcast %cst_20 : f32 to vector<8x1xf32>
    %40 = arith.divf %38, %39 : vector<8x1xf32>
    %41 = vector.broadcast %33 : vector<8x1xf32> to vector<8x32xf32>
    %42 = arith.subf %27, %41 : vector<8x32xf32>
    %cst_21 = arith.constant 9.99999974E-6 : f32
    %43 = vector.broadcast %cst_21 : f32 to vector<8x1xf32>
    %44 = arith.addf %40, %43 : vector<8x1xf32>
    %45 = math.rsqrt %44 : vector<8x1xf32>
    %46 = vector.broadcast %45 : vector<8x1xf32> to vector<8x32xf32>
    %47 = arith.mulf %42, %46 : vector<8x32xf32>
    %48 = vector.broadcast %28 : vector<1x32xf32> to vector<8x32xf32>
    %49 = arith.mulf %47, %48 : vector<8x32xf32>
    %50 = vector.broadcast %29 : vector<1x32xf32> to vector<8x32xf32>
    %51 = arith.addf %49, %50 : vector<8x32xf32>
    %52 = vector.shape_cast %25 : vector<16x32xf32> to vector<1x16x32xf32>
    %53 = vector.shape_cast %51 : vector<8x32xf32> to vector<1x8x32xf32>
    %54 = tpu.concatenate %52, %53 in 1 : vector<1x16x32xf32>, vector<1x8x32xf32> -> vector<1x24x32xf32>
    %55 = vector.shape_cast %54 : vector<1x24x32xf32> to vector<24x32xf32>
    %c0_22 = arith.constant 0 : index
    %c0_23 = arith.constant 0 : index
    %56 = vector.load %arg7[%c0_22, %c0_23] : memref<32x64xf32, #tpu.memory_space<vmem>>, vector<32x64xf32>
    %cst_24 = arith.constant dense<0.000000e+00> : vector<8x64xf32>
    %57 = tpu.matmul %51, %56, %cst_24 {dimension_numbers = #tpu.dot_dimension_numbers<[1], [0], [0], [1], [0, 0, 1, 1], [], []>} : vector<8x32xf32>, vector<32x64xf32>, vector<8x64xf32> -> vector<8x64xf32>
    %cst_25 = arith.constant 2.500000e-01 : f32
    %58 = vector.broadcast %cst_25 : f32 to vector<8x64xf32>
    %59 = arith.mulf %57, %58 : vector<8x64xf32>
    %c0_26 = arith.constant 0 : index
    %c0_27 = arith.constant 0 : index
    %60 = vector.load %arg8[%c0_26, %c0_27] : memref<32x128xf32, #tpu.memory_space<vmem>>, vector<32x128xf32>
    %61 = vector.extract_strided_slice %60 {offsets = [0, 0], sizes = [32, 64], strides = [1, 1]} : vector<32x128xf32> to vector<32x64xf32>
    %cst_28 = arith.constant dense<0.000000e+00> : vector<24x64xf32>
    %62 = tpu.matmul %55, %61, %cst_28 {dimension_numbers = #tpu.dot_dimension_numbers<[1], [0], [0], [1], [0, 0, 1, 1], [], []>} : vector<24x32xf32>, vector<32x64xf32>, vector<24x64xf32> -> vector<24x64xf32>
    %63 = vector.extract_strided_slice %60 {offsets = [0, 64], sizes = [32, 64], strides = [1, 1]} : vector<32x128xf32> to vector<32x64xf32>
    %cst_29 = arith.constant dense<0.000000e+00> : vector<24x64xf32>
    %64 = tpu.matmul %55, %63, %cst_29 {dimension_numbers = #tpu.dot_dimension_numbers<[1], [0], [0], [1], [0, 0, 1, 1], [], []>} : vector<24x32xf32>, vector<32x64xf32>, vector<24x64xf32> -> vector<24x64xf32>
    %65 = vector.extract_strided_slice %59 {offsets = [0, 0], sizes = [8, 16], strides = [1, 1]} : vector<8x64xf32> to vector<8x16xf32>
    %66 = vector.extract_strided_slice %59 {offsets = [0, 16], sizes = [8, 16], strides = [1, 1]} : vector<8x64xf32> to vector<8x16xf32>
    %67 = vector.extract_strided_slice %59 {offsets = [0, 32], sizes = [8, 16], strides = [1, 1]} : vector<8x64xf32> to vector<8x16xf32>
    %68 = vector.extract_strided_slice %59 {offsets = [0, 48], sizes = [8, 16], strides = [1, 1]} : vector<8x64xf32> to vector<8x16xf32>
    %69 = vector.shape_cast %65 : vector<8x16xf32> to vector<1x8x16xf32>
    %70 = vector.shape_cast %66 : vector<8x16xf32> to vector<1x8x16xf32>
    %71 = vector.shape_cast %67 : vector<8x16xf32> to vector<1x8x16xf32>
    %72 = vector.shape_cast %68 : vector<8x16xf32> to vector<1x8x16xf32>
    %73 = tpu.concatenate %69, %70, %71, %72 in 0 : vector<1x8x16xf32>, vector<1x8x16xf32>, vector<1x8x16xf32>, vector<1x8x16xf32> -> vector<4x8x16xf32>
    %74 = vector.extract_strided_slice %62 {offsets = [0, 0], sizes = [24, 16], strides = [1, 1]} : vector<24x64xf32> to vector<24x16xf32>
    %75 = vector.extract_strided_slice %62 {offsets = [0, 16], sizes = [24, 16], strides = [1, 1]} : vector<24x64xf32> to vector<24x16xf32>
    %76 = vector.extract_strided_slice %62 {offsets = [0, 32], sizes = [24, 16], strides = [1, 1]} : vector<24x64xf32> to vector<24x16xf32>
    %77 = vector.extract_strided_slice %62 {offsets = [0, 48], sizes = [24, 16], strides = [1, 1]} : vector<24x64xf32> to vector<24x16xf32>
    %78 = vector.shape_cast %74 : vector<24x16xf32> to vector<1x24x16xf32>
    %79 = vector.shape_cast %75 : vector<24x16xf32> to vector<1x24x16xf32>
    %80 = vector.shape_cast %76 : vector<24x16xf32> to vector<1x24x16xf32>
    %81 = vector.shape_cast %77 : vector<24x16xf32> to vector<1x24x16xf32>
    %82 = tpu.concatenate %78, %79, %80, %81 in 0 : vector<1x24x16xf32>, vector<1x24x16xf32>, vector<1x24x16xf32>, vector<1x24x16xf32> -> vector<4x24x16xf32>
    %83 = vector.extract_strided_slice %64 {offsets = [0, 0], sizes = [24, 16], strides = [1, 1]} : vector<24x64xf32> to vector<24x16xf32>
    %84 = vector.extract_strided_slice %64 {offsets = [0, 16], sizes = [24, 16], strides = [1, 1]} : vector<24x64xf32> to vector<24x16xf32>
    %85 = vector.extract_strided_slice %64 {offsets = [0, 32], sizes = [24, 16], strides = [1, 1]} : vector<24x64xf32> to vector<24x16xf32>
    %86 = vector.extract_strided_slice %64 {offsets = [0, 48], sizes = [24, 16], strides = [1, 1]} : vector<24x64xf32> to vector<24x16xf32>
    %87 = vector.shape_cast %83 : vector<24x16xf32> to vector<1x24x16xf32>
    %88 = vector.shape_cast %84 : vector<24x16xf32> to vector<1x24x16xf32>
    %89 = vector.shape_cast %85 : vector<24x16xf32> to vector<1x24x16xf32>
    %90 = vector.shape_cast %86 : vector<24x16xf32> to vector<1x24x16xf32>
    %91 = tpu.concatenate %87, %88, %89, %90 in 0 : vector<1x24x16xf32>, vector<1x24x16xf32>, vector<1x24x16xf32>, vector<1x24x16xf32> -> vector<4x24x16xf32>
    "tpu.trace_start"() <{level = 10 : i32, message = "bqd,bkd->bqk"}> : () -> ()
    %cst_30 = arith.constant dense<0.000000e+00> : vector<4x8x24xf32>
    %92 = tpu.matmul %73, %82, %cst_30 {dimension_numbers = #tpu.dot_dimension_numbers<[2], [2], [1], [1], [0, 0, 0, 1, 1, 1], [0], [0]>} : vector<4x8x16xf32>, vector<4x24x16xf32>, vector<4x8x24xf32> -> vector<4x8x24xf32>
    "tpu.trace_stop"() : () -> ()
    %cst_31 = arith.constant dense<0xFF800000> : vector<4x8xf32>
    %93 = vector.multi_reduction <maximumf>, %92, %cst_31 [2] : vector<4x8x24xf32> to vector<4x8xf32>
    %94 = vector.shape_cast %93 : vector<4x8xf32> to vector<4x8x1xf32>
    %95 = vector.broadcast %94 : vector<4x8x1xf32> to vector<4x8x24xf32>
    %96 = arith.subf %92, %95 : vector<4x8x24xf32>
    %97 = math.exp %96 : vector<4x8x24xf32>
    %cst_32 = arith.constant dense<0.000000e+00> : vector<4x8xf32>
    %98 = vector.multi_reduction <add>, %97, %cst_32 [2] : vector<4x8x24xf32> to vector<4x8xf32>
    %99 = vector.shape_cast %98 : vector<4x8xf32> to vector<4x8x1xf32>
    %100 = tpu.reciprocal %99 : vector<4x8x1xf32> -> vector<4x8x1xf32>
    %101 = vector.broadcast %100 : vector<4x8x1xf32> to vector<4x8x24xf32>
    %102 = arith.mulf %97, %101 : vector<4x8x24xf32>
    "tpu.trace_start"() <{level = 10 : i32, message = "bqk,bkd->bqd"}> : () -> ()
    %cst_33 = arith.constant dense<0.000000e+00> : vector<4x8x16xf32>
    %103 = tpu.matmul %102, %91, %cst_33 {dimension_numbers = #tpu.dot_dimension_numbers<[2], [1], [1], [2], [0, 0, 0, 1, 1, 2], [0], [0]>} : vector<4x8x24xf32>, vector<4x24x16xf32>, vector<4x8x16xf32> -> vector<4x8x16xf32>
    "tpu.trace_stop"() : () -> ()
    %104 = vector.extract_strided_slice %103 {offsets = [0, 0, 0], sizes = [1, 8, 16], strides = [1, 1, 1]} : vector<4x8x16xf32> to vector<1x8x16xf32>
    %105 = vector.shape_cast %104 : vector<1x8x16xf32> to vector<8x16xf32>
    %106 = vector.extract_strided_slice %103 {offsets = [1, 0, 0], sizes = [1, 8, 16], strides = [1, 1, 1]} : vector<4x8x16xf32> to vector<1x8x16xf32>
    %107 = vector.shape_cast %106 : vector<1x8x16xf32> to vector<8x16xf32>
    %108 = vector.extract_strided_slice %103 {offsets = [2, 0, 0], sizes = [1, 8, 16], strides = [1, 1, 1]} : vector<4x8x16xf32> to vector<1x8x16xf32>
    %109 = vector.shape_cast %108 : vector<1x8x16xf32> to vector<8x16xf32>
    %110 = vector.extract_strided_slice %103 {offsets = [3, 0, 0], sizes = [1, 8, 16], strides = [1, 1, 1]} : vector<4x8x16xf32> to vector<1x8x16xf32>
    %111 = vector.shape_cast %110 : vector<1x8x16xf32> to vector<8x16xf32>
    %112 = tpu.concatenate %105, %107, %109, %111 in 1 : vector<8x16xf32>, vector<8x16xf32>, vector<8x16xf32>, vector<8x16xf32> -> vector<8x64xf32>
    %c0_34 = arith.constant 0 : index
    %c0_35 = arith.constant 0 : index
    %113 = vector.load %arg9[%c0_34, %c0_35] : memref<64x32xf32, #tpu.memory_space<vmem>>, vector<64x32xf32>
    %cst_36 = arith.constant dense<0.000000e+00> : vector<8x32xf32>
    %114 = tpu.matmul %112, %113, %cst_36 {dimension_numbers = #tpu.dot_dimension_numbers<[1], [0], [0], [1], [0, 0, 1, 1], [], []>} : vector<8x64xf32>, vector<64x32xf32>, vector<8x32xf32> -> vector<8x32xf32>
    %c0_37 = arith.constant 0 : index
    %c0_38 = arith.constant 0 : index
    %115 = vector.load %arg10[%c0_37, %c0_38] : memref<1x32xf32, #tpu.memory_space<vmem>>, vector<1x32xf32>
    %c0_39 = arith.constant 0 : index
    %c0_40 = arith.constant 0 : index
    %116 = vector.load %arg11[%c0_39, %c0_40] : memref<1x32xf32, #tpu.memory_space<vmem>>, vector<1x32xf32>
    %cst_41 = arith.constant dense<0.000000e+00> : vector<8xf32>
    %117 = vector.multi_reduction <add>, %114, %cst_41 [1] : vector<8x32xf32> to vector<8xf32>
    %118 = vector.shape_cast %117 : vector<8xf32> to vector<8x1xf32>
    %cst_42 = arith.constant 3.200000e+01 : f32
    %119 = vector.broadcast %cst_42 : f32 to vector<8x1xf32>
    %120 = arith.divf %118, %119 : vector<8x1xf32>
    %121 = vector.broadcast %120 : vector<8x1xf32> to vector<8x32xf32>
    %122 = arith.subf %114, %121 : vector<8x32xf32>
    %123 = arith.mulf %122, %122 : vector<8x32xf32>
    %cst_43 = arith.constant dense<0.000000e+00> : vector<8xf32>
    %124 = vector.multi_reduction <add>, %123, %cst_43 [1] : vector<8x32xf32> to vector<8xf32>
    %125 = vector.shape_cast %124 : vector<8xf32> to vector<8x1xf32>
    %cst_44 = arith.constant 3.200000e+01 : f32
    %126 = vector.broadcast %cst_44 : f32 to vector<8x1xf32>
    %127 = arith.divf %125, %126 : vector<8x1xf32>
    %128 = vector.broadcast %120 : vector<8x1xf32> to vector<8x32xf32>
    %129 = arith.subf %114, %128 : vector<8x32xf32>
    %cst_45 = arith.constant 9.99999974E-6 : f32
    %130 = vector.broadcast %cst_45 : f32 to vector<8x1xf32>
    %131 = arith.addf %127, %130 : vector<8x1xf32>
    %132 = math.rsqrt %131 : vector<8x1xf32>
    %133 = vector.broadcast %132 : vector<8x1xf32> to vector<8x32xf32>
    %134 = arith.mulf %129, %133 : vector<8x32xf32>
    %135 = vector.broadcast %115 : vector<1x32xf32> to vector<8x32xf32>
    %136 = arith.mulf %134, %135 : vector<8x32xf32>
    %137 = vector.broadcast %116 : vector<1x32xf32> to vector<8x32xf32>
    %138 = arith.addf %136, %137 : vector<8x32xf32>
    %139 = vector.shape_cast %138 : vector<8x32xf32> to vector<1x8x32xf32>
    %c0_46 = arith.constant 0 : index
    %c0_47 = arith.constant 0 : index
    %c0_48 = arith.constant 0 : index
    %140 = vector.load %arg12[%c0_46, %c0_47, %c0_48] : memref<1x8x32xf32, #tpu.memory_space<vmem>>, vector<1x8x32xf32>
    tpu.vector_store %arg12[%c0_46, %c0_47, %c0_48], %139 {strides = array<i32>} : memref<1x8x32xf32, #tpu.memory_space<vmem>>, vector<1x8x32xf32>,
    return
  }
  func.func @transform_0(%arg0: i32) -> (i32, i32, i32) {
    %c0_i32 = arith.constant 0 : i32
    %c0_i32_0 = arith.constant 0 : i32
    %c0_i32_1 = arith.constant 0 : i32
    return %arg0, %c0_i32, %c0_i32_0 : i32, i32, i32
  }
  func.func @transform_1(%arg0: i32) -> (i32, i32, i32) {
    %c0_i32 = arith.constant 0 : i32
    %c0_i32_0 = arith.constant 0 : i32
    %c0_i32_1 = arith.constant 0 : i32
    return %arg0, %c0_i32, %c0_i32_0 : i32, i32, i32
  }
  func.func @transform_2(%arg0: i32) -> (i32, i32) {
    %c0_i32 = arith.constant 0 : i32
    %c0_i32_0 = arith.constant 0 : i32
    %c0_i32_1 = arith.constant 0 : i32
    return %c0_i32, %c0_i32_0 : i32, i32
  }
  func.func @transform_3(%arg0: i32) -> (i32, i32) {
    %c0_i32 = arith.constant 0 : i32
    %c0_i32_0 = arith.constant 0 : i32
    %c0_i32_1 = arith.constant 0 : i32
    return %c0_i32, %c0_i32_0 : i32, i32
  }
  func.func @transform_4(%arg0: i32) -> (i32, i32) {
    %c0_i32 = arith.constant 0 : i32
    %c0_i32_0 = arith.constant 0 : i32
    %c0_i32_1 = arith.constant 0 : i32
    return %c0_i32, %c0_i32_0 : i32, i32
  }
  func.func @transform_5(%arg0: i32) -> (i32, i32) {
    %c0_i32 = arith.constant 0 : i32
    %c0_i32_0 = arith.constant 0 : i32
    %c0_i32_1 = arith.constant 0 : i32
    return %c0_i32, %c0_i32_0 : i32, i32
  }
  func.func @transform_6(%arg0: i32) -> (i32, i32) {
    %c0_i32 = arith.constant 0 : i32
    %c0_i32_0 = arith.constant 0 : i32
    %c0_i32_1 = arith.constant 0 : i32
    return %c0_i32, %c0_i32_0 : i32, i32
  }
  func.func @transform_7(%arg0: i32) -> (i32, i32) {
    %c0_i32 = arith.constant 0 : i32
    %c0_i32_0 = arith.constant 0 : i32
    %c0_i32_1 = arith.constant 0 : i32
    return %c0_i32, %c0_i32_0 : i32, i32
  }
  func.func @transform_8(%arg0: i32) -> (i32, i32) {
    %c0_i32 = arith.constant 0 : i32
    %c0_i32_0 = arith.constant 0 : i32
    %c0_i32_1 = arith.constant 0 : i32
    return %c0_i32, %c0_i32_0 : i32, i32
  }
  func.func @transform_9(%arg0: i32) -> (i32, i32) {
    %c0_i32 = arith.constant 0 : i32
    %c0_i32_0 = arith.constant 0 : i32
    %c0_i32_1 = arith.constant 0 : i32
    return %c0_i32, %c0_i32_0 : i32, i32
  }
  func.func @transform_10(%arg0: i32) -> (i32, i32) {
    %c0_i32 = arith.constant 0 : i32
    %c0_i32_0 = arith.constant 0 : i32
    %c0_i32_1 = arith.constant 0 : i32
    return %c0_i32, %c0_i32_0 : i32, i32
  }
  func.func @transform_11(%arg0: i32) -> (i32, i32, i32) {
    %c0_i32 = arith.constant 0 : i32
    %c0_i32_0 = arith.constant 0 : i32
    %c0_i32_1 = arith.constant 0 : i32
    return %arg0, %c0_i32, %c0_i32_0 : i32, i32, i32
  }
}

module attributes {stable_mosaic.version = 11 : i64} {
  func.func @perceiver_attention_kernel(%arg0: i32, %arg1: memref<1x16x32xf32, #tpu.memory_space<vmem>>, %arg2: memref<1x8x32xf32, #tpu.memory_space<vmem>>, %arg3: memref<1x32xf32, #tpu.memory_space<vmem>>, %arg4: memref<1x32xf32, #tpu.memory_space<vmem>>, %arg5: memref<1x32xf32, #tpu.memory_space<vmem>>, %arg6: memref<1x32xf32, #tpu.memory_space<vmem>>, %arg7: memref<32x64xf32, #tpu.memory_space<vmem>>, %arg8: memref<32x128xf32, #tpu.memory_space<vmem>>, %arg9: memref<64x32xf32, #tpu.memory_space<vmem>>, %arg10: memref<1x32xf32, #tpu.memory_space<vmem>>, %arg11: memref<1x32xf32, #tpu.memory_space<vmem>>, %arg12: memref<1x8x32xf32, #tpu.memory_space<vmem>>) attributes {dimension_semantics = [#tpu.dimension_semantics<parallel>], iteration_bounds = array<i64: 2>, scalar_prefetch = 0 : i64, scratch_operands = 0 : i64, tpu.core_type = #tpu.core_type<tc>, window_params = [{transform_indices = @transform_0, window_bounds = array<i64: 1, 16, 32>}, {transform_indices = @transform_1, window_bounds = array<i64: 1, 8, 32>}, {pipeline_mode = #tpu.pipeline_mode<synchronous>, transform_indices = @transform_2, window_bounds = array<i64: 1, 32>}, {pipeline_mode = #tpu.pipeline_mode<synchronous>, transform_indices = @transform_3, window_bounds = array<i64: 1, 32>}, {pipeline_mode = #tpu.pipeline_mode<synchronous>, transform_indices = @transform_4, window_bounds = array<i64: 1, 32>}, {pipeline_mode = #tpu.pipeline_mode<synchronous>, transform_indices = @transform_5, window_bounds = array<i64: 1, 32>}, {pipeline_mode = #tpu.pipeline_mode<synchronous>, transform_indices = @transform_6, window_bounds = array<i64: 32, 64>}, {pipeline_mode = #tpu.pipeline_mode<synchronous>, transform_indices = @transform_7, window_bounds = array<i64: 32, 128>}, {pipeline_mode = #tpu.pipeline_mode<synchronous>, transform_indices = @transform_8, window_bounds = array<i64: 64, 32>}, {pipeline_mode = #tpu.pipeline_mode<synchronous>, transform_indices = @transform_9, window_bounds = array<i64: 1, 32>}, {pipeline_mode = #tpu.pipeline_mode<synchronous>, transform_indices = @transform_10, window_bounds = array<i64: 1, 32>}, {transform_indices = @transform_11, window_bounds = array<i64: 1, 8, 32>}]} {
    %c0 = arith.constant 0 : index
    %c0_0 = arith.constant 0 : index
    %c0_1 = arith.constant 0 : index
    %0 = vector.load %arg1[%c0, %c0_0, %c0_1] : memref<1x16x32xf32, #tpu.memory_space<vmem>>, vector<1x16x32xf32>
    %1 = vector.shape_cast %0 : vector<1x16x32xf32> to vector<16x32xf32>
    %c0_2 = arith.constant 0 : index
    %c0_3 = arith.constant 0 : index
    %2 = vector.load %arg3[%c0_2, %c0_3] : memref<1x32xf32, #tpu.memory_space<vmem>>, vector<1x32xf32>
    %c0_4 = arith.constant 0 : index
    %c0_5 = arith.constant 0 : index
    %3 = vector.load %arg4[%c0_4, %c0_5] : memref<1x32xf32, #tpu.memory_space<vmem>>, vector<1x32xf32>
    %cst = arith.constant dense<0.000000e+00> : vector<16xf32>
    %4 = vector.multi_reduction <add>, %1, %cst [1] : vector<16x32xf32> to vector<16xf32>
    %5 = vector.shape_cast %4 : vector<16xf32> to vector<16x1xf32>
    %cst_6 = arith.constant 3.200000e+01 : f32
    %6 = vector.broadcast %cst_6 : f32 to vector<16x1xf32>
    %7 = arith.divf %5, %6 : vector<16x1xf32>
    %8 = vector.broadcast %7 : vector<16x1xf32> to vector<16x32xf32>
    %9 = arith.subf %1, %8 : vector<16x32xf32>
    %10 = arith.mulf %9, %9 : vector<16x32xf32>
    %cst_7 = arith.constant dense<0.000000e+00> : vector<16xf32>
    %11 = vector.multi_reduction <add>, %10, %cst_7 [1] : vector<16x32xf32> to vector<16xf32>
    %12 = vector.shape_cast %11 : vector<16xf32> to vector<16x1xf32>
    %cst_8 = arith.constant 3.200000e+01 : f32
    %13 = vector.broadcast %cst_8 : f32 to vector<16x1xf32>
    %14 = arith.divf %12, %13 : vector<16x1xf32>
    %15 = vector.broadcast %7 : vector<16x1xf32> to vector<16x32xf32>
    %16 = arith.subf %1, %15 : vector<16x32xf32>
    %cst_9 = arith.constant 9.99999974E-6 : f32
    %17 = vector.broadcast %cst_9 : f32 to vector<16x1xf32>
    %18 = arith.addf %14, %17 : vector<16x1xf32>
    %19 = math.rsqrt %18 : vector<16x1xf32>
    %20 = vector.broadcast %19 : vector<16x1xf32> to vector<16x32xf32>
    %21 = arith.mulf %16, %20 : vector<16x32xf32>
    %22 = vector.broadcast %2 : vector<1x32xf32> to vector<16x32xf32>
    %23 = arith.mulf %21, %22 : vector<16x32xf32>
    %24 = vector.broadcast %3 : vector<1x32xf32> to vector<16x32xf32>
    %25 = arith.addf %23, %24 : vector<16x32xf32>
    %c0_10 = arith.constant 0 : index
    %c0_11 = arith.constant 0 : index
    %c0_12 = arith.constant 0 : index
    %26 = vector.load %arg2[%c0_10, %c0_11, %c0_12] : memref<1x8x32xf32, #tpu.memory_space<vmem>>, vector<1x8x32xf32>
    %27 = vector.shape_cast %26 : vector<1x8x32xf32> to vector<8x32xf32>
    %c0_13 = arith.constant 0 : index
    %c0_14 = arith.constant 0 : index
    %28 = vector.load %arg5[%c0_13, %c0_14] : memref<1x32xf32, #tpu.memory_space<vmem>>, vector<1x32xf32>
    %c0_15 = arith.constant 0 : index
    %c0_16 = arith.constant 0 : index
    %29 = vector.load %arg6[%c0_15, %c0_16] : memref<1x32xf32, #tpu.memory_space<vmem>>, vector<1x32xf32>
    %cst_17 = arith.constant dense<0.000000e+00> : vector<8xf32>
    %30 = vector.multi_reduction <add>, %27, %cst_17 [1] : vector<8x32xf32> to vector<8xf32>
    %31 = vector.shape_cast %30 : vector<8xf32> to vector<8x1xf32>
    %cst_18 = arith.constant 3.200000e+01 : f32
    %32 = vector.broadcast %cst_18 : f32 to vector<8x1xf32>
    %33 = arith.divf %31, %32 : vector<8x1xf32>
    %34 = vector.broadcast %33 : vector<8x1xf32> to vector<8x32xf32>
    %35 = arith.subf %27, %34 : vector<8x32xf32>
    %36 = arith.mulf %35, %35 : vector<8x32xf32>
    %cst_19 = arith.constant dense<0.000000e+00> : vector<8xf32>
    %37 = vector.multi_reduction <add>, %36, %cst_19 [1] : vector<8x32xf32> to vector<8xf32>
    %38 = vector.shape_cast %37 : vector<8xf32> to vector<8x1xf32>
    %cst_20 = arith.constant 3.200000e+01 : f32
    %39 = vector.broadcast %cst_20 : f32 to vector<8x1xf32>
    %40 = arith.divf %38, %39 : vector<8x1xf32>
    %41 = vector.broadcast %33 : vector<8x1xf32> to vector<8x32xf32>
    %42 = arith.subf %27, %41 : vector<8x32xf32>
    %cst_21 = arith.constant 9.99999974E-6 : f32
    %43 = vector.broadcast %cst_21 : f32 to vector<8x1xf32>
    %44 = arith.addf %40, %43 : vector<8x1xf32>
    %45 = math.rsqrt %44 : vector<8x1xf32>
    %46 = vector.broadcast %45 : vector<8x1xf32> to vector<8x32xf32>
    %47 = arith.mulf %42, %46 : vector<8x32xf32>
    %48 = vector.broadcast %28 : vector<1x32xf32> to vector<8x32xf32>
    %49 = arith.mulf %47, %48 : vector<8x32xf32>
    %50 = vector.broadcast %29 : vector<1x32xf32> to vector<8x32xf32>
    %51 = arith.addf %49, %50 : vector<8x32xf32>
    %52 = vector.shape_cast %25 : vector<16x32xf32> to vector<1x16x32xf32>
    %53 = vector.shape_cast %51 : vector<8x32xf32> to vector<1x8x32xf32>
    %54 = tpu.concatenate %52, %53 in 1 : vector<1x16x32xf32>, vector<1x8x32xf32> -> vector<1x24x32xf32>
    %55 = vector.shape_cast %54 : vector<1x24x32xf32> to vector<24x32xf32>
    %c0_22 = arith.constant 0 : index
    %c0_23 = arith.constant 0 : index
    %56 = vector.load %arg7[%c0_22, %c0_23] : memref<32x64xf32, #tpu.memory_space<vmem>>, vector<32x64xf32>
    %cst_24 = arith.constant dense<0.000000e+00> : vector<8x64xf32>
    %57 = tpu.matmul %51, %56, %cst_24 {dimension_numbers = #tpu.dot_dimension_numbers<[1], [0], [0], [1], [0, 0, 1, 1], [], []>} : vector<8x32xf32>, vector<32x64xf32>, vector<8x64xf32> -> vector<8x64xf32>
    %cst_25 = arith.constant 2.500000e-01 : f32
    %58 = vector.broadcast %cst_25 : f32 to vector<8x64xf32>
    %59 = arith.mulf %57, %58 : vector<8x64xf32>
    %c0_26 = arith.constant 0 : index
    %c0_27 = arith.constant 0 : index
    %60 = vector.load %arg8[%c0_26, %c0_27] : memref<32x128xf32, #tpu.memory_space<vmem>>, vector<32x128xf32>
    %61 = vector.extract_strided_slice %60 {offsets = [0, 0], sizes = [32, 64], strides = [1, 1]} : vector<32x128xf32> to vector<32x64xf32>
    %cst_28 = arith.constant dense<0.000000e+00> : vector<24x64xf32>
    %62 = tpu.matmul %55, %61, %cst_28 {dimension_numbers = #tpu.dot_dimension_numbers<[1], [0], [0], [1], [0, 0, 1, 1], [], []>} : vector<24x32xf32>, vector<32x64xf32>, vector<24x64xf32> -> vector<24x64xf32>
    %63 = vector.extract_strided_slice %60 {offsets = [0, 64], sizes = [32, 64], strides = [1, 1]} : vector<32x128xf32> to vector<32x64xf32>
    %cst_29 = arith.constant dense<0.000000e+00> : vector<24x64xf32>
    %64 = tpu.matmul %55, %63, %cst_29 {dimension_numbers = #tpu.dot_dimension_numbers<[1], [0], [0], [1], [0, 0, 1, 1], [], []>} : vector<24x32xf32>, vector<32x64xf32>, vector<24x64xf32> -> vector<24x64xf32>
    %65 = vector.extract_strided_slice %59 {offsets = [0, 0], sizes = [8, 16], strides = [1, 1]} : vector<8x64xf32> to vector<8x16xf32>
    %66 = vector.extract_strided_slice %59 {offsets = [0, 16], sizes = [8, 16], strides = [1, 1]} : vector<8x64xf32> to vector<8x16xf32>
    %67 = vector.extract_strided_slice %59 {offsets = [0, 32], sizes = [8, 16], strides = [1, 1]} : vector<8x64xf32> to vector<8x16xf32>
    %68 = vector.extract_strided_slice %59 {offsets = [0, 48], sizes = [8, 16], strides = [1, 1]} : vector<8x64xf32> to vector<8x16xf32>
    %69 = vector.shape_cast %65 : vector<8x16xf32> to vector<1x8x16xf32>
    %70 = vector.shape_cast %66 : vector<8x16xf32> to vector<1x8x16xf32>
    %71 = vector.shape_cast %67 : vector<8x16xf32> to vector<1x8x16xf32>
    %72 = vector.shape_cast %68 : vector<8x16xf32> to vector<1x8x16xf32>
    %73 = tpu.concatenate %69, %70, %71, %72 in 0 : vector<1x8x16xf32>, vector<1x8x16xf32>, vector<1x8x16xf32>, vector<1x8x16xf32> -> vector<4x8x16xf32>
    %74 = vector.extract_strided_slice %62 {offsets = [0, 0], sizes = [24, 16], strides = [1, 1]} : vector<24x64xf32> to vector<24x16xf32>
    %75 = vector.extract_strided_slice %62 {offsets = [0, 16], sizes = [24, 16], strides = [1, 1]} : vector<24x64xf32> to vector<24x16xf32>
    %76 = vector.extract_strided_slice %62 {offsets = [0, 32], sizes = [24, 16], strides = [1, 1]} : vector<24x64xf32> to vector<24x16xf32>
    %77 = vector.extract_strided_slice %62 {offsets = [0, 48], sizes = [24, 16], strides = [1, 1]} : vector<24x64xf32> to vector<24x16xf32>
    %78 = vector.shape_cast %74 : vector<24x16xf32> to vector<1x24x16xf32>
    %79 = vector.shape_cast %75 : vector<24x16xf32> to vector<1x24x16xf32>
    %80 = vector.shape_cast %76 : vector<24x16xf32> to vector<1x24x16xf32>
    %81 = vector.shape_cast %77 : vector<24x16xf32> to vector<1x24x16xf32>
    %82 = tpu.concatenate %78, %79, %80, %81 in 0 : vector<1x24x16xf32>, vector<1x24x16xf32>, vector<1x24x16xf32>, vector<1x24x16xf32> -> vector<4x24x16xf32>
    %83 = vector.extract_strided_slice %64 {offsets = [0, 0], sizes = [24, 16], strides = [1, 1]} : vector<24x64xf32> to vector<24x16xf32>
    %84 = vector.extract_strided_slice %64 {offsets = [0, 16], sizes = [24, 16], strides = [1, 1]} : vector<24x64xf32> to vector<24x16xf32>
    %85 = vector.extract_strided_slice %64 {offsets = [0, 32], sizes = [24, 16], strides = [1, 1]} : vector<24x64xf32> to vector<24x16xf32>
    %86 = vector.extract_strided_slice %64 {offsets = [0, 48], sizes = [24, 16], strides = [1, 1]} : vector<24x64xf32> to vector<24x16xf32>
    %87 = vector.shape_cast %83 : vector<24x16xf32> to vector<1x24x16xf32>
    %88 = vector.shape_cast %84 : vector<24x16xf32> to vector<1x24x16xf32>
    %89 = vector.shape_cast %85 : vector<24x16xf32> to vector<1x24x16xf32>
    %90 = vector.shape_cast %86 : vector<24x16xf32> to vector<1x24x16xf32>
    %91 = tpu.concatenate %87, %88, %89, %90 in 0 : vector<1x24x16xf32>, vector<1x24x16xf32>, vector<1x24x16xf32>, vector<1x24x16xf32> -> vector<4x24x16xf32>
    "tpu.trace_start"() <{level = 10 : i32, message = "bqd,bkd->bqk"}> : () -> ()
    %cst_30 = arith.constant dense<0.000000e+00> : vector<4x8x24xf32>
    %92 = tpu.matmul %73, %82, %cst_30 {dimension_numbers = #tpu.dot_dimension_numbers<[2], [2], [1], [1], [0, 0, 0, 1, 1, 1], [0], [0]>} : vector<4x8x16xf32>, vector<4x24x16xf32>, vector<4x8x24xf32> -> vector<4x8x24xf32>
    "tpu.trace_stop"() : () -> ()
    %cst_31 = arith.constant dense<0xFF800000> : vector<4x8xf32>
    %93 = vector.multi_reduction <maximumf>, %92, %cst_31 [2] : vector<4x8x24xf32> to vector<4x8xf32>
    %94 = vector.shape_cast %93 : vector<4x8xf32> to vector<4x8x1xf32>
    %95 = vector.broadcast %94 : vector<4x8x1xf32> to vector<4x8x24xf32>
    %96 = arith.subf %92, %95 : vector<4x8x24xf32>
    %97 = math.exp %96 : vector<4x8x24xf32>
    %cst_32 = arith.constant dense<0.000000e+00> : vector<4x8xf32>
    %98 = vector.multi_reduction <add>, %97, %cst_32 [2] : vector<4x8x24xf32> to vector<4x8xf32>
    %99 = vector.shape_cast %98 : vector<4x8xf32> to vector<4x8x1xf32>
    %100 = tpu.reciprocal %99 : vector<4x8x1xf32> -> vector<4x8x1xf32>
    %101 = vector.broadcast %100 : vector<4x8x1xf32> to vector<4x8x24xf32>
    %102 = arith.mulf %97, %101 : vector<4x8x24xf32>
    "tpu.trace_start"() <{level = 10 : i32, message = "bqk,bkd->bqd"}> : () -> ()
    %cst_33 = arith.constant dense<0.000000e+00> : vector<4x8x16xf32>
    %103 = tpu.matmul %102, %91, %cst_33 {dimension_numbers = #tpu.dot_dimension_numbers<[2], [1], [1], [2], [0, 0, 0, 1, 1, 2], [0], [0]>} : vector<4x8x24xf32>, vector<4x24x16xf32>, vector<4x8x16xf32> -> vector<4x8x16xf32>
    "tpu.trace_stop"() : () -> ()
    %104 = vector.extract_strided_slice %103 {offsets = [0, 0, 0], sizes = [1, 8, 16], strides = [1, 1, 1]} : vector<4x8x16xf32> to vector<1x8x16xf32>
    %105 = vector.shape_cast %104 : vector<1x8x16xf32> to vector<8x16xf32>
    %106 = vector.extract_strided_slice %103 {offsets = [1, 0, 0], sizes = [1, 8, 16], strides = [1, 1, 1]} : vector<4x8x16xf32> to vector<1x8x16xf32>
    %107 = vector.shape_cast %106 : vector<1x8x16xf32> to vector<8x16xf32>
    %108 = vector.extract_strided_slice %103 {offsets = [2, 0, 0], sizes = [1, 8, 16], strides = [1, 1, 1]} : vector<4x8x16xf32> to vector<1x8x16xf32>
    %109 = vector.shape_cast %108 : vector<1x8x16xf32> to vector<8x16xf32>
    %110 = vector.extract_strided_slice %103 {offsets = [3, 0, 0], sizes = [1, 8, 16], strides = [1, 1, 1]} : vector<4x8x16xf32> to vector<1x8x16xf32>
    %111 = vector.shape_cast %110 : vector<1x8x16xf32> to vector<8x16xf32>
    %112 = tpu.concatenate %105, %107, %109, %111 in 1 : vector<8x16xf32>, vector<8x16xf32>, vector<8x16xf32>, vector<8x16xf32> -> vector<8x64xf32>
    %c0_34 = arith.constant 0 : index
    %c0_35 = arith.constant 0 : index
    %113 = vector.load %arg9[%c0_34, %c0_35] : memref<64x32xf32, #tpu.memory_space<vmem>>, vector<64x32xf32>
    %cst_36 = arith.constant dense<0.000000e+00> : vector<8x32xf32>
    %114 = tpu.matmul %112, %113, %cst_36 {dimension_numbers = #tpu.dot_dimension_numbers<[1], [0], [0], [1], [0, 0, 1, 1], [], []>} : vector<8x64xf32>, vector<64x32xf32>, vector<8x32xf32> -> vector<8x32xf32>
    %c0_37 = arith.constant 0 : index
    %c0_38 = arith.constant 0 : index
    %115 = vector.load %arg10[%c0_37, %c0_38] : memref<1x32xf32, #tpu.memory_space<vmem>>, vector<1x32xf32>
    %c0_39 = arith.constant 0 : index
    %c0_40 = arith.constant 0 : index
    %116 = vector.load %arg11[%c0_39, %c0_40] : memref<1x32xf32, #tpu.memory_space<vmem>>, vector<1x32xf32>
    %cst_41 = arith.constant dense<0.000000e+00> : vector<8xf32>
    %117 = vector.multi_reduction <add>, %114, %cst_41 [1] : vector<8x32xf32> to vector<8xf32>
    %118 = vector.shape_cast %117 : vector<8xf32> to vector<8x1xf32>
    %cst_42 = arith.constant 3.200000e+01 : f32
    %119 = vector.broadcast %cst_42 : f32 to vector<8x1xf32>
    %120 = arith.divf %118, %119 : vector<8x1xf32>
    %121 = vector.broadcast %120 : vector<8x1xf32> to vector<8x32xf32>
    %122 = arith.subf %114, %121 : vector<8x32xf32>
    %123 = arith.mulf %122, %122 : vector<8x32xf32>
    %cst_43 = arith.constant dense<0.000000e+00> : vector<8xf32>
    %124 = vector.multi_reduction <add>, %123, %cst_43 [1] : vector<8x32xf32> to vector<8xf32>
    %125 = vector.shape_cast %124 : vector<8xf32> to vector<8x1xf32>
    %cst_44 = arith.constant 3.200000e+01 : f32
    %126 = vector.broadcast %cst_44 : f32 to vector<8x1xf32>
    %127 = arith.divf %125, %126 : vector<8x1xf32>
    %128 = vector.broadcast %120 : vector<8x1xf32> to vector<8x32xf32>
    %129 = arith.subf %114, %128 : vector<8x32xf32>
    %cst_45 = arith.constant 9.99999974E-6 : f32
    %130 = vector.broadcast %cst_45 : f32 to vector<8x1xf32>
    %131 = arith.addf %127, %130 : vector<8x1xf32>
    %132 = math.rsqrt %131 : vector<8x1xf32>
    %133 = vector.broadcast %132 : vector<8x1xf32> to vector<8x32xf32>
    %134 = arith.mulf %129, %133 : vector<8x32xf32>
    %135 = vector.broadcast %115 : vector<1x32xf32> to vector<8x32xf32>
    %136 = arith.mulf %134, %135 : vector<8x32xf32>
    %137 = vector.broadcast %116 : vector<1x32xf32> to vector<8x32xf32>
    %138 = arith.addf %136, %137 : vector<8x32xf32>
    %139 = vector.shape_cast %138 : vector<8x32xf32> to vector<1x8x32xf32>
    %c0_46 = arith.constant 0 : index
    %c0_47 = arith.constant 0 : index
    %c0_48 = arith.constant 0 : index
    %140 = vector.load %arg12[%c0_46, %c0_47, %c0_48] : memref<1x8x32xf32, #tpu.memory_space<vmem>>, vector<1x8x32xf32>
    tpu.vector_store %arg12[%c0_46, %c0_47, %c0_48], %139 {strides = array<i32>} : memref<1x8x32xf32, #tpu.memory_space<vmem>>, vector<1x8x32xf32>,
    return
  }
  func.func @transform_0(%arg0: i32) -> (i32, i32, i32) {
    %c0_i32 = arith.constant 0 : i32
    %c0_i32_0 = arith.constant 0 : i32
    %c0_i32_1 = arith.constant 0 : i32
    return %arg0, %c0_i32, %c0_i32_0 : i32, i32, i32
  }
  func.func @transform_1(%arg0: i32) -> (i32, i32, i32) {
    %c0_i32 = arith.constant 0 : i32
    %c0_i32_0 = arith.constant 0 : i32
    %c0_i32_1 = arith.constant 0 : i32
    return %arg0, %c0_i32, %c0_i32_0 : i32, i32, i32
  }
  func.func @transform_2(%arg0: i32) -> (i32, i32) {
    %c0_i32 = arith.constant 0 : i32
    %c0_i32_0 = arith.constant 0 : i32
    %c0_i32_1 = arith.constant 0 : i32
    return %c0_i32, %c0_i32_0 : i32, i32
  }
  func.func @transform_3(%arg0: i32) -> (i32, i32) {
    %c0_i32 = arith.constant 0 : i32
    %c0_i32_0 = arith.constant 0 : i32
    %c0_i32_1 = arith.constant 0 : i32
    return %c0_i32, %c0_i32_0 : i32, i32
  }
  func.func @transform_4(%arg0: i32) -> (i32, i32) {
    %c0_i32 = arith.constant 0 : i32
    %c0_i32_0 = arith.constant 0 : i32
    %c0_i32_1 = arith.constant 0 : i32
    return %c0_i32, %c0_i32_0 : i32, i32
  }
  func.func @transform_5(%arg0: i32) -> (i32, i32) {
    %c0_i32 = arith.constant 0 : i32
    %c0_i32_0 = arith.constant 0 : i32
    %c0_i32_1 = arith.constant 0 : i32
    return %c0_i32, %c0_i32_0 : i32, i32
  }
  func.func @transform_6(%arg0: i32) -> (i32, i32) {
    %c0_i32 = arith.constant 0 : i32
    %c0_i32_0 = arith.constant 0 : i32
    %c0_i32_1 = arith.constant 0 : i32
    return %c0_i32, %c0_i32_0 : i32, i32
  }
  func.func @transform_7(%arg0: i32) -> (i32, i32) {
    %c0_i32 = arith.constant 0 : i32
    %c0_i32_0 = arith.constant 0 : i32
    %c0_i32_1 = arith.constant 0 : i32
    return %c0_i32, %c0_i32_0 : i32, i32
  }
  func.func @transform_8(%arg0: i32) -> (i32, i32) {
    %c0_i32 = arith.constant 0 : i32
    %c0_i32_0 = arith.constant 0 : i32
    %c0_i32_1 = arith.constant 0 : i32
    return %c0_i32, %c0_i32_0 : i32, i32
  }
  func.func @transform_9(%arg0: i32) -> (i32, i32) {
    %c0_i32 = arith.constant 0 : i32
    %c0_i32_0 = arith.constant 0 : i32
    %c0_i32_1 = arith.constant 0 : i32
    return %c0_i32, %c0_i32_0 : i32, i32
  }
  func.func @transform_10(%arg0: i32) -> (i32, i32) {
    %c0_i32 = arith.constant 0 : i32
    %c0_i32_0 = arith.constant 0 : i32
    %c0_i32_1 = arith.constant 0 : i32
    return %c0_i32, %c0_i32_0 : i32, i32
  }
  func.func @transform_11(%arg0: i32) -> (i32, i32, i32) {
    %c0_i32 = arith.constant 0 : i32
    %c0_i32_0 = arith.constant 0 : i32
    %c0_i32_1 = arith.constant 0 : i32
    return %arg0, %c0_i32, %c0_i32_0 : i32, i32, i32
  }
}

</mosaic_0001>

<llo_original>
// kernel: tpu_custom_call.1
$region0: #{tpu_custom_call.1}
  #allocation0 [shape = 'u32[]', space=smem, size = 0x4, offset = 0x4, fixed_abs, tag = 'smem constant byte address 0x4 - core index']
  #allocation1 [shape = 'u32[144,128]{1,0:T(1,128)}', space=vmem, size = 0x12000, scoped, tag = 'internal scratch']
  %s0 = inlined_call_operand.vmem [shape: f32[2,16,32], index: 0, kind: input, shape index: {}]
  %s1 = inlined_call_operand.hbm [shape: f32[2,8,32], index: 1, kind: input, shape index: {}]
  %s2 = inlined_call_operand.vmem [shape: f32[1,32], index: 2, kind: input, shape index: {}]
  %s3 = inlined_call_operand.vmem [shape: f32[1,32], index: 3, kind: input, shape index: {}]
  %s4 = inlined_call_operand.vmem [shape: f32[1,32], index: 4, kind: input, shape index: {}]
  %s5 = inlined_call_operand.vmem [shape: f32[1,32], index: 5, kind: input, shape index: {}]
  %s6 = inlined_call_operand.vmem [shape: f32[32,64], index: 6, kind: input, shape index: {}]
  %s7 = inlined_call_operand.vmem [shape: f32[32,128], index: 7, kind: input, shape index: {}]
  %s8 = inlined_call_operand.vmem [shape: f32[64,32], index: 8, kind: input, shape index: {}]
  %s9 = inlined_call_operand.vmem [shape: f32[1,32], index: 9, kind: input, shape index: {}]
  %s10 = inlined_call_operand.vmem [shape: f32[1,32], index: 10, kind: input, shape index: {}]
  %s11 = inlined_call_operand.hbm [shape: f32[2,8,32], index: 11, kind: output, shape index: {}]
  %s12 = sld [smem:[#allocation0]]
  $region81: #{tpu_custom_call.1} parent=0
    _
  %s14 = ssub.s32 1, %s12
  %s15 = scalar_select 0, %s14, %s12
  $region1: #{tpu_custom_call.1} parent=0
    #allocation2 [shape = 'u8[8192]{0}', space=vmem, size = 0x2000, scoped, tag = 'input window, operand 1']
    #allocation3 [shape = 's32[2]{0}', space=sflag, size = 0x8, scoped, tag = 'scoped memory for tpu_custom_call.1']
    #allocation4 [shape = 's32[2]{0}', space=sflag, size = 0x8, scoped, tag = 'scoped memory for tpu_custom_call.1']
    #allocation5 [shape = 'u8[8192]{0}', space=vmem, size = 0x2000, scoped, tag = 'output window, operand 0']
    %16 = vsyncpa [#allocation3], 0
    %s17 = scalar_lea.sflag [#allocation3], 1
    %18 = vsyncpa %s17, 0
    %19 = vsyncpa [#allocation4], 0
    %s20 = scalar_lea.sflag [#allocation4], 1
    %21 = vsyncpa %s20, 0
    loop: start=0, step=1, limit=4
    $region2: #{tpu_custom_call.1} parent=1 // loop_pre_header
      _
    $region3: #{tpu_custom_call.1} parent=1 // loop_header
      %s23 = sphi 0, %s27
      %p24 = scmp.ge.s32.totalorder %s23, 4
      %s33 = sphi 0, %s35
      %s36 = sphi 0, %s33
      %s37 = sphi 0, %s36
      %s53 = sphi 0, %s37
      %s59 = sphi 0, %s61
      %s62 = sphi 0, %s59
      %s63 = sphi 0, %s62
      %s79 = sphi 0, %s63
      %s83 = sphi 0, %s83
      %s85 = sphi 0, %s83
      %s86 = sphi 0, %s85
      %s100 = sphi 0, %s86
      %s104 = sphi 0, %s104
      %s106 = sphi 0, %s104
      %s107 = sphi 0, %s106
      %s121 = sphi 0, %s107
      %s125 = sphi 0, %s125
      %s127 = sphi 0, %s125
      %s128 = sphi 0, %s127
      %s142 = sphi 0, %s128
      %s146 = sphi 0, %s146
      %s148 = sphi 0, %s146
      %s149 = sphi 0, %s148
      %s163 = sphi 0, %s149
      %s167 = sphi 0, %s167
      %s169 = sphi 0, %s167
      %s170 = sphi 0, %s169
      %s184 = sphi 0, %s170
      %s188 = sphi 0, %s188
      %s190 = sphi 0, %s188
      %s191 = sphi 0, %s190
      %s205 = sphi 0, %s191
      %s209 = sphi 0, %s209
      %s211 = sphi 0, %s209
      %s212 = sphi 0, %s211
      %s226 = sphi 0, %s212
      %s230 = sphi 0, %s230
      %s232 = sphi 0, %s230
      %s233 = sphi 0, %s232
      %s247 = sphi 0, %s233
      %s251 = sphi 0, %s251
      %s253 = sphi 0, %s251
      %s254 = sphi 0, %s253
      %s268 = sphi 0, %s254
      %s274 = sphi 0, %s276
      %s277 = sphi 0, %s274
      %s278 = sphi 0, %s277
      %s294 = sphi 0, %s278
    $region4: #{tpu_custom_call.1} parent=1 // loop_header_branch
      %26 = sbr.rel (%p24) target = $region8
    $region5: #{tpu_custom_call.1} parent=1 // loop_body
      %s28 = ssub.s32 %s23, 1
      %s29 = ssub.s32 %s23, 2
      %s30 = sadd.s32 %s23, 1
      %s31 = ssub.s32 %s23, %s30
      %p32 = scmp.eq.s32.totalorder %s31, 0
      %s34 = sadd.s32 %s33, 1
      %s35 = scalar_select %p32, %s33, %s34
      %p38 = pneg %p32
      %p39 = scmp.eq.s32.totalorder %s23, 1
      %p40 = por %p38, %p39
      %p41 = scmp.ne.s32.totalorder %s33, %s36
      %p42 = scmp.eq.s32.totalorder %s23, 0
      %p43 = por %p41, %p42
      %p44 = scmp.ne.s32.totalorder %s33, %s36
      %p45 = scmp.eq.s32.totalorder %s28, 1
      %p46 = por %p44, %p45
      %p47 = scmp.ne.s32.totalorder %s36, %s37
      %p48 = scmp.eq.s32.totalorder %s28, 0
      %p49 = por %p47, %p48
      %p50 = scmp.ne.s32.totalorder %s36, %s37
      %p51 = scmp.eq.s32.totalorder %s29, 1
      %p52 = por %p50, %p51
      %p54 = scmp.ne.s32.totalorder %s37, %s53
      %p55 = scmp.eq.s32.totalorder %s29, 0
      %p56 = por %p54, %p55
      %s57 = ssub.s32 %s23, %s30
      %p58 = scmp.eq.s32.totalorder %s57, 0
      %s60 = sadd.s32 %s59, 1
      %s61 = scalar_select %p58, %s59, %s60
      %p64 = pneg %p58
      %p65 = scmp.eq.s32.totalorder %s23, 1
      %p66 = por %p64, %p65
      %p67 = scmp.ne.s32.totalorder %s59, %s62
      %p68 = scmp.eq.s32.totalorder %s23, 0
      %p69 = por %p67, %p68
      %p70 = scmp.ne.s32.totalorder %s59, %s62
      %p71 = scmp.eq.s32.totalorder %s28, 1
      %p72 = por %p70, %p71
      %p73 = scmp.ne.s32.totalorder %s62, %s63
      %p74 = scmp.eq.s32.totalorder %s28, 0
      %p75 = por %p73, %p74
      %p76 = scmp.ne.s32.totalorder %s62, %s63
      %p77 = scmp.eq.s32.totalorder %s29, 1
      %p78 = por %p76, %p77
      %p80 = scmp.ne.s32.totalorder %s63, %s79
      %p81 = scmp.eq.s32.totalorder %s29, 0
      %p82 = por %p80, %p81
      %s84 = sadd.s32 %s83, 1
      %p87 = scmp.eq.s32.totalorder %s23, 1
      %p88 = scmp.ne.s32.totalorder %s83, %s85
      %p89 = scmp.eq.s32.totalorder %s23, 0
      %p90 = por %p88, %p89
      %p91 = scmp.ne.s32.totalorder %s83, %s85
      %p92 = scmp.eq.s32.totalorder %s28, 1
      %p93 = por %p91, %p92
      %p94 = scmp.ne.s32.totalorder %s85, %s86
      %p95 = scmp.eq.s32.totalorder %s28, 0
      %p96 = por %p94, %p95
      %p97 = scmp.ne.s32.totalorder %s85, %s86
      %p98 = scmp.eq.s32.totalorder %s29, 1
      %p99 = por %p97, %p98
      %p101 = scmp.ne.s32.totalorder %s86, %s100
      %p102 = scmp.eq.s32.totalorder %s29, 0
      %p103 = por %p101, %p102
      %s105 = sadd.s32 %s104, 1
      %p108 = scmp.eq.s32.totalorder %s23, 1
      %p109 = scmp.ne.s32.totalorder %s104, %s106
      %p110 = scmp.eq.s32.totalorder %s23, 0
      %p111 = por %p109, %p110
      %p112 = scmp.ne.s32.totalorder %s104, %s106
      %p113 = scmp.eq.s32.totalorder %s28, 1
      %p114 = por %p112, %p113
      %p115 = scmp.ne.s32.totalorder %s106, %s107
      %p116 = scmp.eq.s32.totalorder %s28, 0
      %p117 = por %p115, %p116
      %p118 = scmp.ne.s32.totalorder %s106, %s107
      %p119 = scmp.eq.s32.totalorder %s29, 1
      %p120 = por %p118, %p119
      %p122 = scmp.ne.s32.totalorder %s107, %s121
      %p123 = scmp.eq.s32.totalorder %s29, 0
      %p124 = por %p122, %p123
      %s126 = sadd.s32 %s125, 1
      %p129 = scmp.eq.s32.totalorder %s23, 1
      %p130 = scmp.ne.s32.totalorder %s125, %s127
      %p131 = scmp.eq.s32.totalorder %s23, 0
      %p132 = por %p130, %p131
      %p133 = scmp.ne.s32.totalorder %s125, %s127
      %p134 = scmp.eq.s32.totalorder %s28, 1
      %p135 = por %p133, %p134
      %p136 = scmp.ne.s32.totalorder %s127, %s128
      %p137 = scmp.eq.s32.totalorder %s28, 0
      %p138 = por %p136, %p137
      %p139 = scmp.ne.s32.totalorder %s127, %s128
      %p140 = scmp.eq.s32.totalorder %s29, 1
      %p141 = por %p139, %p140
      %p143 = scmp.ne.s32.totalorder %s128, %s142
      %p144 = scmp.eq.s32.totalorder %s29, 0
      %p145 = por %p143, %p144
      %s147 = sadd.s32 %s146, 1
      %p150 = scmp.eq.s32.totalorder %s23, 1
      %p151 = scmp.ne.s32.totalorder %s146, %s148
      %p152 = scmp.eq.s32.totalorder %s23, 0
      %p153 = por %p151, %p152
      %p154 = scmp.ne.s32.totalorder %s146, %s148
      %p155 = scmp.eq.s32.totalorder %s28, 1
      %p156 = por %p154, %p155
      %p157 = scmp.ne.s32.totalorder %s148, %s149
      %p158 = scmp.eq.s32.totalorder %s28, 0
      %p159 = por %p157, %p158
      %p160 = scmp.ne.s32.totalorder %s148, %s149
      %p161 = scmp.eq.s32.totalorder %s29, 1
      %p162 = por %p160, %p161
      %p164 = scmp.ne.s32.totalorder %s149, %s163
      %p165 = scmp.eq.s32.totalorder %s29, 0
      %p166 = por %p164, %p165
      %s168 = sadd.s32 %s167, 1
      %p171 = scmp.eq.s32.totalorder %s23, 1
      %p172 = scmp.ne.s32.totalorder %s167, %s169
      %p173 = scmp.eq.s32.totalorder %s23, 0
      %p174 = por %p172, %p173
      %p175 = scmp.ne.s32.totalorder %s167, %s169
      %p176 = scmp.eq.s32.totalorder %s28, 1
      %p177 = por %p175, %p176
      %p178 = scmp.ne.s32.totalorder %s169, %s170
      %p179 = scmp.eq.s32.totalorder %s28, 0
      %p180 = por %p178, %p179
      %p181 = scmp.ne.s32.totalorder %s169, %s170
      %p182 = scmp.eq.s32.totalorder %s29, 1
      %p183 = por %p181, %p182
      %p185 = scmp.ne.s32.totalorder %s170, %s184
      %p186 = scmp.eq.s32.totalorder %s29, 0
      %p187 = por %p185, %p186
      %s189 = sadd.s32 %s188, 1
      %p192 = scmp.eq.s32.totalorder %s23, 1
      %p193 = scmp.ne.s32.totalorder %s188, %s190
      %p194 = scmp.eq.s32.totalorder %s23, 0
      %p195 = por %p193, %p194
      %p196 = scmp.ne.s32.totalorder %s188, %s190
      %p197 = scmp.eq.s32.totalorder %s28, 1
      %p198 = por %p196, %p197
      %p199 = scmp.ne.s32.totalorder %s190, %s191
      %p200 = scmp.eq.s32.totalorder %s28, 0
      %p201 = por %p199, %p200
      %p202 = scmp.ne.s32.totalorder %s190, %s191
      %p203 = scmp.eq.s32.totalorder %s29, 1
      %p204 = por %p202, %p203
      %p206 = scmp.ne.s32.totalorder %s191, %s205
      %p207 = scmp.eq.s32.totalorder %s29, 0
      %p208 = por %p206, %p207
      %s210 = sadd.s32 %s209, 1
      %p213 = scmp.eq.s32.totalorder %s23, 1
      %p214 = scmp.ne.s32.totalorder %s209, %s211
      %p215 = scmp.eq.s32.totalorder %s23, 0
      %p216 = por %p214, %p215
      %p217 = scmp.ne.s32.totalorder %s209, %s211
      %p218 = scmp.eq.s32.totalorder %s28, 1
      %p219 = por %p217, %p218
      %p220 = scmp.ne.s32.totalorder %s211, %s212
      %p221 = scmp.eq.s32.totalorder %s28, 0
      %p222 = por %p220, %p221
      %p223 = scmp.ne.s32.totalorder %s211, %s212
      %p224 = scmp.eq.s32.totalorder %s29, 1
      %p225 = por %p223, %p224
      %p227 = scmp.ne.s32.totalorder %s212, %s226
      %p228 = scmp.eq.s32.totalorder %s29, 0
      %p229 = por %p227, %p228
      %s231 = sadd.s32 %s230, 1
      %p234 = scmp.eq.s32.totalorder %s23, 1
      %p235 = scmp.ne.s32.totalorder %s230, %s232
      %p236 = scmp.eq.s32.totalorder %s23, 0
      %p237 = por %p235, %p236
      %p238 = scmp.ne.s32.totalorder %s230, %s232
      %p239 = scmp.eq.s32.totalorder %s28, 1
      %p240 = por %p238, %p239
      %p241 = scmp.ne.s32.totalorder %s232, %s233
      %p242 = scmp.eq.s32.totalorder %s28, 0
      %p243 = por %p241, %p242
      %p244 = scmp.ne.s32.totalorder %s232, %s233
      %p245 = scmp.eq.s32.totalorder %s29, 1
      %p246 = por %p244, %p245
      %p248 = scmp.ne.s32.totalorder %s233, %s247
      %p249 = scmp.eq.s32.totalorder %s29, 0
      %p250 = por %p248, %p249
      %s252 = sadd.s32 %s251, 1
      %p255 = scmp.eq.s32.totalorder %s23, 1
      %p256 = scmp.ne.s32.totalorder %s251, %s253
      %p257 = scmp.eq.s32.totalorder %s23, 0
      %p258 = por %p256, %p257
      %p259 = scmp.ne.s32.totalorder %s251, %s253
      %p260 = scmp.eq.s32.totalorder %s28, 1
      %p261 = por %p259, %p260
      %p262 = scmp.ne.s32.totalorder %s253, %s254
      %p263 = scmp.eq.s32.totalorder %s28, 0
      %p264 = por %p262, %p263
      %p265 = scmp.ne.s32.totalorder %s253, %s254
      %p266 = scmp.eq.s32.totalorder %s29, 1
      %p267 = por %p265, %p266
      %p269 = scmp.ne.s32.totalorder %s254, %s268
      %p270 = scmp.eq.s32.totalorder %s29, 0
      %p271 = por %p269, %p270
      %s272 = ssub.s32 %s23, %s30
      %p273 = scmp.eq.s32.totalorder %s272, 0
      %s275 = sadd.s32 %s274, 1
      %s276 = scalar_select %p273, %s274, %s275
      %p279 = pneg %p273
      %p280 = scmp.eq.s32.totalorder %s23, 1
      %p281 = por %p279, %p280
      %p282 = scmp.ne.s32.totalorder %s274, %s277
      %p283 = scmp.eq.s32.totalorder %s23, 0
      %p284 = por %p282, %p283
      %p285 = scmp.ne.s32.totalorder %s274, %s277
      %p286 = scmp.eq.s32.totalorder %s28, 1
      %p287 = por %p285, %p286
      %p288 = scmp.ne.s32.totalorder %s277, %s278
      %p289 = scmp.eq.s32.totalorder %s28, 0
      %p290 = por %p288, %p289
      %p291 = scmp.ne.s32.totalorder %s277, %s278
      %p292 = scmp.eq.s32.totalorder %s29, 1
      %p293 = por %p291, %p292
      %p295 = scmp.ne.s32.totalorder %s278, %s294
      %p296 = scmp.eq.s32.totalorder %s29, 0
      %p297 = por %p295, %p296
      %p298 = scmp.le.s32.totalorder 1, %s23
      %p299 = scmp.lt.s32.totalorder %s23, 3
      %p300 = pnand %p298, %p299
      %p301 = pneg %p300
      // Predicated region
      $region9: #{tpu_custom_call.1} parent=5 // pred_check
        _
      $region10: #{tpu_custom_call.1} parent=5 // pred_check_branch
        %303 = sbr.rel (%p300) target = $region12
      $region11: #{tpu_custom_call.1} parent=5 // pred_region
        %s304 = ssub.s32 %s23, 1
        // Predicated region
        $region13: #{tpu_custom_call.1} parent=11 // pred_check
          %p305 = pneg %p96
        $region14: #{tpu_custom_call.1} parent=11 // pred_check_branch
          %307 = sbr.rel (%p305) target = $region16
        $region15: #{tpu_custom_call.1} parent=11 // pred_region
          _
        $region16: #{tpu_custom_call.1} parent=11 // pred_fallthru
          _
        // Predicated region
        $region17: #{tpu_custom_call.1} parent=11 // pred_check
          %p308 = pneg %p117
        $region18: #{tpu_custom_call.1} parent=11 // pred_check_branch
          %310 = sbr.rel (%p308) target = $region20
        $region19: #{tpu_custom_call.1} parent=11 // pred_region
          _
        $region20: #{tpu_custom_call.1} parent=11 // pred_fallthru
          _
        // Predicated region
        $region21: #{tpu_custom_call.1} parent=11 // pred_check
          %p311 = pneg %p138
        $region22: #{tpu_custom_call.1} parent=11 // pred_check_branch
          %313 = sbr.rel (%p311) target = $region24
        $region23: #{tpu_custom_call.1} parent=11 // pred_region
          _
        $region24: #{tpu_custom_call.1} parent=11 // pred_fallthru
          _
        // Predicated region
        $region25: #{tpu_custom_call.1} parent=11 // pred_check
          %p314 = pneg %p159
        $region26: #{tpu_custom_call.1} parent=11 // pred_check_branch
          %316 = sbr.rel (%p314) target = $region28
        $region27: #{tpu_custom_call.1} parent=11 // pred_region
          _
        $region28: #{tpu_custom_call.1} parent=11 // pred_fallthru
          _
        // Predicated region
        $region29: #{tpu_custom_call.1} parent=11 // pred_check
          %p317 = pneg %p180
        $region30: #{tpu_custom_call.1} parent=11 // pred_check_branch
          %319 = sbr.rel (%p317) target = $region32
        $region31: #{tpu_custom_call.1} parent=11 // pred_region
          _
        $region32: #{tpu_custom_call.1} parent=11 // pred_fallthru
          _
        // Predicated region
        $region33: #{tpu_custom_call.1} parent=11 // pred_check
          %p320 = pneg %p201
        $region34: #{tpu_custom_call.1} parent=11 // pred_check_branch
          %322 = sbr.rel (%p320) target = $region36
        $region35: #{tpu_custom_call.1} parent=11 // pred_region
          _
        $region36: #{tpu_custom_call.1} parent=11 // pred_fallthru
          _
        // Predicated region
        $region37: #{tpu_custom_call.1} parent=11 // pred_check
          %p323 = pneg %p222
        $region38: #{tpu_custom_call.1} parent=11 // pred_check_branch
          %325 = sbr.rel (%p323) target = $region40
        $region39: #{tpu_custom_call.1} parent=11 // pred_region
          _
        $region40: #{tpu_custom_call.1} parent=11 // pred_fallthru
          _
        // Predicated region
        $region41: #{tpu_custom_call.1} parent=11 // pred_check
          %p326 = pneg %p243
        $region42: #{tpu_custom_call.1} parent=11 // pred_check_branch
          %328 = sbr.rel (%p326) target = $region44
        $region43: #{tpu_custom_call.1} parent=11 // pred_region
          _
        $region44: #{tpu_custom_call.1} parent=11 // pred_fallthru
          _
        // Predicated region
        $region45: #{tpu_custom_call.1} parent=11 // pred_check
          %p329 = pneg %p264
        $region46: #{tpu_custom_call.1} parent=11 // pred_check_branch
          %331 = sbr.rel (%p329) target = $region48
        $region47: #{tpu_custom_call.1} parent=11 // pred_region
          _
        $region48: #{tpu_custom_call.1} parent=11 // pred_fallthru
          _
      $region12: #{tpu_custom_call.1} parent=5 // pred_fallthru
        _
      %p332 = scmp.lt.s32.totalorder %s23, 2
      // Predicated region
      $region49: #{tpu_custom_call.1} parent=5 // pred_check
        %p333 = pneg %p332
      $region50: #{tpu_custom_call.1} parent=5 // pred_check_branch
        %335 = sbr.rel (%p333) target = $region52
      $region51: #{tpu_custom_call.1} parent=5 // pred_region
        // Predicated region
        $region53: #{tpu_custom_call.1} parent=51 // pred_check
          %p336 = pneg %p43
        $region54: #{tpu_custom_call.1} parent=51 // pred_check_branch
          %338 = sbr.rel (%p336) target = $region56
        $region55: #{tpu_custom_call.1} parent=51 // pred_region
          %p339 = scmp.lt.s32.totalorder %s23, 1
          %s340 = scalar_select %p339, %s23, 1
          %s341 = smul.addr %s340, 2
          %s342 = smul.addr %s341, 8
          %s343 = scalar_lea.vmem %s0, %s342
        $region56: #{tpu_custom_call.1} parent=51 // pred_fallthru
          _
        // Predicated region
        $region57: #{tpu_custom_call.1} parent=51 // pred_check
          %p344 = pneg %p69
        $region58: #{tpu_custom_call.1} parent=51 // pred_check_branch
          %346 = sbr.rel (%p344) target = $region60
        $region59: #{tpu_custom_call.1} parent=51 // pred_region
          %s347 = sand.u32 %s59, 1
          %s348 = scalar_lea.sflag [#allocation3], %s347
          %s349 = sand.u32 %s59, 1
          %s350 = smul.addr %s349, 8
          %s351 = scalar_lea.vmem [#allocation2], %s350
          %s353 = ssub.s32 128, 128
          %354 = vsyncadd %s348, %s353
          %s355 = smul.addr %s23, 128
          %s356 = scalar_lea.hbm %s1, %s355
          %s358 = sshll.u32 %s351, 4
          %s359 = int_to_ptr.vmem [resolvable:$true] %s358
          %361 = dma.hbm_to_vmem [thread:$0]  %s356, 128, %s359, %s348
        $region60: #{tpu_custom_call.1} parent=51 // pred_fallthru
          _
      $region52: #{tpu_custom_call.1} parent=5 // pred_fallthru
        _
      %p362 = scmp.le.s32.totalorder 1, %s23
      %p363 = scmp.lt.s32.totalorder %s23, 3
      %p364 = pnand %p362, %p363
      %p365 = pneg %p364
      // Predicated region
      $region61: #{tpu_custom_call.1} parent=5 // pred_check
        _
      $region62: #{tpu_custom_call.1} parent=5 // pred_check_branch
        %367 = sbr.rel (%p364) target = $region64
      $region63: #{tpu_custom_call.1} parent=5 // pred_region
        %s368 = ssub.s32 %s23, 1
        %s369 = sand.u32 %s62, 1
        %s370 = scalar_lea.sflag [#allocation3], %s369
        %s371 = sand.u32 %s62, 1
        %s372 = smul.addr %s371, 8
        %s373 = scalar_lea.vmem [#allocation2], %s372
        // Predicated region
        $region65: #{tpu_custom_call.1} parent=63 // pred_check
          %p374 = pneg %p75
        $region66: #{tpu_custom_call.1} parent=63 // pred_check_branch
          %376 = sbr.rel (%p374) target = $region68
        $region67: #{tpu_custom_call.1} parent=63 // pred_region
          %377 = dma.done %s370, 128
        $region68: #{tpu_custom_call.1} parent=63 // pred_fallthru
          _
        %p378 = scmp.lt.s32.totalorder %s28, 1
        %s379 = scalar_select %p378, %s28, 1
        %s380 = smul.addr %s379, 2
        %s381 = smul.addr %s380, 8
        %s382 = scalar_lea.vmem %s0, %s381
        %p383 = pneg %p49
        %p384 = pneg %p46
        %s385 = sand.u32 %s62, 1
        %s386 = scalar_lea.sflag [#allocation3], %s385
        %s387 = sand.u32 %s62, 1
        %s388 = smul.addr %s387, 8
        %s389 = scalar_lea.vmem [#allocation2], %s388
        %p390 = pneg %p75
        %p391 = pneg %p72
        %p392 = pneg %p96
        %p393 = pneg %p93
        %p394 = pneg %p117
        %p395 = pneg %p114
        %p396 = pneg %p138
        %p397 = pneg %p135
        %p398 = pneg %p159
        %p399 = pneg %p156
        %p400 = pneg %p180
        %p401 = pneg %p177
        %p402 = pneg %p201
        %p403 = pneg %p198
        %p404 = pneg %p222
        %p405 = pneg %p219
        %p406 = pneg %p243
        %p407 = pneg %p240
        %p408 = pneg %p264
        %p409 = pneg %p261
        %p410 = pneg %p290
        %p411 = pneg %p287
        %s412 = sand.u32 %s277, 1
        %s413 = scalar_lea.sflag [#allocation4], %s412
        %s414 = sand.u32 %s277, 1
        %s415 = smul.addr %s414, 8
        %s416 = scalar_lea.vmem [#allocation5], %s415
        %p417 = scmp.lt.s32.totalorder %s28, 1
        %s418 = scalar_select %p417, %s28, 1
        %s419 = smul.addr %s418, 2
        %s420 = smul.addr %s419, 8
        %s421 = scalar_lea.vmem %s0, %s420
        %v422 = vld [vmem:[%s421] sm:$0xff]
        %v423 = vld [vmem:[%s421 + $0x8] sm:$0xff]
        %v424 = vld [vmem:[%s2] sm:$0x1]
        %v425 = vld [vmem:[%s3] sm:$0x1]
        %vm426 = vcmask 261120
        %v427 = vsel %vm426, %v422, 0.0
        %428 = vadd.xlane.f32.xlu0 %v427
        %v429 = vpop.xlane.xlu0 %428
        %v430 = vsel %vm426, %v423, 0.0
        %431 = vadd.xlane.f32.xlu0 %v430
        %v432 = vpop.xlane.xlu0 %431
        %v433 = vrcp.pop 32.0
        %v434 = vmul.f32 %v429, %v433
        %v435 = vmul.f32 %v432, %v433
        %v436 = vsub.f32 %v422, %v434
        %v437 = vsub.f32 %v423, %v435
        %v438 = vmul.f32 %v436, %v436
        %v439 = vmul.f32 %v437, %v437
        %v440 = vsel %vm426, %v438, 0.0
        %441 = vadd.xlane.f32.xlu0 %v440
        %v442 = vpop.xlane.xlu0 %441
        %v443 = vsel %vm426, %v439, 0.0
        %444 = vadd.xlane.f32.xlu0 %v443
        %v445 = vpop.xlane.xlu0 %444
        %v446 = vmul.f32 %v442, %v433
        %v447 = vmul.f32 %v445, %v433
        %v448 = vadd.f32 %v446, 1e-05
        %v449 = vadd.f32 %v447, 1e-05
        %v450 = vrsqrt.pop %v448
        %v451 = vrsqrt.pop %v449
        %v452 = vmul.f32 %v436, %v450
        %v453 = vmul.f32 %v437, %v451
        %v455 = vlaneseq
        %v456 = vshrl.u32 %v455, 7
        %v457 = vsub.s32 0, %v456
        %v458 = vrot.slane %v424, %v457
        %v460 = vmul.f32 %v452, %v458
        %v461 = vmul.f32 %v453, %v458
        %v463 = vlaneseq
        %v464 = vshrl.u32 %v463, 7
        %v465 = vsub.s32 0, %v464
        %v466 = vrot.slane %v425, %v465
        %v468 = vadd.f32 %v460, %v466
        %v469 = vadd.f32 %v461, %v466
        %v470 = vld [vmem:[%s373] sm:$0xff]
        %v471 = vld [vmem:[%s4] sm:$0x1]
        %v472 = vld [vmem:[%s5] sm:$0x1]
        %v473 = vsel %vm426, %v470, 0.0
        %474 = vadd.xlane.f32.xlu0 %v473
        %v475 = vpop.xlane.xlu0 %474
        %v476 = vmul.f32 %v475, %v433
        %v477 = vsub.f32 %v470, %v476
        %v478 = vmul.f32 %v477, %v477
        %v479 = vsel %vm426, %v478, 0.0
        %480 = vadd.xlane.f32.xlu0 %v479
        %v481 = vpop.xlane.xlu0 %480
        %v482 = vmul.f32 %v481, %v433
        %v483 = vadd.f32 %v482, 1e-05
        %v484 = vrsqrt.pop %v483
        %v485 = vmul.f32 %v477, %v484
        %v487 = vlaneseq
        %v488 = vshrl.u32 %v487, 7
        %v489 = vsub.s32 0, %v488
        %v490 = vrot.slane %v471, %v489
        %v492 = vmul.f32 %v485, %v490
        %v494 = vlaneseq
        %v495 = vshrl.u32 %v494, 7
        %v496 = vsub.s32 0, %v495
        %v497 = vrot.slane %v472, %v496
        %v499 = vadd.f32 %v492, %v497
        %v500 = vld [vmem:[%s6] sm:$0xff]
        %v501 = vld [vmem:[%s6 + $0x8] sm:$0xff]
        %v502 = vld [vmem:[%s6 + $0x10] sm:$0xff]
        %v503 = vld [vmem:[%s6 + $0x18] sm:$0xff]
        %v505 = vsel %vm426, %v499, 0
        %507 = vmatprep.subr.mxu0 0.0
        %508 = vmatpush1.msra.mxu0 %v500
        %509 = vmatprep.subr.mxu0 0.0
        %510 = vmatpush1.msra.mxu0 %v501
        %511 = vmatprep.subr.mxu0 0.0
        %512 = vmatpush1.msra.mxu0 %v502
        %513 = vmatprep.subr.mxu0 0.0
        %514 = vmatpush1.msra.mxu0 %v503
        %515 = vmatprep.subr.mxu0 0.0
        %516 = vmatpush1.msra.mxu0 0.0
        %517 = vmatprep.subr.mxu0 0.0
        %518 = vmatpush1.msra.mxu0 0.0
        %519 = vmatprep.subr.mxu0 0.0
        %520 = vmatpush1.msra.mxu0 0.0
        %521 = vmatprep.subr.mxu0 0.0
        %522 = vmatpush1.msra.mxu0 0.0
        %523 = vmatprep.subr.mxu0 0.0
        %524 = vmatpush1.msra.mxu0 0.0
        %525 = vmatprep.subr.mxu0 0.0
        %526 = vmatpush1.msra.mxu0 0.0
        %527 = vmatprep.subr.mxu0 0.0
        %528 = vmatpush1.msra.mxu0 0.0
        %529 = vmatprep.subr.mxu0 0.0
        %530 = vmatpush1.msra.mxu0 0.0
        %531 = vmatprep.subr.mxu0 0.0
        %532 = vmatpush1.msra.mxu0 0.0
        %533 = vmatprep.subr.mxu0 0.0
        %534 = vmatpush1.msra.mxu0 0.0
        %535 = vmatprep.subr.mxu0 0.0
        %536 = vmatpush1.msra.mxu0 0.0
        %537 = vmatprep.subr.mxu0 0.0
        %538 = vmatpush1.msra.mxu0 0.0
        %539 = vmatprep.subr.mxu0 0.0
        %540 = vmatpush1.msra.mxu0 0.0
        %541 = vmatprep.subr.mxu0 0.0
        %542 = vmatpush1.msra.mxu0 0.0
        %543 = vmatprep.subr.mxu0 0.0
        %544 = vmatpush1.msra.mxu0 0.0
        %545 = vmatprep.subr.mxu0 0.0
        %546 = vmatpush1.msra.mxu0 0.0
        %547 = vmatprep.subr.mxu0 0.0
        %548 = vmatpush1.msra.mxu0 0.0
        %549 = vmatprep.subr.mxu0 0.0
        %550 = vmatpush1.msra.mxu0 0.0
        %551 = vmatprep.subr.mxu0 0.0
        %552 = vmatpush1.msra.mxu0 0.0
        %553 = vmatprep.subr.mxu0 0.0
        %554 = vmatpush1.msra.mxu0 0.0
        %555 = vmatprep.subr.mxu0 0.0
        %556 = vmatpush1.msra.mxu0 0.0
        %557 = vmatprep.subr.mxu0 0.0
        %558 = vmatpush1.msra.mxu0 0.0
        %559 = vmatprep.subr.mxu0 0.0
        %560 = vmatpush1.msra.mxu0 0.0
        %561 = vmatprep.subr.mxu0 0.0
        %562 = vmatpush1.msra.mxu0 0.0
        %563 = vmatprep.subr.mxu0 0.0
        %564 = vmatpush1.msra.mxu0 0.0
        %565 = vmatprep.subr.mxu0 0.0
        %566 = vmatpush1.msra.mxu0 0.0
        %567 = vmatprep.subr.mxu0 0.0
        %568 = vmatpush1.msra.mxu0 0.0
        %569 = vmatprep.subr.mxu0 0.0
        %570 = vmatpush1.msra.mxu0 0.0
        %571 = vmatprep.mubr.f32.mxu0 0.0
        %572 = vmatmul.mubr.f32.gmra.mrb[0].mxu0 %v505
        %v573 = vpop.f32.mrb[0].mxu0
        %v574 = vadd.f32 0.0, %v573
        %v575 = vpop.f32.mrb[0].mxu0
        %576 = vdwg.mxu0
        %v577 = vmul.f32 %v574, 0.25
        %v578 = vld [vmem:[%s7] sm:$0xff]
        %v579 = vld [vmem:[%s7 + $0x8] sm:$0xff]
        %v580 = vld [vmem:[%s7 + $0x10] sm:$0xff]
        %v581 = vld [vmem:[%s7 + $0x18] sm:$0xff]
        %v583 = vsel %vm426, %v468, 0
        %v586 = vsel %vm426, %v469, 0
        %588 = vmatprep.subr.mxu0 0.0
        %589 = vmatpush1.msra.mxu0 %v578
        %590 = vmatprep.subr.mxu0 0.0
        %591 = vmatpush1.msra.mxu0 %v579
        %592 = vmatprep.subr.mxu0 0.0
        %593 = vmatpush1.msra.mxu0 %v580
        %594 = vmatprep.subr.mxu0 0.0
        %595 = vmatpush1.msra.mxu0 %v581
        %596 = vmatprep.subr.mxu0 0.0
        %597 = vmatpush1.msra.mxu0 0.0
        %598 = vmatprep.subr.mxu0 0.0
        %599 = vmatpush1.msra.mxu0 0.0
        %600 = vmatprep.subr.mxu0 0.0
        %601 = vmatpush1.msra.mxu0 0.0
        %602 = vmatprep.subr.mxu0 0.0
        %603 = vmatpush1.msra.mxu0 0.0
        %604 = vmatprep.subr.mxu0 0.0
        %605 = vmatpush1.msra.mxu0 0.0
        %606 = vmatprep.subr.mxu0 0.0
        %607 = vmatpush1.msra.mxu0 0.0
        %608 = vmatprep.subr.mxu0 0.0
        %609 = vmatpush1.msra.mxu0 0.0
        %610 = vmatprep.subr.mxu0 0.0
        %611 = vmatpush1.msra.mxu0 0.0
        %612 = vmatprep.subr.mxu0 0.0
        %613 = vmatpush1.msra.mxu0 0.0
        %614 = vmatprep.subr.mxu0 0.0
        %615 = vmatpush1.msra.mxu0 0.0
        %616 = vmatprep.subr.mxu0 0.0
        %617 = vmatpush1.msra.mxu0 0.0
        %618 = vmatprep.subr.mxu0 0.0
        %619 = vmatpush1.msra.mxu0 0.0
        %620 = vmatprep.subr.mxu0 0.0
        %621 = vmatpush1.msra.mxu0 0.0
        %622 = vmatprep.subr.mxu0 0.0
        %623 = vmatpush1.msra.mxu0 0.0
        %624 = vmatprep.subr.mxu0 0.0
        %625 = vmatpush1.msra.mxu0 0.0
        %626 = vmatprep.subr.mxu0 0.0
        %627 = vmatpush1.msra.mxu0 0.0
        %628 = vmatprep.subr.mxu0 0.0
        %629 = vmatpush1.msra.mxu0 0.0
        %630 = vmatprep.subr.mxu0 0.0
        %631 = vmatpush1.msra.mxu0 0.0
        %632 = vmatprep.subr.mxu0 0.0
        %633 = vmatpush1.msra.mxu0 0.0
        %634 = vmatprep.subr.mxu0 0.0
        %635 = vmatpush1.msra.mxu0 0.0
        %636 = vmatprep.subr.mxu0 0.0
        %637 = vmatpush1.msra.mxu0 0.0
        %638 = vmatprep.subr.mxu0 0.0
        %639 = vmatpush1.msra.mxu0 0.0
        %640 = vmatprep.subr.mxu0 0.0
        %641 = vmatpush1.msra.mxu0 0.0
        %642 = vmatprep.subr.mxu0 0.0
        %643 = vmatpush1.msra.mxu0 0.0
        %644 = vmatprep.subr.mxu0 0.0
        %645 = vmatpush1.msra.mxu0 0.0
        %646 = vmatprep.subr.mxu0 0.0
        %647 = vmatpush1.msra.mxu0 0.0
        %648 = vmatprep.subr.mxu0 0.0
        %649 = vmatpush1.msra.mxu0 0.0
        %650 = vmatprep.subr.mxu0 0.0
        %651 = vmatpush1.msra.mxu0 0.0
        %652 = vmatprep.mubr.f32.mxu0 0.0
        %653 = vmatmul.mubr.f32.gmra.mrb[0].mxu0 %v583
        %v654 = vpop.f32.mrb[0].mxu0
        %v655 = vadd.f32 0.0, %v654
        %v656 = vpop.f32.mrb[0].mxu0
        %657 = vmatprep.mubr.f32.mxu0 0.0
        %658 = vmatmul.mubr.f32.gmra.mrb[0].mxu0 %v586
        %v659 = vpop.f32.mrb[0].mxu0
        %v660 = vadd.f32 0.0, %v659
        %v661 = vpop.f32.mrb[0].mxu0
        %662 = vmatprep.mubr.f32.mxu0 0.0
        %663 = vmatmul.mubr.f32.gmra.mrb[0].mxu0 %v505
        %v664 = vpop.f32.mrb[0].mxu0
        %v665 = vadd.f32 0.0, %v664
        %v666 = vpop.f32.mrb[0].mxu0
        %667 = vdwg.mxu0
        %672 = vrot.lane.b32.xlu0 %v578, 64
        %v673 = vpop.permute.xlu0 %672
        %674 = vrot.lane.b32.xlu0 %v579, 64
        %v675 = vpop.permute.xlu0 %674
        %676 = vrot.lane.b32.xlu0 %v580, 64
        %v677 = vpop.permute.xlu0 %676
        %678 = vrot.lane.b32.xlu0 %v581, 64
        %v679 = vpop.permute.xlu0 %678
        %684 = vmatprep.subr.mxu0 0.0
        %685 = vmatpush1.msra.mxu0 %v673
        %686 = vmatprep.subr.mxu0 0.0
        %687 = vmatpush1.msra.mxu0 %v675
        %688 = vmatprep.subr.mxu0 0.0
        %689 = vmatpush1.msra.mxu0 %v677
        %690 = vmatprep.subr.mxu0 0.0
        %691 = vmatpush1.msra.mxu0 %v679
        %692 = vmatprep.subr.mxu0 0.0
        %693 = vmatpush1.msra.mxu0 0.0
        %694 = vmatprep.subr.mxu0 0.0
        %695 = vmatpush1.msra.mxu0 0.0
        %696 = vmatprep.subr.mxu0 0.0
        %697 = vmatpush1.msra.mxu0 0.0
        %698 = vmatprep.subr.mxu0 0.0
        %699 = vmatpush1.msra.mxu0 0.0
        %700 = vmatprep.subr.mxu0 0.0
        %701 = vmatpush1.msra.mxu0 0.0
        %702 = vmatprep.subr.mxu0 0.0
        %703 = vmatpush1.msra.mxu0 0.0
        %704 = vmatprep.subr.mxu0 0.0
        %705 = vmatpush1.msra.mxu0 0.0
        %706 = vmatprep.subr.mxu0 0.0
        %707 = vmatpush1.msra.mxu0 0.0
        %708 = vmatprep.subr.mxu0 0.0
        %709 = vmatpush1.msra.mxu0 0.0
        %710 = vmatprep.subr.mxu0 0.0
        %711 = vmatpush1.msra.mxu0 0.0
        %712 = vmatprep.subr.mxu0 0.0
        %713 = vmatpush1.msra.mxu0 0.0
        %714 = vmatprep.subr.mxu0 0.0
        %715 = vmatpush1.msra.mxu0 0.0
        %716 = vmatprep.subr.mxu0 0.0
        %717 = vmatpush1.msra.mxu0 0.0
        %718 = vmatprep.subr.mxu0 0.0
        %719 = vmatpush1.msra.mxu0 0.0
        %720 = vmatprep.subr.mxu0 0.0
        %721 = vmatpush1.msra.mxu0 0.0
        %722 = vmatprep.subr.mxu0 0.0
        %723 = vmatpush1.msra.mxu0 0.0
        %724 = vmatprep.subr.mxu0 0.0
        %725 = vmatpush1.msra.mxu0 0.0
        %726 = vmatprep.subr.mxu0 0.0
        %727 = vmatpush1.msra.mxu0 0.0
        %728 = vmatprep.subr.mxu0 0.0
        %729 = vmatpush1.msra.mxu0 0.0
        %730 = vmatprep.subr.mxu0 0.0
        %731 = vmatpush1.msra.mxu0 0.0
        %732 = vmatprep.subr.mxu0 0.0
        %733 = vmatpush1.msra.mxu0 0.0
        %734 = vmatprep.subr.mxu0 0.0
        %735 = vmatpush1.msra.mxu0 0.0
        %736 = vmatprep.subr.mxu0 0.0
        %737 = vmatpush1.msra.mxu0 0.0
        %738 = vmatprep.subr.mxu0 0.0
        %739 = vmatpush1.msra.mxu0 0.0
        %740 = vmatprep.subr.mxu0 0.0
        %741 = vmatpush1.msra.mxu0 0.0
        %742 = vmatprep.subr.mxu0 0.0
        %743 = vmatpush1.msra.mxu0 0.0
        %744 = vmatprep.subr.mxu0 0.0
        %745 = vmatpush1.msra.mxu0 0.0
        %746 = vmatprep.subr.mxu0 0.0
        %747 = vmatpush1.msra.mxu0 0.0
        %748 = vmatprep.mubr.f32.mxu0 0.0
        %749 = vmatmul.mubr.f32.gmra.mrb[0].mxu0 %v583
        %v750 = vpop.f32.mrb[0].mxu0
        %v751 = vadd.f32 0.0, %v750
        %v752 = vpop.f32.mrb[0].mxu0
        %753 = vmatprep.mubr.f32.mxu0 0.0
        %754 = vmatmul.mubr.f32.gmra.mrb[0].mxu0 %v586
        %v755 = vpop.f32.mrb[0].mxu0
        %v756 = vadd.f32 0.0, %v755
        %v757 = vpop.f32.mrb[0].mxu0
        %758 = vmatprep.mubr.f32.mxu0 0.0
        %759 = vmatmul.mubr.f32.gmra.mrb[0].mxu0 %v505
        %v760 = vpop.f32.mrb[0].mxu0
        %v761 = vadd.f32 0.0, %v760
        %v762 = vpop.f32.mrb[0].mxu0
        %763 = vdwg.mxu0
        %765 = vrot.lane.b32.xlu0 %v577, 112
        %v766 = vpop.permute.xlu0 %765
        %767 = vrot.lane.b32.xlu0 %v577, 96
        %v768 = vpop.permute.xlu0 %767
        %769 = vrot.lane.b32.xlu0 %v577, 80
        %v770 = vpop.permute.xlu0 %769
        %774 = vrot.lane.b32.xlu0 %v655, 112
        %v775 = vpop.permute.xlu0 %774
        %776 = vrot.lane.b32.xlu0 %v660, 112
        %v777 = vpop.permute.xlu0 %776
        %778 = vrot.lane.b32.xlu0 %v665, 112
        %v779 = vpop.permute.xlu0 %778
        %780 = vrot.lane.b32.xlu0 %v655, 96
        %v781 = vpop.permute.xlu0 %780
        %782 = vrot.lane.b32.xlu0 %v660, 96
        %v783 = vpop.permute.xlu0 %782
        %784 = vrot.lane.b32.xlu0 %v665, 96
        %v785 = vpop.permute.xlu0 %784
        %786 = vrot.lane.b32.xlu0 %v655, 80
        %v787 = vpop.permute.xlu0 %786
        %788 = vrot.lane.b32.xlu0 %v660, 80
        %v789 = vpop.permute.xlu0 %788
        %790 = vrot.lane.b32.xlu0 %v665, 80
        %v791 = vpop.permute.xlu0 %790
        %795 = vrot.lane.b32.xlu0 %v751, 112
        %v796 = vpop.permute.xlu0 %795
        %797 = vrot.lane.b32.xlu0 %v756, 112
        %v798 = vpop.permute.xlu0 %797
        %799 = vrot.lane.b32.xlu0 %v761, 112
        %v800 = vpop.permute.xlu0 %799
        %804 = vrot.lane.b32.xlu0 %v751, 96
        %v805 = vpop.permute.xlu0 %804
        %806 = vrot.lane.b32.xlu0 %v756, 96
        %v807 = vpop.permute.xlu0 %806
        %808 = vrot.lane.b32.xlu0 %v761, 96
        %v809 = vpop.permute.xlu0 %808
        %813 = vrot.lane.b32.xlu0 %v751, 80
        %v814 = vpop.permute.xlu0 %813
        %815 = vrot.lane.b32.xlu0 %v756, 80
        %v816 = vpop.permute.xlu0 %815
        %817 = vrot.lane.b32.xlu0 %v761, 80
        %v818 = vpop.permute.xlu0 %817
        %vm822 = vcmask 130048
        %v823 = vsel %vm822, %v577, 0
        %v825 = vsel %vm822, %v655, 0
        %v827 = vsel %vm822, %v660, 0
        %v829 = vsel %vm822, %v665, 0
        %831 = vmatprep.subr.mxu0 0.0
        %832 = vmatpush1.xpose.msra.mxu0 %v825
        %833 = vmatprep.subr.mxu0 0.0
        %834 = vmatpush1.xpose.msra.mxu0 %v827
        %835 = vmatprep.subr.mxu0 0.0
        %836 = vmatpush1.xpose.msra.mxu0 %v829
        %837 = vmatprep.subr.mxu0 0.0
        %838 = vmatpush1.xpose.msra.mxu0 0.0
        %839 = vmatprep.subr.mxu0 0.0
        %840 = vmatpush1.xpose.msra.mxu0 0.0
        %841 = vmatprep.subr.mxu0 0.0
        %842 = vmatpush1.xpose.msra.mxu0 0.0
        %843 = vmatprep.subr.mxu0 0.0
        %844 = vmatpush1.xpose.msra.mxu0 0.0
        %845 = vmatprep.subr.mxu0 0.0
        %846 = vmatpush1.xpose.msra.mxu0 0.0
        %847 = vmatprep.subr.mxu0 0.0
        %848 = vmatpush1.xpose.msra.mxu0 0.0
        %849 = vmatprep.subr.mxu0 0.0
        %850 = vmatpush1.xpose.msra.mxu0 0.0
        %851 = vmatprep.subr.mxu0 0.0
        %852 = vmatpush1.xpose.msra.mxu0 0.0
        %853 = vmatprep.subr.mxu0 0.0
        %854 = vmatpush1.xpose.msra.mxu0 0.0
        %855 = vmatprep.subr.mxu0 0.0
        %856 = vmatpush1.xpose.msra.mxu0 0.0
        %857 = vmatprep.subr.mxu0 0.0
        %858 = vmatpush1.xpose.msra.mxu0 0.0
        %859 = vmatprep.subr.mxu0 0.0
        %860 = vmatpush1.xpose.msra.mxu0 0.0
        %861 = vmatprep.subr.mxu0 0.0
        %862 = vmatpush1.xpose.msra.mxu0 0.0
        %863 = vmatprep.subr.mxu0 0.0
        %864 = vmatpush1.xpose.msra.mxu0 0.0
        %865 = vmatprep.subr.mxu0 0.0
        %866 = vmatpush1.xpose.msra.mxu0 0.0
        %867 = vmatprep.subr.mxu0 0.0
        %868 = vmatpush1.xpose.msra.mxu0 0.0
        %869 = vmatprep.subr.mxu0 0.0
        %870 = vmatpush1.xpose.msra.mxu0 0.0
        %871 = vmatprep.subr.mxu0 0.0
        %872 = vmatpush1.xpose.msra.mxu0 0.0
        %873 = vmatprep.subr.mxu0 0.0
        %874 = vmatpush1.xpose.msra.mxu0 0.0
        %875 = vmatprep.subr.mxu0 0.0
        %876 = vmatpush1.xpose.msra.mxu0 0.0
        %877 = vmatprep.subr.mxu0 0.0
        %878 = vmatpush1.xpose.msra.mxu0 0.0
        %879 = vmatprep.subr.mxu0 0.0
        %880 = vmatpush1.xpose.msra.mxu0 0.0
        %881 = vmatprep.subr.mxu0 0.0
        %882 = vmatpush1.xpose.msra.mxu0 0.0
        %883 = vmatprep.subr.mxu0 0.0
        %884 = vmatpush1.xpose.msra.mxu0 0.0
        %885 = vmatprep.subr.mxu0 0.0
        %886 = vmatpush1.xpose.msra.mxu0 0.0
        %887 = vmatprep.subr.mxu0 0.0
        %888 = vmatpush1.xpose.msra.mxu0 0.0
        %889 = vmatprep.subr.mxu0 0.0
        %890 = vmatpush1.xpose.msra.mxu0 0.0
        %891 = vmatprep.subr.mxu0 0.0
        %892 = vmatpush1.xpose.msra.mxu0 0.0
        %893 = vmatprep.subr.mxu0 0.0
        %894 = vmatpush1.xpose.msra.mxu0 0.0
        %895 = vmatprep.mubr.f32.mxu0 0.0
        %896 = vmatmul.mubr.f32.gmra.mrb[0].mxu0 %v823
        %v897 = vpop.f32.mrb[0].mxu0
        %v898 = vadd.f32 0.0, %v897
        %v899 = vpop.f32.mrb[0].mxu0
        %900 = vdwg.mxu0
        %v901 = vsel %vm822, %v766, 0
        %v903 = vsel %vm822, %v775, 0
        %v905 = vsel %vm822, %v777, 0
        %v907 = vsel %vm822, %v779, 0
        %909 = vmatprep.subr.mxu0 0.0
        %910 = vmatpush1.xpose.msra.mxu0 %v903
        %911 = vmatprep.subr.mxu0 0.0
        %912 = vmatpush1.xpose.msra.mxu0 %v905
        %913 = vmatprep.subr.mxu0 0.0
        %914 = vmatpush1.xpose.msra.mxu0 %v907
        %915 = vmatprep.subr.mxu0 0.0
        %916 = vmatpush1.xpose.msra.mxu0 0.0
        %917 = vmatprep.subr.mxu0 0.0
        %918 = vmatpush1.xpose.msra.mxu0 0.0
        %919 = vmatprep.subr.mxu0 0.0
        %920 = vmatpush1.xpose.msra.mxu0 0.0
        %921 = vmatprep.subr.mxu0 0.0
        %922 = vmatpush1.xpose.msra.mxu0 0.0
        %923 = vmatprep.subr.mxu0 0.0
        %924 = vmatpush1.xpose.msra.mxu0 0.0
        %925 = vmatprep.subr.mxu0 0.0
        %926 = vmatpush1.xpose.msra.mxu0 0.0
        %927 = vmatprep.subr.mxu0 0.0
        %928 = vmatpush1.xpose.msra.mxu0 0.0
        %929 = vmatprep.subr.mxu0 0.0
        %930 = vmatpush1.xpose.msra.mxu0 0.0
        %931 = vmatprep.subr.mxu0 0.0
        %932 = vmatpush1.xpose.msra.mxu0 0.0
        %933 = vmatprep.subr.mxu0 0.0
        %934 = vmatpush1.xpose.msra.mxu0 0.0
        %935 = vmatprep.subr.mxu0 0.0
        %936 = vmatpush1.xpose.msra.mxu0 0.0
        %937 = vmatprep.subr.mxu0 0.0
        %938 = vmatpush1.xpose.msra.mxu0 0.0
        %939 = vmatprep.subr.mxu0 0.0
        %940 = vmatpush1.xpose.msra.mxu0 0.0
        %941 = vmatprep.subr.mxu0 0.0
        %942 = vmatpush1.xpose.msra.mxu0 0.0
        %943 = vmatprep.subr.mxu0 0.0
        %944 = vmatpush1.xpose.msra.mxu0 0.0
        %945 = vmatprep.subr.mxu0 0.0
        %946 = vmatpush1.xpose.msra.mxu0 0.0
        %947 = vmatprep.subr.mxu0 0.0
        %948 = vmatpush1.xpose.msra.mxu0 0.0
        %949 = vmatprep.subr.mxu0 0.0
        %950 = vmatpush1.xpose.msra.mxu0 0.0
        %951 = vmatprep.subr.mxu0 0.0
        %952 = vmatpush1.xpose.msra.mxu0 0.0
        %953 = vmatprep.subr.mxu0 0.0
        %954 = vmatpush1.xpose.msra.mxu0 0.0
        %955 = vmatprep.subr.mxu0 0.0
        %956 = vmatpush1.xpose.msra.mxu0 0.0
        %957 = vmatprep.subr.mxu0 0.0
        %958 = vmatpush1.xpose.msra.mxu0 0.0
        %959 = vmatprep.subr.mxu0 0.0
        %960 = vmatpush1.xpose.msra.mxu0 0.0
        %961 = vmatprep.subr.mxu0 0.0
        %962 = vmatpush1.xpose.msra.mxu0 0.0
        %963 = vmatprep.subr.mxu0 0.0
        %964 = vmatpush1.xpose.msra.mxu0 0.0
        %965 = vmatprep.subr.mxu0 0.0
        %966 = vmatpush1.xpose.msra.mxu0 0.0
        %967 = vmatprep.subr.mxu0 0.0
        %968 = vmatpush1.xpose.msra.mxu0 0.0
        %969 = vmatprep.subr.mxu0 0.0
        %970 = vmatpush1.xpose.msra.mxu0 0.0
        %971 = vmatprep.subr.mxu0 0.0
        %972 = vmatpush1.xpose.msra.mxu0 0.0
        %973 = vmatprep.mubr.f32.mxu0 0.0
        %974 = vmatmul.mubr.f32.gmra.mrb[0].mxu0 %v901
        %v975 = vpop.f32.mrb[0].mxu0
        %v976 = vadd.f32 0.0, %v975
        %v977 = vpop.f32.mrb[0].mxu0
        %978 = vdwg.mxu0
        %v979 = vsel %vm822, %v768, 0
        %v981 = vsel %vm822, %v781, 0
        %v983 = vsel %vm822, %v783, 0
        %v985 = vsel %vm822, %v785, 0
        %987 = vmatprep.subr.mxu0 0.0
        %988 = vmatpush1.xpose.msra.mxu0 %v981
        %989 = vmatprep.subr.mxu0 0.0
        %990 = vmatpush1.xpose.msra.mxu0 %v983
        %991 = vmatprep.subr.mxu0 0.0
        %992 = vmatpush1.xpose.msra.mxu0 %v985
        %993 = vmatprep.subr.mxu0 0.0
        %994 = vmatpush1.xpose.msra.mxu0 0.0
        %995 = vmatprep.subr.mxu0 0.0
        %996 = vmatpush1.xpose.msra.mxu0 0.0
        %997 = vmatprep.subr.mxu0 0.0
        %998 = vmatpush1.xpose.msra.mxu0 0.0
        %999 = vmatprep.subr.mxu0 0.0
        %1000 = vmatpush1.xpose.msra.mxu0 0.0
        %1001 = vmatprep.subr.mxu0 0.0
        %1002 = vmatpush1.xpose.msra.mxu0 0.0
        %1003 = vmatprep.subr.mxu0 0.0
        %1004 = vmatpush1.xpose.msra.mxu0 0.0
        %1005 = vmatprep.subr.mxu0 0.0
        %1006 = vmatpush1.xpose.msra.mxu0 0.0
        %1007 = vmatprep.subr.mxu0 0.0
        %1008 = vmatpush1.xpose.msra.mxu0 0.0
        %1009 = vmatprep.subr.mxu0 0.0
        %1010 = vmatpush1.xpose.msra.mxu0 0.0
        %1011 = vmatprep.subr.mxu0 0.0
        %1012 = vmatpush1.xpose.msra.mxu0 0.0
        %1013 = vmatprep.subr.mxu0 0.0
        %1014 = vmatpush1.xpose.msra.mxu0 0.0
        %1015 = vmatprep.subr.mxu0 0.0
        %1016 = vmatpush1.xpose.msra.mxu0 0.0
        %1017 = vmatprep.subr.mxu0 0.0
        %1018 = vmatpush1.xpose.msra.mxu0 0.0
        %1019 = vmatprep.subr.mxu0 0.0
        %1020 = vmatpush1.xpose.msra.mxu0 0.0
        %1021 = vmatprep.subr.mxu0 0.0
        %1022 = vmatpush1.xpose.msra.mxu0 0.0
        %1023 = vmatprep.subr.mxu0 0.0
        %1024 = vmatpush1.xpose.msra.mxu0 0.0
        %1025 = vmatprep.subr.mxu0 0.0
        %1026 = vmatpush1.xpose.msra.mxu0 0.0
        %1027 = vmatprep.subr.mxu0 0.0
        %1028 = vmatpush1.xpose.msra.mxu0 0.0
        %1029 = vmatprep.subr.mxu0 0.0
        %1030 = vmatpush1.xpose.msra.mxu0 0.0
        %1031 = vmatprep.subr.mxu0 0.0
        %1032 = vmatpush1.xpose.msra.mxu0 0.0
        %1033 = vmatprep.subr.mxu0 0.0
        %1034 = vmatpush1.xpose.msra.mxu0 0.0
        %1035 = vmatprep.subr.mxu0 0.0
        %1036 = vmatpush1.xpose.msra.mxu0 0.0
        %1037 = vmatprep.subr.mxu0 0.0
        %1038 = vmatpush1.xpose.msra.mxu0 0.0
        %1039 = vmatprep.subr.mxu0 0.0
        %1040 = vmatpush1.xpose.msra.mxu0 0.0
        %1041 = vmatprep.subr.mxu0 0.0
        %1042 = vmatpush1.xpose.msra.mxu0 0.0
        %1043 = vmatprep.subr.mxu0 0.0
        %1044 = vmatpush1.xpose.msra.mxu0 0.0
        %1045 = vmatprep.subr.mxu0 0.0
        %1046 = vmatpush1.xpose.msra.mxu0 0.0
        %1047 = vmatprep.subr.mxu0 0.0
        %1048 = vmatpush1.xpose.msra.mxu0 0.0
        %1049 = vmatprep.subr.mxu0 0.0
        %1050 = vmatpush1.xpose.msra.mxu0 0.0
        %1051 = vmatprep.mubr.f32.mxu0 0.0
        %1052 = vmatmul.mubr.f32.gmra.mrb[0].mxu0 %v979
        %v1053 = vpop.f32.mrb[0].mxu0
        %v1054 = vadd.f32 0.0, %v1053
        %v1055 = vpop.f32.mrb[0].mxu0
        %1056 = vdwg.mxu0
        %v1057 = vsel %vm822, %v770, 0
        %v1059 = vsel %vm822, %v787, 0
        %v1061 = vsel %vm822, %v789, 0
        %v1063 = vsel %vm822, %v791, 0
        %1065 = vmatprep.subr.mxu0 0.0
        %1066 = vmatpush1.xpose.msra.mxu0 %v1059
        %1067 = vmatprep.subr.mxu0 0.0
        %1068 = vmatpush1.xpose.msra.mxu0 %v1061
        %1069 = vmatprep.subr.mxu0 0.0
        %1070 = vmatpush1.xpose.msra.mxu0 %v1063
        %1071 = vmatprep.subr.mxu0 0.0
        %1072 = vmatpush1.xpose.msra.mxu0 0.0
        %1073 = vmatprep.subr.mxu0 0.0
        %1074 = vmatpush1.xpose.msra.mxu0 0.0
        %1075 = vmatprep.subr.mxu0 0.0
        %1076 = vmatpush1.xpose.msra.mxu0 0.0
        %1077 = vmatprep.subr.mxu0 0.0
        %1078 = vmatpush1.xpose.msra.mxu0 0.0
        %1079 = vmatprep.subr.mxu0 0.0
        %1080 = vmatpush1.xpose.msra.mxu0 0.0
        %1081 = vmatprep.subr.mxu0 0.0
        %1082 = vmatpush1.xpose.msra.mxu0 0.0
        %1083 = vmatprep.subr.mxu0 0.0
        %1084 = vmatpush1.xpose.msra.mxu0 0.0
        %1085 = vmatprep.subr.mxu0 0.0
        %1086 = vmatpush1.xpose.msra.mxu0 0.0
        %1087 = vmatprep.subr.mxu0 0.0
        %1088 = vmatpush1.xpose.msra.mxu0 0.0
        %1089 = vmatprep.subr.mxu0 0.0
        %1090 = vmatpush1.xpose.msra.mxu0 0.0
        %1091 = vmatprep.subr.mxu0 0.0
        %1092 = vmatpush1.xpose.msra.mxu0 0.0
        %1093 = vmatprep.subr.mxu0 0.0
        %1094 = vmatpush1.xpose.msra.mxu0 0.0
        %1095 = vmatprep.subr.mxu0 0.0
        %1096 = vmatpush1.xpose.msra.mxu0 0.0
        %1097 = vmatprep.subr.mxu0 0.0
        %1098 = vmatpush1.xpose.msra.mxu0 0.0
        %1099 = vmatprep.subr.mxu0 0.0
        %1100 = vmatpush1.xpose.msra.mxu0 0.0
        %1101 = vmatprep.subr.mxu0 0.0
        %1102 = vmatpush1.xpose.msra.mxu0 0.0
        %1103 = vmatprep.subr.mxu0 0.0
        %1104 = vmatpush1.xpose.msra.mxu0 0.0
        %1105 = vmatprep.subr.mxu0 0.0
        %1106 = vmatpush1.xpose.msra.mxu0 0.0
        %1107 = vmatprep.subr.mxu0 0.0
        %1108 = vmatpush1.xpose.msra.mxu0 0.0
        %1109 = vmatprep.subr.mxu0 0.0
        %1110 = vmatpush1.xpose.msra.mxu0 0.0
        %1111 = vmatprep.subr.mxu0 0.0
        %1112 = vmatpush1.xpose.msra.mxu0 0.0
        %1113 = vmatprep.subr.mxu0 0.0
        %1114 = vmatpush1.xpose.msra.mxu0 0.0
        %1115 = vmatprep.subr.mxu0 0.0
        %1116 = vmatpush1.xpose.msra.mxu0 0.0
        %1117 = vmatprep.subr.mxu0 0.0
        %1118 = vmatpush1.xpose.msra.mxu0 0.0
        %1119 = vmatprep.subr.mxu0 0.0
        %1120 = vmatpush1.xpose.msra.mxu0 0.0
        %1121 = vmatprep.subr.mxu0 0.0
        %1122 = vmatpush1.xpose.msra.mxu0 0.0
        %1123 = vmatprep.subr.mxu0 0.0
        %1124 = vmatpush1.xpose.msra.mxu0 0.0
        %1125 = vmatprep.subr.mxu0 0.0
        %1126 = vmatpush1.xpose.msra.mxu0 0.0
        %1127 = vmatprep.subr.mxu0 0.0
        %1128 = vmatpush1.xpose.msra.mxu0 0.0
        %1129 = vmatprep.mubr.f32.mxu0 0.0
        %1130 = vmatmul.mubr.f32.gmra.mrb[0].mxu0 %v1057
        %v1131 = vpop.f32.mrb[0].mxu0
        %v1132 = vadd.f32 0.0, %v1131
        %v1133 = vpop.f32.mrb[0].mxu0
        %1134 = vdwg.mxu0
        %vm1135 = vcmask 195584
        %v1136 = vsel %vm1135, %v898, -inf
        %1137 = vmax.xlane.f32.xlu0 %v1136
        %v1138 = vpop.xlane.xlu0 %1137
        %v1139 = vsel %vm1135, %v976, -inf
        %1140 = vmax.xlane.f32.xlu0 %v1139
        %v1141 = vpop.xlane.xlu0 %1140
        %v1142 = vsel %vm1135, %v1054, -inf
        %1143 = vmax.xlane.f32.xlu0 %v1142
        %v1144 = vpop.xlane.xlu0 %1143
        %v1145 = vsel %vm1135, %v1132, -inf
        %1146 = vmax.xlane.f32.xlu0 %v1145
        %v1147 = vpop.xlane.xlu0 %1146
        %v1148 = vsub.f32 %v898, %v1138
        %v1149 = vsub.f32 %v976, %v1141
        %v1150 = vsub.f32 %v1054, %v1144
        %v1151 = vsub.f32 %v1132, %v1147
        %v1152 = vmul.f32 %v1148, 1.442695
        %v1153 = vpow.pop %v1152
        %v1154 = vmul.f32 %v1149, 1.442695
        %v1155 = vpow.pop %v1154
        %v1156 = vmul.f32 %v1150, 1.442695
        %v1157 = vpow.pop %v1156
        %v1158 = vmul.f32 %v1151, 1.442695
        %v1159 = vpow.pop %v1158
        %v1160 = vsel %vm1135, %v1153, 0.0
        %1161 = vadd.xlane.f32.xlu0 %v1160
        %v1162 = vpop.xlane.xlu0 %1161
        %v1163 = vsel %vm1135, %v1155, 0.0
        %1164 = vadd.xlane.f32.xlu0 %v1163
        %v1165 = vpop.xlane.xlu0 %1164
        %v1166 = vsel %vm1135, %v1157, 0.0
        %1167 = vadd.xlane.f32.xlu0 %v1166
        %v1168 = vpop.xlane.xlu0 %1167
        %v1169 = vsel %vm1135, %v1159, 0.0
        %1170 = vadd.xlane.f32.xlu0 %v1169
        %v1171 = vpop.xlane.xlu0 %1170
        %v1172 = vrcp.pop %v1162
        %v1173 = vrcp.pop %v1165
        %v1174 = vrcp.pop %v1168
        %v1175 = vrcp.pop %v1171
        %v1176 = vmul.f32 %v1153, %v1172
        %v1177 = vmul.f32 %v1155, %v1173
        %v1178 = vmul.f32 %v1157, %v1174
        %v1179 = vmul.f32 %v1159, %v1175
        %v1181 = vsel %vm1135, %v1176, 0
        %1183 = vmatprep.subr.mxu0 0.0
        %1184 = vmatpush1.msra.mxu0 %v751
        %1185 = vmatprep.subr.mxu0 0.0
        %1186 = vmatpush1.msra.mxu0 %v756
        %1187 = vmatprep.subr.mxu0 0.0
        %1188 = vmatpush1.msra.mxu0 %v761
        %1189 = vmatprep.subr.mxu0 0.0
        %1190 = vmatpush1.msra.mxu0 0.0
        %1191 = vmatprep.subr.mxu0 0.0
        %1192 = vmatpush1.msra.mxu0 0.0
        %1193 = vmatprep.subr.mxu0 0.0
        %1194 = vmatpush1.msra.mxu0 0.0
        %1195 = vmatprep.subr.mxu0 0.0
        %1196 = vmatpush1.msra.mxu0 0.0
        %1197 = vmatprep.subr.mxu0 0.0
        %1198 = vmatpush1.msra.mxu0 0.0
        %1199 = vmatprep.subr.mxu0 0.0
        %1200 = vmatpush1.msra.mxu0 0.0
        %1201 = vmatprep.subr.mxu0 0.0
        %1202 = vmatpush1.msra.mxu0 0.0
        %1203 = vmatprep.subr.mxu0 0.0
        %1204 = vmatpush1.msra.mxu0 0.0
        %1205 = vmatprep.subr.mxu0 0.0
        %1206 = vmatpush1.msra.mxu0 0.0
        %1207 = vmatprep.subr.mxu0 0.0
        %1208 = vmatpush1.msra.mxu0 0.0
        %1209 = vmatprep.subr.mxu0 0.0
        %1210 = vmatpush1.msra.mxu0 0.0
        %1211 = vmatprep.subr.mxu0 0.0
        %1212 = vmatpush1.msra.mxu0 0.0
        %1213 = vmatprep.subr.mxu0 0.0
        %1214 = vmatpush1.msra.mxu0 0.0
        %1215 = vmatprep.subr.mxu0 0.0
        %1216 = vmatpush1.msra.mxu0 0.0
        %1217 = vmatprep.subr.mxu0 0.0
        %1218 = vmatpush1.msra.mxu0 0.0
        %1219 = vmatprep.subr.mxu0 0.0
        %1220 = vmatpush1.msra.mxu0 0.0
        %1221 = vmatprep.subr.mxu0 0.0
        %1222 = vmatpush1.msra.mxu0 0.0
        %1223 = vmatprep.subr.mxu0 0.0
        %1224 = vmatpush1.msra.mxu0 0.0
        %1225 = vmatprep.subr.mxu0 0.0
        %1226 = vmatpush1.msra.mxu0 0.0
        %1227 = vmatprep.subr.mxu0 0.0
        %1228 = vmatpush1.msra.mxu0 0.0
        %1229 = vmatprep.subr.mxu0 0.0
        %1230 = vmatpush1.msra.mxu0 0.0
        %1231 = vmatprep.subr.mxu0 0.0
        %1232 = vmatpush1.msra.mxu0 0.0
        %1233 = vmatprep.subr.mxu0 0.0
        %1234 = vmatpush1.msra.mxu0 0.0
        %1235 = vmatprep.subr.mxu0 0.0
        %1236 = vmatpush1.msra.mxu0 0.0
        %1237 = vmatprep.subr.mxu0 0.0
        %1238 = vmatpush1.msra.mxu0 0.0
        %1239 = vmatprep.subr.mxu0 0.0
        %1240 = vmatpush1.msra.mxu0 0.0
        %1241 = vmatprep.subr.mxu0 0.0
        %1242 = vmatpush1.msra.mxu0 0.0
        %1243 = vmatprep.subr.mxu0 0.0
        %1244 = vmatpush1.msra.mxu0 0.0
        %1245 = vmatprep.subr.mxu0 0.0
        %1246 = vmatpush1.msra.mxu0 0.0
        %1247 = vmatprep.mubr.f32.mxu0 0.0
        %1248 = vmatmul.mubr.f32.gmra.mrb[0].mxu0 %v1181
        %v1249 = vpop.f32.mrb[0].mxu0
        %v1250 = vadd.f32 0.0, %v1249
        %v1251 = vpop.f32.mrb[0].mxu0
        %1252 = vdwg.mxu0
        %v1254 = vsel %vm1135, %v1177, 0
        %1256 = vmatprep.subr.mxu0 0.0
        %1257 = vmatpush1.msra.mxu0 %v796
        %1258 = vmatprep.subr.mxu0 0.0
        %1259 = vmatpush1.msra.mxu0 %v798
        %1260 = vmatprep.subr.mxu0 0.0
        %1261 = vmatpush1.msra.mxu0 %v800
        %1262 = vmatprep.subr.mxu0 0.0
        %1263 = vmatpush1.msra.mxu0 0.0
        %1264 = vmatprep.subr.mxu0 0.0
        %1265 = vmatpush1.msra.mxu0 0.0
        %1266 = vmatprep.subr.mxu0 0.0
        %1267 = vmatpush1.msra.mxu0 0.0
        %1268 = vmatprep.subr.mxu0 0.0
        %1269 = vmatpush1.msra.mxu0 0.0
        %1270 = vmatprep.subr.mxu0 0.0
        %1271 = vmatpush1.msra.mxu0 0.0
        %1272 = vmatprep.subr.mxu0 0.0
        %1273 = vmatpush1.msra.mxu0 0.0
        %1274 = vmatprep.subr.mxu0 0.0
        %1275 = vmatpush1.msra.mxu0 0.0
        %1276 = vmatprep.subr.mxu0 0.0
        %1277 = vmatpush1.msra.mxu0 0.0
        %1278 = vmatprep.subr.mxu0 0.0
        %1279 = vmatpush1.msra.mxu0 0.0
        %1280 = vmatprep.subr.mxu0 0.0
        %1281 = vmatpush1.msra.mxu0 0.0
        %1282 = vmatprep.subr.mxu0 0.0
        %1283 = vmatpush1.msra.mxu0 0.0
        %1284 = vmatprep.subr.mxu0 0.0
        %1285 = vmatpush1.msra.mxu0 0.0
        %1286 = vmatprep.subr.mxu0 0.0
        %1287 = vmatpush1.msra.mxu0 0.0
        %1288 = vmatprep.subr.mxu0 0.0
        %1289 = vmatpush1.msra.mxu0 0.0
        %1290 = vmatprep.subr.mxu0 0.0
        %1291 = vmatpush1.msra.mxu0 0.0
        %1292 = vmatprep.subr.mxu0 0.0
        %1293 = vmatpush1.msra.mxu0 0.0
        %1294 = vmatprep.subr.mxu0 0.0
        %1295 = vmatpush1.msra.mxu0 0.0
        %1296 = vmatprep.subr.mxu0 0.0
        %1297 = vmatpush1.msra.mxu0 0.0
        %1298 = vmatprep.subr.mxu0 0.0
        %1299 = vmatpush1.msra.mxu0 0.0
        %1300 = vmatprep.subr.mxu0 0.0
        %1301 = vmatpush1.msra.mxu0 0.0
        %1302 = vmatprep.subr.mxu0 0.0
        %1303 = vmatpush1.msra.mxu0 0.0
        %1304 = vmatprep.subr.mxu0 0.0
        %1305 = vmatpush1.msra.mxu0 0.0
        %1306 = vmatprep.subr.mxu0 0.0
        %1307 = vmatpush1.msra.mxu0 0.0
        %1308 = vmatprep.subr.mxu0 0.0
        %1309 = vmatpush1.msra.mxu0 0.0
        %1310 = vmatprep.subr.mxu0 0.0
        %1311 = vmatpush1.msra.mxu0 0.0
        %1312 = vmatprep.subr.mxu0 0.0
        %1313 = vmatpush1.msra.mxu0 0.0
        %1314 = vmatprep.subr.mxu0 0.0
        %1315 = vmatpush1.msra.mxu0 0.0
        %1316 = vmatprep.subr.mxu0 0.0
        %1317 = vmatpush1.msra.mxu0 0.0
        %1318 = vmatprep.subr.mxu0 0.0
        %1319 = vmatpush1.msra.mxu0 0.0
        %1320 = vmatprep.mubr.f32.mxu0 0.0
        %1321 = vmatmul.mubr.f32.gmra.mrb[0].mxu0 %v1254
        %v1322 = vpop.f32.mrb[0].mxu0
        %v1323 = vadd.f32 0.0, %v1322
        %v1324 = vpop.f32.mrb[0].mxu0
        %1325 = vdwg.mxu0
        %v1327 = vsel %vm1135, %v1178, 0
        %1329 = vmatprep.subr.mxu0 0.0
        %1330 = vmatpush1.msra.mxu0 %v805
        %1331 = vmatprep.subr.mxu0 0.0
        %1332 = vmatpush1.msra.mxu0 %v807
        %1333 = vmatprep.subr.mxu0 0.0
        %1334 = vmatpush1.msra.mxu0 %v809
        %1335 = vmatprep.subr.mxu0 0.0
        %1336 = vmatpush1.msra.mxu0 0.0
        %1337 = vmatprep.subr.mxu0 0.0
        %1338 = vmatpush1.msra.mxu0 0.0
        %1339 = vmatprep.subr.mxu0 0.0
        %1340 = vmatpush1.msra.mxu0 0.0
        %1341 = vmatprep.subr.mxu0 0.0
        %1342 = vmatpush1.msra.mxu0 0.0
        %1343 = vmatprep.subr.mxu0 0.0
        %1344 = vmatpush1.msra.mxu0 0.0
        %1345 = vmatprep.subr.mxu0 0.0
        %1346 = vmatpush1.msra.mxu0 0.0
        %1347 = vmatprep.subr.mxu0 0.0
        %1348 = vmatpush1.msra.mxu0 0.0
        %1349 = vmatprep.subr.mxu0 0.0
        %1350 = vmatpush1.msra.mxu0 0.0
        %1351 = vmatprep.subr.mxu0 0.0
        %1352 = vmatpush1.msra.mxu0 0.0
        %1353 = vmatprep.subr.mxu0 0.0
        %1354 = vmatpush1.msra.mxu0 0.0
        %1355 = vmatprep.subr.mxu0 0.0
        %1356 = vmatpush1.msra.mxu0 0.0
        %1357 = vmatprep.subr.mxu0 0.0
        %1358 = vmatpush1.msra.mxu0 0.0
        %1359 = vmatprep.subr.mxu0 0.0
        %1360 = vmatpush1.msra.mxu0 0.0
        %1361 = vmatprep.subr.mxu0 0.0
        %1362 = vmatpush1.msra.mxu0 0.0
        %1363 = vmatprep.subr.mxu0 0.0
        %1364 = vmatpush1.msra.mxu0 0.0
        %1365 = vmatprep.subr.mxu0 0.0
        %1366 = vmatpush1.msra.mxu0 0.0
        %1367 = vmatprep.subr.mxu0 0.0
        %1368 = vmatpush1.msra.mxu0 0.0
        %1369 = vmatprep.subr.mxu0 0.0
        %1370 = vmatpush1.msra.mxu0 0.0
        %1371 = vmatprep.subr.mxu0 0.0
        %1372 = vmatpush1.msra.mxu0 0.0
        %1373 = vmatprep.subr.mxu0 0.0
        %1374 = vmatpush1.msra.mxu0 0.0
        %1375 = vmatprep.subr.mxu0 0.0
        %1376 = vmatpush1.msra.mxu0 0.0
        %1377 = vmatprep.subr.mxu0 0.0
        %1378 = vmatpush1.msra.mxu0 0.0
        %1379 = vmatprep.subr.mxu0 0.0
        %1380 = vmatpush1.msra.mxu0 0.0
        %1381 = vmatprep.subr.mxu0 0.0
        %1382 = vmatpush1.msra.mxu0 0.0
        %1383 = vmatprep.subr.mxu0 0.0
        %1384 = vmatpush1.msra.mxu0 0.0
        %1385 = vmatprep.subr.mxu0 0.0
        %1386 = vmatpush1.msra.mxu0 0.0
        %1387 = vmatprep.subr.mxu0 0.0
        %1388 = vmatpush1.msra.mxu0 0.0
        %1389 = vmatprep.subr.mxu0 0.0
        %1390 = vmatpush1.msra.mxu0 0.0
        %1391 = vmatprep.subr.mxu0 0.0
        %1392 = vmatpush1.msra.mxu0 0.0
        %1393 = vmatprep.mubr.f32.mxu0 0.0
        %1394 = vmatmul.mubr.f32.gmra.mrb[0].mxu0 %v1327
        %v1395 = vpop.f32.mrb[0].mxu0
        %v1396 = vadd.f32 0.0, %v1395
        %v1397 = vpop.f32.mrb[0].mxu0
        %1398 = vdwg.mxu0
        %v1400 = vsel %vm1135, %v1179, 0
        %1402 = vmatprep.subr.mxu0 0.0
        %1403 = vmatpush1.msra.mxu0 %v814
        %1404 = vmatprep.subr.mxu0 0.0
        %1405 = vmatpush1.msra.mxu0 %v816
        %1406 = vmatprep.subr.mxu0 0.0
        %1407 = vmatpush1.msra.mxu0 %v818
        %1408 = vmatprep.subr.mxu0 0.0
        %1409 = vmatpush1.msra.mxu0 0.0
        %1410 = vmatprep.subr.mxu0 0.0
        %1411 = vmatpush1.msra.mxu0 0.0
        %1412 = vmatprep.subr.mxu0 0.0
        %1413 = vmatpush1.msra.mxu0 0.0
        %1414 = vmatprep.subr.mxu0 0.0
        %1415 = vmatpush1.msra.mxu0 0.0
        %1416 = vmatprep.subr.mxu0 0.0
        %1417 = vmatpush1.msra.mxu0 0.0
        %1418 = vmatprep.subr.mxu0 0.0
        %1419 = vmatpush1.msra.mxu0 0.0
        %1420 = vmatprep.subr.mxu0 0.0
        %1421 = vmatpush1.msra.mxu0 0.0
        %1422 = vmatprep.subr.mxu0 0.0
        %1423 = vmatpush1.msra.mxu0 0.0
        %1424 = vmatprep.subr.mxu0 0.0
        %1425 = vmatpush1.msra.mxu0 0.0
        %1426 = vmatprep.subr.mxu0 0.0
        %1427 = vmatpush1.msra.mxu0 0.0
        %1428 = vmatprep.subr.mxu0 0.0
        %1429 = vmatpush1.msra.mxu0 0.0
        %1430 = vmatprep.subr.mxu0 0.0
        %1431 = vmatpush1.msra.mxu0 0.0
        %1432 = vmatprep.subr.mxu0 0.0
        %1433 = vmatpush1.msra.mxu0 0.0
        %1434 = vmatprep.subr.mxu0 0.0
        %1435 = vmatpush1.msra.mxu0 0.0
        %1436 = vmatprep.subr.mxu0 0.0
        %1437 = vmatpush1.msra.mxu0 0.0
        %1438 = vmatprep.subr.mxu0 0.0
        %1439 = vmatpush1.msra.mxu0 0.0
        %1440 = vmatprep.subr.mxu0 0.0
        %1441 = vmatpush1.msra.mxu0 0.0
        %1442 = vmatprep.subr.mxu0 0.0
        %1443 = vmatpush1.msra.mxu0 0.0
        %1444 = vmatprep.subr.mxu0 0.0
        %1445 = vmatpush1.msra.mxu0 0.0
        %1446 = vmatprep.subr.mxu0 0.0
        %1447 = vmatpush1.msra.mxu0 0.0
        %1448 = vmatprep.subr.mxu0 0.0
        %1449 = vmatpush1.msra.mxu0 0.0
        %1450 = vmatprep.subr.mxu0 0.0
        %1451 = vmatpush1.msra.mxu0 0.0
        %1452 = vmatprep.subr.mxu0 0.0
        %1453 = vmatpush1.msra.mxu0 0.0
        %1454 = vmatprep.subr.mxu0 0.0
        %1455 = vmatpush1.msra.mxu0 0.0
        %1456 = vmatprep.subr.mxu0 0.0
        %1457 = vmatpush1.msra.mxu0 0.0
        %1458 = vmatprep.subr.mxu0 0.0
        %1459 = vmatpush1.msra.mxu0 0.0
        %1460 = vmatprep.subr.mxu0 0.0
        %1461 = vmatpush1.msra.mxu0 0.0
        %1462 = vmatprep.subr.mxu0 0.0
        %1463 = vmatpush1.msra.mxu0 0.0
        %1464 = vmatprep.subr.mxu0 0.0
        %1465 = vmatpush1.msra.mxu0 0.0
        %1466 = vmatprep.mubr.f32.mxu0 0.0
        %1467 = vmatmul.mubr.f32.gmra.mrb[0].mxu0 %v1400
        %v1468 = vpop.f32.mrb[0].mxu0
        %v1469 = vadd.f32 0.0, %v1468
        %v1470 = vpop.f32.mrb[0].mxu0
        %1471 = vdwg.mxu0
        %1473 = vrot.lane.b32.xlu0 %v1323, 16
        %v1474 = vpop.permute.xlu0 %1473
        %1477 = vrot.lane.b32.xlu0 %v1396, 32
        %v1478 = vpop.permute.xlu0 %1477
        %1481 = vrot.lane.b32.xlu0 %v1469, 48
        %v1482 = vpop.permute.xlu0 %1481
        %v1484 = vsel %vm822, %v1250, %v1474
        %v1485 = vsel %vm426, %v1484, %v1478
        %vm1486 = vcmask 392192
        %v1487 = vsel %vm1486, %v1485, %v1482
        %v1488 = vld [vmem:[%s8] sm:$0xff]
        %v1489 = vld [vmem:[%s8 + $0x8] sm:$0xff]
        %v1490 = vld [vmem:[%s8 + $0x10] sm:$0xff]
        %v1491 = vld [vmem:[%s8 + $0x18] sm:$0xff]
        %v1492 = vld [vmem:[%s8 + $0x20] sm:$0xff]
        %v1493 = vld [vmem:[%s8 + $0x28] sm:$0xff]
        %v1494 = vld [vmem:[%s8 + $0x30] sm:$0xff]
        %v1495 = vld [vmem:[%s8 + $0x38] sm:$0xff]
        %vm1496 = vcmask 523264
        %v1498 = vsel %vm1496, %v1487, 0
        %1500 = vmatprep.subr.mxu0 0.0
        %1501 = vmatpush1.msra.mxu0 %v1488
        %1502 = vmatprep.subr.mxu0 0.0
        %1503 = vmatpush1.msra.mxu0 %v1489
        %1504 = vmatprep.subr.mxu0 0.0
        %1505 = vmatpush1.msra.mxu0 %v1490
        %1506 = vmatprep.subr.mxu0 0.0
        %1507 = vmatpush1.msra.mxu0 %v1491
        %1508 = vmatprep.subr.mxu0 0.0
        %1509 = vmatpush1.msra.mxu0 %v1492
        %1510 = vmatprep.subr.mxu0 0.0
        %1511 = vmatpush1.msra.mxu0 %v1493
        %1512 = vmatprep.subr.mxu0 0.0
        %1513 = vmatpush1.msra.mxu0 %v1494
        %1514 = vmatprep.subr.mxu0 0.0
        %1515 = vmatpush1.msra.mxu0 %v1495
        %1516 = vmatprep.subr.mxu0 0.0
        %1517 = vmatpush1.msra.mxu0 0.0
        %1518 = vmatprep.subr.mxu0 0.0
        %1519 = vmatpush1.msra.mxu0 0.0
        %1520 = vmatprep.subr.mxu0 0.0
        %1521 = vmatpush1.msra.mxu0 0.0
        %1522 = vmatprep.subr.mxu0 0.0
        %1523 = vmatpush1.msra.mxu0 0.0
        %1524 = vmatprep.subr.mxu0 0.0
        %1525 = vmatpush1.msra.mxu0 0.0
        %1526 = vmatprep.subr.mxu0 0.0
        %1527 = vmatpush1.msra.mxu0 0.0
        %1528 = vmatprep.subr.mxu0 0.0
        %1529 = vmatpush1.msra.mxu0 0.0
        %1530 = vmatprep.subr.mxu0 0.0
        %1531 = vmatpush1.msra.mxu0 0.0
        %1532 = vmatprep.subr.mxu0 0.0
        %1533 = vmatpush1.msra.mxu0 0.0
        %1534 = vmatprep.subr.mxu0 0.0
        %1535 = vmatpush1.msra.mxu0 0.0
        %1536 = vmatprep.subr.mxu0 0.0
        %1537 = vmatpush1.msra.mxu0 0.0
        %1538 = vmatprep.subr.mxu0 0.0
        %1539 = vmatpush1.msra.mxu0 0.0
        %1540 = vmatprep.subr.mxu0 0.0
        %1541 = vmatpush1.msra.mxu0 0.0
        %1542 = vmatprep.subr.mxu0 0.0
        %1543 = vmatpush1.msra.mxu0 0.0
        %1544 = vmatprep.subr.mxu0 0.0
        %1545 = vmatpush1.msra.mxu0 0.0
        %1546 = vmatprep.subr.mxu0 0.0
        %1547 = vmatpush1.msra.mxu0 0.0
        %1548 = vmatprep.subr.mxu0 0.0
        %1549 = vmatpush1.msra.mxu0 0.0
        %1550 = vmatprep.subr.mxu0 0.0
        %1551 = vmatpush1.msra.mxu0 0.0
        %1552 = vmatprep.subr.mxu0 0.0
        %1553 = vmatpush1.msra.mxu0 0.0
        %1554 = vmatprep.subr.mxu0 0.0
        %1555 = vmatpush1.msra.mxu0 0.0
        %1556 = vmatprep.subr.mxu0 0.0
        %1557 = vmatpush1.msra.mxu0 0.0
        %1558 = vmatprep.subr.mxu0 0.0
        %1559 = vmatpush1.msra.mxu0 0.0
        %1560 = vmatprep.subr.mxu0 0.0
        %1561 = vmatpush1.msra.mxu0 0.0
        %1562 = vmatprep.subr.mxu0 0.0
        %1563 = vmatpush1.msra.mxu0 0.0
        %1564 = vmatprep.mubr.f32.mxu0 0.0
        %1565 = vmatmul.mubr.f32.gmra.mrb[0].mxu0 %v1498
        %v1566 = vpop.f32.mrb[0].mxu0
        %v1567 = vadd.f32 0.0, %v1566
        %v1568 = vpop.f32.mrb[0].mxu0
        %1569 = vdwg.mxu0
        %v1570 = vld [vmem:[%s9] sm:$0x1]
        %v1571 = vld [vmem:[%s10] sm:$0x1]
        %v1572 = vsel %vm426, %v1567, 0.0
        %1573 = vadd.xlane.f32.xlu0 %v1572
        %v1574 = vpop.xlane.xlu0 %1573
        %v1575 = vmul.f32 %v1574, %v433
        %v1576 = vsub.f32 %v1567, %v1575
        %v1577 = vmul.f32 %v1576, %v1576
        %v1578 = vsel %vm426, %v1577, 0.0
        %1579 = vadd.xlane.f32.xlu0 %v1578
        %v1580 = vpop.xlane.xlu0 %1579
        %v1581 = vmul.f32 %v1580, %v433
        %v1582 = vadd.f32 %v1581, 1e-05
        %v1583 = vrsqrt.pop %v1582
        %v1584 = vmul.f32 %v1576, %v1583
        %v1586 = vlaneseq
        %v1587 = vshrl.u32 %v1586, 7
        %v1588 = vsub.s32 0, %v1587
        %v1589 = vrot.slane %v1570, %v1588
        %v1591 = vmul.f32 %v1584, %v1589
        %v1593 = vlaneseq
        %v1594 = vshrl.u32 %v1593, 7
        %v1595 = vsub.s32 0, %v1594
        %v1596 = vrot.slane %v1571, %v1595
        %v1598 = vadd.f32 %v1591, %v1596
        %1599 = vst.msk [vmem:[%s416] sm:$0xff] %vm426, %v1598
        %s1600 = sand.u32 %s277, 1
        %s1601 = scalar_lea.sflag [#allocation4], %s1600
        %s1602 = sand.u32 %s277, 1
        %s1603 = smul.addr %s1602, 8
        %s1604 = scalar_lea.vmem [#allocation5], %s1603
        // Predicated region
        $region69: #{tpu_custom_call.1} parent=63 // pred_check
          %p1605 = pneg %p287
        $region70: #{tpu_custom_call.1} parent=63 // pred_check_branch
          %1607 = sbr.rel (%p1605) target = $region72
        $region71: #{tpu_custom_call.1} parent=63 // pred_region
          %s1609 = ssub.s32 128, 128
          %1610 = vsyncadd %s1601, %s1609
          %s1611 = smul.addr %s28, 128
          %s1612 = scalar_lea.hbm %s11, %s1611
          %s1614 = sshll.u32 %s1604, 4
          %s1615 = int_to_ptr.vmem [resolvable:$true] %s1614
          %1617 = dma.vmem_to_hbm [thread:$0]  %s1615, 128, %s1612, %s1601
        $region72: #{tpu_custom_call.1} parent=63 // pred_fallthru
          _
      $region64: #{tpu_custom_call.1} parent=5 // pred_fallthru
        _
      %p1618 = scmp.le.s32.totalorder 2, %s23
      // Predicated region
      $region73: #{tpu_custom_call.1} parent=5 // pred_check
        %p1619 = pneg %p1618
      $region74: #{tpu_custom_call.1} parent=5 // pred_check_branch
        %1621 = sbr.rel (%p1619) target = $region76
      $region75: #{tpu_custom_call.1} parent=5 // pred_region
        %s1622 = ssub.s32 %s23, 2
        // Predicated region
        $region77: #{tpu_custom_call.1} parent=75 // pred_check
          %p1623 = pneg %p293
        $region78: #{tpu_custom_call.1} parent=75 // pred_check_branch
          %1625 = sbr.rel (%p1623) target = $region80
        $region79: #{tpu_custom_call.1} parent=75 // pred_region
          %s1626 = sand.u32 %s278, 1
          %s1627 = scalar_lea.sflag [#allocation4], %s1626
          %s1628 = sand.u32 %s278, 1
          %s1629 = smul.addr %s1628, 8
          %s1630 = scalar_lea.vmem [#allocation5], %s1629
          %1631 = dma.done %s1627, 128
        $region80: #{tpu_custom_call.1} parent=75 // pred_fallthru
          _
      $region76: #{tpu_custom_call.1} parent=5 // pred_fallthru
        _
    $region6: #{tpu_custom_call.1} parent=1 // loop_footer
      %s27 = sadd.s32 1, %s23
    $region7: #{tpu_custom_call.1} parent=1 // loop_footer_branch
      %22 = sbr.rel target = $region3
    $region8: #{tpu_custom_call.1} parent=1 // loop_exit
      _
    %1632 = vsyncpa [#allocation3], 1
    %s1633 = scalar_lea.sflag [#allocation3], 1
    %1634 = vsyncpa %s1633, 1
    %1635 = vsyncpa [#allocation4], 1
    %s1636 = scalar_lea.sflag [#allocation4], 1
    %1637 = vsyncpa %s1636, 1

// kernel: tpu_custom_call.1
$region0: #{tpu_custom_call.1}
  #allocation0 [shape = 'u32[]', space=smem, size = 0x4, offset = 0x4, fixed_abs, tag = 'smem constant byte address 0x4 - core index']
  #allocation1 [shape = 'u32[144,128]{1,0:T(1,128)}', space=vmem, size = 0x12000, scoped, tag = 'internal scratch']
  %s0 = inlined_call_operand.vmem [shape: f32[2,16,32], index: 0, kind: input, shape index: {}]
  %s1 = inlined_call_operand.hbm [shape: f32[2,8,32], index: 1, kind: input, shape index: {}]
  %s2 = inlined_call_operand.vmem [shape: f32[1,32], index: 2, kind: input, shape index: {}]
  %s3 = inlined_call_operand.vmem [shape: f32[1,32], index: 3, kind: input, shape index: {}]
  %s4 = inlined_call_operand.vmem [shape: f32[1,32], index: 4, kind: input, shape index: {}]
  %s5 = inlined_call_operand.vmem [shape: f32[1,32], index: 5, kind: input, shape index: {}]
  %s6 = inlined_call_operand.vmem [shape: f32[32,64], index: 6, kind: input, shape index: {}]
  %s7 = inlined_call_operand.vmem [shape: f32[32,128], index: 7, kind: input, shape index: {}]
  %s8 = inlined_call_operand.vmem [shape: f32[64,32], index: 8, kind: input, shape index: {}]
  %s9 = inlined_call_operand.vmem [shape: f32[1,32], index: 9, kind: input, shape index: {}]
  %s10 = inlined_call_operand.vmem [shape: f32[1,32], index: 10, kind: input, shape index: {}]
  %s11 = inlined_call_operand.hbm [shape: f32[2,8,32], index: 11, kind: output, shape index: {}]
  %s12 = sld [smem:[#allocation0]]
  $region81: #{tpu_custom_call.1} parent=0
    _
  %s14 = ssub.s32 1, %s12
  %s15 = scalar_select 0, %s14, %s12
  $region1: #{tpu_custom_call.1} parent=0
    #allocation2 [shape = 'u8[8192]{0}', space=vmem, size = 0x2000, scoped, tag = 'input window, operand 1']
    #allocation3 [shape = 's32[2]{0}', space=sflag, size = 0x8, scoped, tag = 'scoped memory for tpu_custom_call.1']
    #allocation4 [shape = 's32[2]{0}', space=sflag, size = 0x8, scoped, tag = 'scoped memory for tpu_custom_call.1']
    #allocation5 [shape = 'u8[8192]{0}', space=vmem, size = 0x2000, scoped, tag = 'output window, operand 0']
    %16 = vsyncpa [#allocation3], 0
    %s17 = scalar_lea.sflag [#allocation3], 1
    %18 = vsyncpa %s17, 0
    %19 = vsyncpa [#allocation4], 0
    %s20 = scalar_lea.sflag [#allocation4], 1
    %21 = vsyncpa %s20, 0
    loop: start=0, step=1, limit=4
    $region2: #{tpu_custom_call.1} parent=1 // loop_pre_header
      _
    $region3: #{tpu_custom_call.1} parent=1 // loop_header
      %s23 = sphi 0, %s27
      %p24 = scmp.ge.s32.totalorder %s23, 4
      %s33 = sphi 0, %s35
      %s36 = sphi 0, %s33
      %s37 = sphi 0, %s36
      %s53 = sphi 0, %s37
      %s59 = sphi 0, %s61
      %s62 = sphi 0, %s59
      %s63 = sphi 0, %s62
      %s79 = sphi 0, %s63
      %s83 = sphi 0, %s83
      %s85 = sphi 0, %s83
      %s86 = sphi 0, %s85
      %s100 = sphi 0, %s86
      %s104 = sphi 0, %s104
      %s106 = sphi 0, %s104
      %s107 = sphi 0, %s106
      %s121 = sphi 0, %s107
      %s125 = sphi 0, %s125
      %s127 = sphi 0, %s125
      %s128 = sphi 0, %s127
      %s142 = sphi 0, %s128
      %s146 = sphi 0, %s146
      %s148 = sphi 0, %s146
      %s149 = sphi 0, %s148
      %s163 = sphi 0, %s149
      %s167 = sphi 0, %s167
      %s169 = sphi 0, %s167
      %s170 = sphi 0, %s169
      %s184 = sphi 0, %s170
      %s188 = sphi 0, %s188
      %s190 = sphi 0, %s188
      %s191 = sphi 0, %s190
      %s205 = sphi 0, %s191
      %s209 = sphi 0, %s209
      %s211 = sphi 0, %s209
      %s212 = sphi 0, %s211
      %s226 = sphi 0, %s212
      %s230 = sphi 0, %s230
      %s232 = sphi 0, %s230
      %s233 = sphi 0, %s232
      %s247 = sphi 0, %s233
      %s251 = sphi 0, %s251
      %s253 = sphi 0, %s251
      %s254 = sphi 0, %s253
      %s268 = sphi 0, %s254
      %s274 = sphi 0, %s276
      %s277 = sphi 0, %s274
      %s278 = sphi 0, %s277
      %s294 = sphi 0, %s278
    $region4: #{tpu_custom_call.1} parent=1 // loop_header_branch
      %26 = sbr.rel (%p24) target = $region8
    $region5: #{tpu_custom_call.1} parent=1 // loop_body
      %s28 = ssub.s32 %s23, 1
      %s29 = ssub.s32 %s23, 2
      %s30 = sadd.s32 %s23, 1
      %s31 = ssub.s32 %s23, %s30
      %p32 = scmp.eq.s32.totalorder %s31, 0
      %s34 = sadd.s32 %s33, 1
      %s35 = scalar_select %p32, %s33, %s34
      %p38 = pneg %p32
      %p39 = scmp.eq.s32.totalorder %s23, 1
      %p40 = por %p38, %p39
      %p41 = scmp.ne.s32.totalorder %s33, %s36
      %p42 = scmp.eq.s32.totalorder %s23, 0
      %p43 = por %p41, %p42
      %p44 = scmp.ne.s32.totalorder %s33, %s36
      %p45 = scmp.eq.s32.totalorder %s28, 1
      %p46 = por %p44, %p45
      %p47 = scmp.ne.s32.totalorder %s36, %s37
      %p48 = scmp.eq.s32.totalorder %s28, 0
      %p49 = por %p47, %p48
      %p50 = scmp.ne.s32.totalorder %s36, %s37
      %p51 = scmp.eq.s32.totalorder %s29, 1
      %p52 = por %p50, %p51
      %p54 = scmp.ne.s32.totalorder %s37, %s53
      %p55 = scmp.eq.s32.totalorder %s29, 0
      %p56 = por %p54, %p55
      %s57 = ssub.s32 %s23, %s30
      %p58 = scmp.eq.s32.totalorder %s57, 0
      %s60 = sadd.s32 %s59, 1
      %s61 = scalar_select %p58, %s59, %s60
      %p64 = pneg %p58
      %p65 = scmp.eq.s32.totalorder %s23, 1
      %p66 = por %p64, %p65
      %p67 = scmp.ne.s32.totalorder %s59, %s62
      %p68 = scmp.eq.s32.totalorder %s23, 0
      %p69 = por %p67, %p68
      %p70 = scmp.ne.s32.totalorder %s59, %s62
      %p71 = scmp.eq.s32.totalorder %s28, 1
      %p72 = por %p70, %p71
      %p73 = scmp.ne.s32.totalorder %s62, %s63
      %p74 = scmp.eq.s32.totalorder %s28, 0
      %p75 = por %p73, %p74
      %p76 = scmp.ne.s32.totalorder %s62, %s63
      %p77 = scmp.eq.s32.totalorder %s29, 1
      %p78 = por %p76, %p77
      %p80 = scmp.ne.s32.totalorder %s63, %s79
      %p81 = scmp.eq.s32.totalorder %s29, 0
      %p82 = por %p80, %p81
      %s84 = sadd.s32 %s83, 1
      %p87 = scmp.eq.s32.totalorder %s23, 1
      %p88 = scmp.ne.s32.totalorder %s83, %s85
      %p89 = scmp.eq.s32.totalorder %s23, 0
      %p90 = por %p88, %p89
      %p91 = scmp.ne.s32.totalorder %s83, %s85
      %p92 = scmp.eq.s32.totalorder %s28, 1
      %p93 = por %p91, %p92
      %p94 = scmp.ne.s32.totalorder %s85, %s86
      %p95 = scmp.eq.s32.totalorder %s28, 0
      %p96 = por %p94, %p95
      %p97 = scmp.ne.s32.totalorder %s85, %s86
      %p98 = scmp.eq.s32.totalorder %s29, 1
      %p99 = por %p97, %p98
      %p101 = scmp.ne.s32.totalorder %s86, %s100
      %p102 = scmp.eq.s32.totalorder %s29, 0
      %p103 = por %p101, %p102
      %s105 = sadd.s32 %s104, 1
      %p108 = scmp.eq.s32.totalorder %s23, 1
      %p109 = scmp.ne.s32.totalorder %s104, %s106
      %p110 = scmp.eq.s32.totalorder %s23, 0
      %p111 = por %p109, %p110
      %p112 = scmp.ne.s32.totalorder %s104, %s106
      %p113 = scmp.eq.s32.totalorder %s28, 1
      %p114 = por %p112, %p113
      %p115 = scmp.ne.s32.totalorder %s106, %s107
      %p116 = scmp.eq.s32.totalorder %s28, 0
      %p117 = por %p115, %p116
      %p118 = scmp.ne.s32.totalorder %s106, %s107
      %p119 = scmp.eq.s32.totalorder %s29, 1
      %p120 = por %p118, %p119
      %p122 = scmp.ne.s32.totalorder %s107, %s121
      %p123 = scmp.eq.s32.totalorder %s29, 0
      %p124 = por %p122, %p123
      %s126 = sadd.s32 %s125, 1
      %p129 = scmp.eq.s32.totalorder %s23, 1
      %p130 = scmp.ne.s32.totalorder %s125, %s127
      %p131 = scmp.eq.s32.totalorder %s23, 0
      %p132 = por %p130, %p131
      %p133 = scmp.ne.s32.totalorder %s125, %s127
      %p134 = scmp.eq.s32.totalorder %s28, 1
      %p135 = por %p133, %p134
      %p136 = scmp.ne.s32.totalorder %s127, %s128
      %p137 = scmp.eq.s32.totalorder %s28, 0
      %p138 = por %p136, %p137
      %p139 = scmp.ne.s32.totalorder %s127, %s128
      %p140 = scmp.eq.s32.totalorder %s29, 1
      %p141 = por %p139, %p140
      %p143 = scmp.ne.s32.totalorder %s128, %s142
      %p144 = scmp.eq.s32.totalorder %s29, 0
      %p145 = por %p143, %p144
      %s147 = sadd.s32 %s146, 1
      %p150 = scmp.eq.s32.totalorder %s23, 1
      %p151 = scmp.ne.s32.totalorder %s146, %s148
      %p152 = scmp.eq.s32.totalorder %s23, 0
      %p153 = por %p151, %p152
      %p154 = scmp.ne.s32.totalorder %s146, %s148
      %p155 = scmp.eq.s32.totalorder %s28, 1
      %p156 = por %p154, %p155
      %p157 = scmp.ne.s32.totalorder %s148, %s149
      %p158 = scmp.eq.s32.totalorder %s28, 0
      %p159 = por %p157, %p158
      %p160 = scmp.ne.s32.totalorder %s148, %s149
      %p161 = scmp.eq.s32.totalorder %s29, 1
      %p162 = por %p160, %p161
      %p164 = scmp.ne.s32.totalorder %s149, %s163
      %p165 = scmp.eq.s32.totalorder %s29, 0
      %p166 = por %p164, %p165
      %s168 = sadd.s32 %s167, 1
      %p171 = scmp.eq.s32.totalorder %s23, 1
      %p172 = scmp.ne.s32.totalorder %s167, %s169
      %p173 = scmp.eq.s32.totalorder %s23, 0
      %p174 = por %p172, %p173
      %p175 = scmp.ne.s32.totalorder %s167, %s169
      %p176 = scmp.eq.s32.totalorder %s28, 1
      %p177 = por %p175, %p176
      %p178 = scmp.ne.s32.totalorder %s169, %s170
      %p179 = scmp.eq.s32.totalorder %s28, 0
      %p180 = por %p178, %p179
      %p181 = scmp.ne.s32.totalorder %s169, %s170
      %p182 = scmp.eq.s32.totalorder %s29, 1
      %p183 = por %p181, %p182
      %p185 = scmp.ne.s32.totalorder %s170, %s184
      %p186 = scmp.eq.s32.totalorder %s29, 0
      %p187 = por %p185, %p186
      %s189 = sadd.s32 %s188, 1
      %p192 = scmp.eq.s32.totalorder %s23, 1
      %p193 = scmp.ne.s32.totalorder %s188, %s190
      %p194 = scmp.eq.s32.totalorder %s23, 0
      %p195 = por %p193, %p194
      %p196 = scmp.ne.s32.totalorder %s188, %s190
      %p197 = scmp.eq.s32.totalorder %s28, 1
      %p198 = por %p196, %p197
      %p199 = scmp.ne.s32.totalorder %s190, %s191
      %p200 = scmp.eq.s32.totalorder %s28, 0
      %p201 = por %p199, %p200
      %p202 = scmp.ne.s32.totalorder %s190, %s191
      %p203 = scmp.eq.s32.totalorder %s29, 1
      %p204 = por %p202, %p203
      %p206 = scmp.ne.s32.totalorder %s191, %s205
      %p207 = scmp.eq.s32.totalorder %s29, 0
      %p208 = por %p206, %p207
      %s210 = sadd.s32 %s209, 1
      %p213 = scmp.eq.s32.totalorder %s23, 1
      %p214 = scmp.ne.s32.totalorder %s209, %s211
      %p215 = scmp.eq.s32.totalorder %s23, 0
      %p216 = por %p214, %p215
      %p217 = scmp.ne.s32.totalorder %s209, %s211
      %p218 = scmp.eq.s32.totalorder %s28, 1
      %p219 = por %p217, %p218
      %p220 = scmp.ne.s32.totalorder %s211, %s212
      %p221 = scmp.eq.s32.totalorder %s28, 0
      %p222 = por %p220, %p221
      %p223 = scmp.ne.s32.totalorder %s211, %s212
      %p224 = scmp.eq.s32.totalorder %s29, 1
      %p225 = por %p223, %p224
      %p227 = scmp.ne.s32.totalorder %s212, %s226
      %p228 = scmp.eq.s32.totalorder %s29, 0
      %p229 = por %p227, %p228
      %s231 = sadd.s32 %s230, 1
      %p234 = scmp.eq.s32.totalorder %s23, 1
      %p235 = scmp.ne.s32.totalorder %s230, %s232
      %p236 = scmp.eq.s32.totalorder %s23, 0
      %p237 = por %p235, %p236
      %p238 = scmp.ne.s32.totalorder %s230, %s232
      %p239 = scmp.eq.s32.totalorder %s28, 1
      %p240 = por %p238, %p239
      %p241 = scmp.ne.s32.totalorder %s232, %s233
      %p242 = scmp.eq.s32.totalorder %s28, 0
      %p243 = por %p241, %p242
      %p244 = scmp.ne.s32.totalorder %s232, %s233
      %p245 = scmp.eq.s32.totalorder %s29, 1
      %p246 = por %p244, %p245
      %p248 = scmp.ne.s32.totalorder %s233, %s247
      %p249 = scmp.eq.s32.totalorder %s29, 0
      %p250 = por %p248, %p249
      %s252 = sadd.s32 %s251, 1
      %p255 = scmp.eq.s32.totalorder %s23, 1
      %p256 = scmp.ne.s32.totalorder %s251, %s253
      %p257 = scmp.eq.s32.totalorder %s23, 0
      %p258 = por %p256, %p257
      %p259 = scmp.ne.s32.totalorder %s251, %s253
      %p260 = scmp.eq.s32.totalorder %s28, 1
      %p261 = por %p259, %p260
      %p262 = scmp.ne.s32.totalorder %s253, %s254
      %p263 = scmp.eq.s32.totalorder %s28, 0
      %p264 = por %p262, %p263
      %p265 = scmp.ne.s32.totalorder %s253, %s254
      %p266 = scmp.eq.s32.totalorder %s29, 1
      %p267 = por %p265, %p266
      %p269 = scmp.ne.s32.totalorder %s254, %s268
      %p270 = scmp.eq.s32.totalorder %s29, 0
      %p271 = por %p269, %p270
      %s272 = ssub.s32 %s23, %s30
      %p273 = scmp.eq.s32.totalorder %s272, 0
      %s275 = sadd.s32 %s274, 1
      %s276 = scalar_select %p273, %s274, %s275
      %p279 = pneg %p273
      %p280 = scmp.eq.s32.totalorder %s23, 1
      %p281 = por %p279, %p280
      %p282 = scmp.ne.s32.totalorder %s274, %s277
      %p283 = scmp.eq.s32.totalorder %s23, 0
      %p284 = por %p282, %p283
      %p285 = scmp.ne.s32.totalorder %s274, %s277
      %p286 = scmp.eq.s32.totalorder %s28, 1
      %p287 = por %p285, %p286
      %p288 = scmp.ne.s32.totalorder %s277, %s278
      %p289 = scmp.eq.s32.totalorder %s28, 0
      %p290 = por %p288, %p289
      %p291 = scmp.ne.s32.totalorder %s277, %s278
      %p292 = scmp.eq.s32.totalorder %s29, 1
      %p293 = por %p291, %p292
      %p295 = scmp.ne.s32.totalorder %s278, %s294
      %p296 = scmp.eq.s32.totalorder %s29, 0
      %p297 = por %p295, %p296
      %p298 = scmp.le.s32.totalorder 1, %s23
      %p299 = scmp.lt.s32.totalorder %s23, 3
      %p300 = pnand %p298, %p299
      %p301 = pneg %p300
      // Predicated region
      $region9: #{tpu_custom_call.1} parent=5 // pred_check
        _
      $region10: #{tpu_custom_call.1} parent=5 // pred_check_branch
        %303 = sbr.rel (%p300) target = $region12
      $region11: #{tpu_custom_call.1} parent=5 // pred_region
        %s304 = ssub.s32 %s23, 1
        // Predicated region
        $region13: #{tpu_custom_call.1} parent=11 // pred_check
          %p305 = pneg %p96
        $region14: #{tpu_custom_call.1} parent=11 // pred_check_branch
          %307 = sbr.rel (%p305) target = $region16
        $region15: #{tpu_custom_call.1} parent=11 // pred_region
          _
        $region16: #{tpu_custom_call.1} parent=11 // pred_fallthru
          _
        // Predicated region
        $region17: #{tpu_custom_call.1} parent=11 // pred_check
          %p308 = pneg %p117
        $region18: #{tpu_custom_call.1} parent=11 // pred_check_branch
          %310 = sbr.rel (%p308) target = $region20
        $region19: #{tpu_custom_call.1} parent=11 // pred_region
          _
        $region20: #{tpu_custom_call.1} parent=11 // pred_fallthru
          _
        // Predicated region
        $region21: #{tpu_custom_call.1} parent=11 // pred_check
          %p311 = pneg %p138
        $region22: #{tpu_custom_call.1} parent=11 // pred_check_branch
          %313 = sbr.rel (%p311) target = $region24
        $region23: #{tpu_custom_call.1} parent=11 // pred_region
          _
        $region24: #{tpu_custom_call.1} parent=11 // pred_fallthru
          _
        // Predicated region
        $region25: #{tpu_custom_call.1} parent=11 // pred_check
          %p314 = pneg %p159
        $region26: #{tpu_custom_call.1} parent=11 // pred_check_branch
          %316 = sbr.rel (%p314) target = $region28
        $region27: #{tpu_custom_call.1} parent=11 // pred_region
          _
        $region28: #{tpu_custom_call.1} parent=11 // pred_fallthru
          _
        // Predicated region
        $region29: #{tpu_custom_call.1} parent=11 // pred_check
          %p317 = pneg %p180
        $region30: #{tpu_custom_call.1} parent=11 // pred_check_branch
          %319 = sbr.rel (%p317) target = $region32
        $region31: #{tpu_custom_call.1} parent=11 // pred_region
          _
        $region32: #{tpu_custom_call.1} parent=11 // pred_fallthru
          _
        // Predicated region
        $region33: #{tpu_custom_call.1} parent=11 // pred_check
          %p320 = pneg %p201
        $region34: #{tpu_custom_call.1} parent=11 // pred_check_branch
          %322 = sbr.rel (%p320) target = $region36
        $region35: #{tpu_custom_call.1} parent=11 // pred_region
          _
        $region36: #{tpu_custom_call.1} parent=11 // pred_fallthru
          _
        // Predicated region
        $region37: #{tpu_custom_call.1} parent=11 // pred_check
          %p323 = pneg %p222
        $region38: #{tpu_custom_call.1} parent=11 // pred_check_branch
          %325 = sbr.rel (%p323) target = $region40
        $region39: #{tpu_custom_call.1} parent=11 // pred_region
          _
        $region40: #{tpu_custom_call.1} parent=11 // pred_fallthru
          _
        // Predicated region
        $region41: #{tpu_custom_call.1} parent=11 // pred_check
          %p326 = pneg %p243
        $region42: #{tpu_custom_call.1} parent=11 // pred_check_branch
          %328 = sbr.rel (%p326) target = $region44
        $region43: #{tpu_custom_call.1} parent=11 // pred_region
          _
        $region44: #{tpu_custom_call.1} parent=11 // pred_fallthru
          _
        // Predicated region
        $region45: #{tpu_custom_call.1} parent=11 // pred_check
          %p329 = pneg %p264
        $region46: #{tpu_custom_call.1} parent=11 // pred_check_branch
          %331 = sbr.rel (%p329) target = $region48
        $region47: #{tpu_custom_call.1} parent=11 // pred_region
          _
        $region48: #{tpu_custom_call.1} parent=11 // pred_fallthru
          _
      $region12: #{tpu_custom_call.1} parent=5 // pred_fallthru
        _
      %p332 = scmp.lt.s32.totalorder %s23, 2
      // Predicated region
      $region49: #{tpu_custom_call.1} parent=5 // pred_check
        %p333 = pneg %p332
      $region50: #{tpu_custom_call.1} parent=5 // pred_check_branch
        %335 = sbr.rel (%p333) target = $region52
      $region51: #{tpu_custom_call.1} parent=5 // pred_region
        // Predicated region
        $region53: #{tpu_custom_call.1} parent=51 // pred_check
          %p336 = pneg %p43
        $region54: #{tpu_custom_call.1} parent=51 // pred_check_branch
          %338 = sbr.rel (%p336) target = $region56
        $region55: #{tpu_custom_call.1} parent=51 // pred_region
          %p339 = scmp.lt.s32.totalorder %s23, 1
          %s340 = scalar_select %p339, %s23, 1
          %s341 = smul.addr %s340, 2
          %s342 = smul.addr %s341, 8
          %s343 = scalar_lea.vmem %s0, %s342
        $region56: #{tpu_custom_call.1} parent=51 // pred_fallthru
          _
        // Predicated region
        $region57: #{tpu_custom_call.1} parent=51 // pred_check
          %p344 = pneg %p69
        $region58: #{tpu_custom_call.1} parent=51 // pred_check_branch
          %346 = sbr.rel (%p344) target = $region60
        $region59: #{tpu_custom_call.1} parent=51 // pred_region
          %s347 = sand.u32 %s59, 1
          %s348 = scalar_lea.sflag [#allocation3], %s347
          %s349 = sand.u32 %s59, 1
          %s350 = smul.addr %s349, 8
          %s351 = scalar_lea.vmem [#allocation2], %s350
          %s353 = ssub.s32 128, 128
          %354 = vsyncadd %s348, %s353
          %s355 = smul.addr %s23, 128
          %s356 = scalar_lea.hbm %s1, %s355
          %s358 = sshll.u32 %s351, 4
          %s359 = int_to_ptr.vmem [resolvable:$true] %s358
          %361 = dma.hbm_to_vmem [thread:$0]  %s356, 128, %s359, %s348
        $region60: #{tpu_custom_call.1} parent=51 // pred_fallthru
          _
      $region52: #{tpu_custom_call.1} parent=5 // pred_fallthru
        _
      %p362 = scmp.le.s32.totalorder 1, %s23
      %p363 = scmp.lt.s32.totalorder %s23, 3
      %p364 = pnand %p362, %p363
      %p365 = pneg %p364
      // Predicated region
      $region61: #{tpu_custom_call.1} parent=5 // pred_check
        _
      $region62: #{tpu_custom_call.1} parent=5 // pred_check_branch
        %367 = sbr.rel (%p364) target = $region64
      $region63: #{tpu_custom_call.1} parent=5 // pred_region
        %s368 = ssub.s32 %s23, 1
        %s369 = sand.u32 %s62, 1
        %s370 = scalar_lea.sflag [#allocation3], %s369
        %s371 = sand.u32 %s62, 1
        %s372 = smul.addr %s371, 8
        %s373 = scalar_lea.vmem [#allocation2], %s372
        // Predicated region
        $region65: #{tpu_custom_call.1} parent=63 // pred_check
          %p374 = pneg %p75
        $region66: #{tpu_custom_call.1} parent=63 // pred_check_branch
          %376 = sbr.rel (%p374) target = $region68
        $region67: #{tpu_custom_call.1} parent=63 // pred_region
          %377 = dma.done %s370, 128
        $region68: #{tpu_custom_call.1} parent=63 // pred_fallthru
          _
        %p378 = scmp.lt.s32.totalorder %s28, 1
        %s379 = scalar_select %p378, %s28, 1
        %s380 = smul.addr %s379, 2
        %s381 = smul.addr %s380, 8
        %s382 = scalar_lea.vmem %s0, %s381
        %p383 = pneg %p49
        %p384 = pneg %p46
        %s385 = sand.u32 %s62, 1
        %s386 = scalar_lea.sflag [#allocation3], %s385
        %s387 = sand.u32 %s62, 1
        %s388 = smul.addr %s387, 8
        %s389 = scalar_lea.vmem [#allocation2], %s388
        %p390 = pneg %p75
        %p391 = pneg %p72
        %p392 = pneg %p96
        %p393 = pneg %p93
        %p394 = pneg %p117
        %p395 = pneg %p114
        %p396 = pneg %p138
        %p397 = pneg %p135
        %p398 = pneg %p159
        %p399 = pneg %p156
        %p400 = pneg %p180
        %p401 = pneg %p177
        %p402 = pneg %p201
        %p403 = pneg %p198
        %p404 = pneg %p222
        %p405 = pneg %p219
        %p406 = pneg %p243
        %p407 = pneg %p240
        %p408 = pneg %p264
        %p409 = pneg %p261
        %p410 = pneg %p290
        %p411 = pneg %p287
        %s412 = sand.u32 %s277, 1
        %s413 = scalar_lea.sflag [#allocation4], %s412
        %s414 = sand.u32 %s277, 1
        %s415 = smul.addr %s414, 8
        %s416 = scalar_lea.vmem [#allocation5], %s415
        %p417 = scmp.lt.s32.totalorder %s28, 1
        %s418 = scalar_select %p417, %s28, 1
        %s419 = smul.addr %s418, 2
        %s420 = smul.addr %s419, 8
        %s421 = scalar_lea.vmem %s0, %s420
        %v422 = vld [vmem:[%s421] sm:$0xff]
        %v423 = vld [vmem:[%s421 + $0x8] sm:$0xff]
        %v424 = vld [vmem:[%s2] sm:$0x1]
        %v425 = vld [vmem:[%s3] sm:$0x1]
        %vm426 = vcmask 261120
        %v427 = vsel %vm426, %v422, 0.0
        %428 = vadd.xlane.f32.xlu0 %v427
        %v429 = vpop.xlane.xlu0 %428
        %v430 = vsel %vm426, %v423, 0.0
        %431 = vadd.xlane.f32.xlu0 %v430
        %v432 = vpop.xlane.xlu0 %431
        %v433 = vrcp.pop 32.0
        %v434 = vmul.f32 %v429, %v433
        %v435 = vmul.f32 %v432, %v433
        %v436 = vsub.f32 %v422, %v434
        %v437 = vsub.f32 %v423, %v435
        %v438 = vmul.f32 %v436, %v436
        %v439 = vmul.f32 %v437, %v437
        %v440 = vsel %vm426, %v438, 0.0
        %441 = vadd.xlane.f32.xlu0 %v440
        %v442 = vpop.xlane.xlu0 %441
        %v443 = vsel %vm426, %v439, 0.0
        %444 = vadd.xlane.f32.xlu0 %v443
        %v445 = vpop.xlane.xlu0 %444
        %v446 = vmul.f32 %v442, %v433
        %v447 = vmul.f32 %v445, %v433
        %v448 = vadd.f32 %v446, 1e-05
        %v449 = vadd.f32 %v447, 1e-05
        %v450 = vrsqrt.pop %v448
        %v451 = vrsqrt.pop %v449
        %v452 = vmul.f32 %v436, %v450
        %v453 = vmul.f32 %v437, %v451
        %v455 = vlaneseq
        %v456 = vshrl.u32 %v455, 7
        %v457 = vsub.s32 0, %v456
        %v458 = vrot.slane %v424, %v457
        %v460 = vmul.f32 %v452, %v458
        %v461 = vmul.f32 %v453, %v458
        %v463 = vlaneseq
        %v464 = vshrl.u32 %v463, 7
        %v465 = vsub.s32 0, %v464
        %v466 = vrot.slane %v425, %v465
        %v468 = vadd.f32 %v460, %v466
        %v469 = vadd.f32 %v461, %v466
        %v470 = vld [vmem:[%s373] sm:$0xff]
        %v471 = vld [vmem:[%s4] sm:$0x1]
        %v472 = vld [vmem:[%s5] sm:$0x1]
        %v473 = vsel %vm426, %v470, 0.0
        %474 = vadd.xlane.f32.xlu0 %v473
        %v475 = vpop.xlane.xlu0 %474
        %v476 = vmul.f32 %v475, %v433
        %v477 = vsub.f32 %v470, %v476
        %v478 = vmul.f32 %v477, %v477
        %v479 = vsel %vm426, %v478, 0.0
        %480 = vadd.xlane.f32.xlu0 %v479
        %v481 = vpop.xlane.xlu0 %480
        %v482 = vmul.f32 %v481, %v433
        %v483 = vadd.f32 %v482, 1e-05
        %v484 = vrsqrt.pop %v483
        %v485 = vmul.f32 %v477, %v484
        %v487 = vlaneseq
        %v488 = vshrl.u32 %v487, 7
        %v489 = vsub.s32 0, %v488
        %v490 = vrot.slane %v471, %v489
        %v492 = vmul.f32 %v485, %v490
        %v494 = vlaneseq
        %v495 = vshrl.u32 %v494, 7
        %v496 = vsub.s32 0, %v495
        %v497 = vrot.slane %v472, %v496
        %v499 = vadd.f32 %v492, %v497
        %v500 = vld [vmem:[%s6] sm:$0xff]
        %v501 = vld [vmem:[%s6 + $0x8] sm:$0xff]
        %v502 = vld [vmem:[%s6 + $0x10] sm:$0xff]
        %v503 = vld [vmem:[%s6 + $0x18] sm:$0xff]
        %v505 = vsel %vm426, %v499, 0
        %507 = vmatprep.subr.mxu0 0.0
        %508 = vmatpush1.msra.mxu0 %v500
        %509 = vmatprep.subr.mxu0 0.0
        %510 = vmatpush1.msra.mxu0 %v501
        %511 = vmatprep.subr.mxu0 0.0
        %512 = vmatpush1.msra.mxu0 %v502
        %513 = vmatprep.subr.mxu0 0.0
        %514 = vmatpush1.msra.mxu0 %v503
        %515 = vmatprep.subr.mxu0 0.0
        %516 = vmatpush1.msra.mxu0 0.0
        %517 = vmatprep.subr.mxu0 0.0
        %518 = vmatpush1.msra.mxu0 0.0
        %519 = vmatprep.subr.mxu0 0.0
        %520 = vmatpush1.msra.mxu0 0.0
        %521 = vmatprep.subr.mxu0 0.0
        %522 = vmatpush1.msra.mxu0 0.0
        %523 = vmatprep.subr.mxu0 0.0
        %524 = vmatpush1.msra.mxu0 0.0
        %525 = vmatprep.subr.mxu0 0.0
        %526 = vmatpush1.msra.mxu0 0.0
        %527 = vmatprep.subr.mxu0 0.0
        %528 = vmatpush1.msra.mxu0 0.0
        %529 = vmatprep.subr.mxu0 0.0
        %530 = vmatpush1.msra.mxu0 0.0
        %531 = vmatprep.subr.mxu0 0.0
        %532 = vmatpush1.msra.mxu0 0.0
        %533 = vmatprep.subr.mxu0 0.0
        %534 = vmatpush1.msra.mxu0 0.0
        %535 = vmatprep.subr.mxu0 0.0
        %536 = vmatpush1.msra.mxu0 0.0
        %537 = vmatprep.subr.mxu0 0.0
        %538 = vmatpush1.msra.mxu0 0.0
        %539 = vmatprep.subr.mxu0 0.0
        %540 = vmatpush1.msra.mxu0 0.0
        %541 = vmatprep.subr.mxu0 0.0
        %542 = vmatpush1.msra.mxu0 0.0
        %543 = vmatprep.subr.mxu0 0.0
        %544 = vmatpush1.msra.mxu0 0.0
        %545 = vmatprep.subr.mxu0 0.0
        %546 = vmatpush1.msra.mxu0 0.0
        %547 = vmatprep.subr.mxu0 0.0
        %548 = vmatpush1.msra.mxu0 0.0
        %549 = vmatprep.subr.mxu0 0.0
        %550 = vmatpush1.msra.mxu0 0.0
        %551 = vmatprep.subr.mxu0 0.0
        %552 = vmatpush1.msra.mxu0 0.0
        %553 = vmatprep.subr.mxu0 0.0
        %554 = vmatpush1.msra.mxu0 0.0
        %555 = vmatprep.subr.mxu0 0.0
        %556 = vmatpush1.msra.mxu0 0.0
        %557 = vmatprep.subr.mxu0 0.0
        %558 = vmatpush1.msra.mxu0 0.0
        %559 = vmatprep.subr.mxu0 0.0
        %560 = vmatpush1.msra.mxu0 0.0
        %561 = vmatprep.subr.mxu0 0.0
        %562 = vmatpush1.msra.mxu0 0.0
        %563 = vmatprep.subr.mxu0 0.0
        %564 = vmatpush1.msra.mxu0 0.0
        %565 = vmatprep.subr.mxu0 0.0
        %566 = vmatpush1.msra.mxu0 0.0
        %567 = vmatprep.subr.mxu0 0.0
        %568 = vmatpush1.msra.mxu0 0.0
        %569 = vmatprep.subr.mxu0 0.0
        %570 = vmatpush1.msra.mxu0 0.0
        %571 = vmatprep.mubr.f32.mxu0 0.0
        %572 = vmatmul.mubr.f32.gmra.mrb[0].mxu0 %v505
        %v573 = vpop.f32.mrb[0].mxu0
        %v574 = vadd.f32 0.0, %v573
        %v575 = vpop.f32.mrb[0].mxu0
        %576 = vdwg.mxu0
        %v577 = vmul.f32 %v574, 0.25
        %v578 = vld [vmem:[%s7] sm:$0xff]
        %v579 = vld [vmem:[%s7 + $0x8] sm:$0xff]
        %v580 = vld [vmem:[%s7 + $0x10] sm:$0xff]
        %v581 = vld [vmem:[%s7 + $0x18] sm:$0xff]
        %v583 = vsel %vm426, %v468, 0
        %v586 = vsel %vm426, %v469, 0
        %588 = vmatprep.subr.mxu0 0.0
        %589 = vmatpush1.msra.mxu0 %v578
        %590 = vmatprep.subr.mxu0 0.0
        %591 = vmatpush1.msra.mxu0 %v579
        %592 = vmatprep.subr.mxu0 0.0
        %593 = vmatpush1.msra.mxu0 %v580
        %594 = vmatprep.subr.mxu0 0.0
        %595 = vmatpush1.msra.mxu0 %v581
        %596 = vmatprep.subr.mxu0 0.0
        %597 = vmatpush1.msra.mxu0 0.0
        %598 = vmatprep.subr.mxu0 0.0
        %599 = vmatpush1.msra.mxu0 0.0
        %600 = vmatprep.subr.mxu0 0.0
        %601 = vmatpush1.msra.mxu0 0.0
        %602 = vmatprep.subr.mxu0 0.0
        %603 = vmatpush1.msra.mxu0 0.0
        %604 = vmatprep.subr.mxu0 0.0
        %605 = vmatpush1.msra.mxu0 0.0
        %606 = vmatprep.subr.mxu0 0.0
        %607 = vmatpush1.msra.mxu0 0.0
        %608 = vmatprep.subr.mxu0 0.0
        %609 = vmatpush1.msra.mxu0 0.0
        %610 = vmatprep.subr.mxu0 0.0
        %611 = vmatpush1.msra.mxu0 0.0
        %612 = vmatprep.subr.mxu0 0.0
        %613 = vmatpush1.msra.mxu0 0.0
        %614 = vmatprep.subr.mxu0 0.0
        %615 = vmatpush1.msra.mxu0 0.0
        %616 = vmatprep.subr.mxu0 0.0
        %617 = vmatpush1.msra.mxu0 0.0
        %618 = vmatprep.subr.mxu0 0.0
        %619 = vmatpush1.msra.mxu0 0.0
        %620 = vmatprep.subr.mxu0 0.0
        %621 = vmatpush1.msra.mxu0 0.0
        %622 = vmatprep.subr.mxu0 0.0
        %623 = vmatpush1.msra.mxu0 0.0
        %624 = vmatprep.subr.mxu0 0.0
        %625 = vmatpush1.msra.mxu0 0.0
        %626 = vmatprep.subr.mxu0 0.0
        %627 = vmatpush1.msra.mxu0 0.0
        %628 = vmatprep.subr.mxu0 0.0
        %629 = vmatpush1.msra.mxu0 0.0
        %630 = vmatprep.subr.mxu0 0.0
        %631 = vmatpush1.msra.mxu0 0.0
        %632 = vmatprep.subr.mxu0 0.0
        %633 = vmatpush1.msra.mxu0 0.0
        %634 = vmatprep.subr.mxu0 0.0
        %635 = vmatpush1.msra.mxu0 0.0
        %636 = vmatprep.subr.mxu0 0.0
        %637 = vmatpush1.msra.mxu0 0.0
        %638 = vmatprep.subr.mxu0 0.0
        %639 = vmatpush1.msra.mxu0 0.0
        %640 = vmatprep.subr.mxu0 0.0
        %641 = vmatpush1.msra.mxu0 0.0
        %642 = vmatprep.subr.mxu0 0.0
        %643 = vmatpush1.msra.mxu0 0.0
        %644 = vmatprep.subr.mxu0 0.0
        %645 = vmatpush1.msra.mxu0 0.0
        %646 = vmatprep.subr.mxu0 0.0
        %647 = vmatpush1.msra.mxu0 0.0
        %648 = vmatprep.subr.mxu0 0.0
        %649 = vmatpush1.msra.mxu0 0.0
        %650 = vmatprep.subr.mxu0 0.0
        %651 = vmatpush1.msra.mxu0 0.0
        %652 = vmatprep.mubr.f32.mxu0 0.0
        %653 = vmatmul.mubr.f32.gmra.mrb[0].mxu0 %v583
        %v654 = vpop.f32.mrb[0].mxu0
        %v655 = vadd.f32 0.0, %v654
        %v656 = vpop.f32.mrb[0].mxu0
        %657 = vmatprep.mubr.f32.mxu0 0.0
        %658 = vmatmul.mubr.f32.gmra.mrb[0].mxu0 %v586
        %v659 = vpop.f32.mrb[0].mxu0
        %v660 = vadd.f32 0.0, %v659
        %v661 = vpop.f32.mrb[0].mxu0
        %662 = vmatprep.mubr.f32.mxu0 0.0
        %663 = vmatmul.mubr.f32.gmra.mrb[0].mxu0 %v505
        %v664 = vpop.f32.mrb[0].mxu0
        %v665 = vadd.f32 0.0, %v664
        %v666 = vpop.f32.mrb[0].mxu0
        %667 = vdwg.mxu0
        %672 = vrot.lane.b32.xlu0 %v578, 64
        %v673 = vpop.permute.xlu0 %672
        %674 = vrot.lane.b32.xlu0 %v579, 64
        %v675 = vpop.permute.xlu0 %674
        %676 = vrot.lane.b32.xlu0 %v580, 64
        %v677 = vpop.permute.xlu0 %676
        %678 = vrot.lane.b32.xlu0 %v581, 64
        %v679 = vpop.permute.xlu0 %678
        %684 = vmatprep.subr.mxu0 0.0
        %685 = vmatpush1.msra.mxu0 %v673
        %686 = vmatprep.subr.mxu0 0.0
        %687 = vmatpush1.msra.mxu0 %v675
        %688 = vmatprep.subr.mxu0 0.0
        %689 = vmatpush1.msra.mxu0 %v677
        %690 = vmatprep.subr.mxu0 0.0
        %691 = vmatpush1.msra.mxu0 %v679
        %692 = vmatprep.subr.mxu0 0.0
        %693 = vmatpush1.msra.mxu0 0.0
        %694 = vmatprep.subr.mxu0 0.0
        %695 = vmatpush1.msra.mxu0 0.0
        %696 = vmatprep.subr.mxu0 0.0
        %697 = vmatpush1.msra.mxu0 0.0
        %698 = vmatprep.subr.mxu0 0.0
        %699 = vmatpush1.msra.mxu0 0.0
        %700 = vmatprep.subr.mxu0 0.0
        %701 = vmatpush1.msra.mxu0 0.0
        %702 = vmatprep.subr.mxu0 0.0
        %703 = vmatpush1.msra.mxu0 0.0
        %704 = vmatprep.subr.mxu0 0.0
        %705 = vmatpush1.msra.mxu0 0.0
        %706 = vmatprep.subr.mxu0 0.0
        %707 = vmatpush1.msra.mxu0 0.0
        %708 = vmatprep.subr.mxu0 0.0
        %709 = vmatpush1.msra.mxu0 0.0
        %710 = vmatprep.subr.mxu0 0.0
        %711 = vmatpush1.msra.mxu0 0.0
        %712 = vmatprep.subr.mxu0 0.0
        %713 = vmatpush1.msra.mxu0 0.0
        %714 = vmatprep.subr.mxu0 0.0
        %715 = vmatpush1.msra.mxu0 0.0
        %716 = vmatprep.subr.mxu0 0.0
        %717 = vmatpush1.msra.mxu0 0.0
        %718 = vmatprep.subr.mxu0 0.0
        %719 = vmatpush1.msra.mxu0 0.0
        %720 = vmatprep.subr.mxu0 0.0
        %721 = vmatpush1.msra.mxu0 0.0
        %722 = vmatprep.subr.mxu0 0.0
        %723 = vmatpush1.msra.mxu0 0.0
        %724 = vmatprep.subr.mxu0 0.0
        %725 = vmatpush1.msra.mxu0 0.0
        %726 = vmatprep.subr.mxu0 0.0
        %727 = vmatpush1.msra.mxu0 0.0
        %728 = vmatprep.subr.mxu0 0.0
        %729 = vmatpush1.msra.mxu0 0.0
        %730 = vmatprep.subr.mxu0 0.0
        %731 = vmatpush1.msra.mxu0 0.0
        %732 = vmatprep.subr.mxu0 0.0
        %733 = vmatpush1.msra.mxu0 0.0
        %734 = vmatprep.subr.mxu0 0.0
        %735 = vmatpush1.msra.mxu0 0.0
        %736 = vmatprep.subr.mxu0 0.0
        %737 = vmatpush1.msra.mxu0 0.0
        %738 = vmatprep.subr.mxu0 0.0
        %739 = vmatpush1.msra.mxu0 0.0
        %740 = vmatprep.subr.mxu0 0.0
        %741 = vmatpush1.msra.mxu0 0.0
        %742 = vmatprep.subr.mxu0 0.0
        %743 = vmatpush1.msra.mxu0 0.0
        %744 = vmatprep.subr.mxu0 0.0
        %745 = vmatpush1.msra.mxu0 0.0
        %746 = vmatprep.subr.mxu0 0.0
        %747 = vmatpush1.msra.mxu0 0.0
        %748 = vmatprep.mubr.f32.mxu0 0.0
        %749 = vmatmul.mubr.f32.gmra.mrb[0].mxu0 %v583
        %v750 = vpop.f32.mrb[0].mxu0
        %v751 = vadd.f32 0.0, %v750
        %v752 = vpop.f32.mrb[0].mxu0
        %753 = vmatprep.mubr.f32.mxu0 0.0
        %754 = vmatmul.mubr.f32.gmra.mrb[0].mxu0 %v586
        %v755 = vpop.f32.mrb[0].mxu0
        %v756 = vadd.f32 0.0, %v755
        %v757 = vpop.f32.mrb[0].mxu0
        %758 = vmatprep.mubr.f32.mxu0 0.0
        %759 = vmatmul.mubr.f32.gmra.mrb[0].mxu0 %v505
        %v760 = vpop.f32.mrb[0].mxu0
        %v761 = vadd.f32 0.0, %v760
        %v762 = vpop.f32.mrb[0].mxu0
        %763 = vdwg.mxu0
        %765 = vrot.lane.b32.xlu0 %v577, 112
        %v766 = vpop.permute.xlu0 %765
        %767 = vrot.lane.b32.xlu0 %v577, 96
        %v768 = vpop.permute.xlu0 %767
        %769 = vrot.lane.b32.xlu0 %v577, 80
        %v770 = vpop.permute.xlu0 %769
        %774 = vrot.lane.b32.xlu0 %v655, 112
        %v775 = vpop.permute.xlu0 %774
        %776 = vrot.lane.b32.xlu0 %v660, 112
        %v777 = vpop.permute.xlu0 %776
        %778 = vrot.lane.b32.xlu0 %v665, 112
        %v779 = vpop.permute.xlu0 %778
        %780 = vrot.lane.b32.xlu0 %v655, 96
        %v781 = vpop.permute.xlu0 %780
        %782 = vrot.lane.b32.xlu0 %v660, 96
        %v783 = vpop.permute.xlu0 %782
        %784 = vrot.lane.b32.xlu0 %v665, 96
        %v785 = vpop.permute.xlu0 %784
        %786 = vrot.lane.b32.xlu0 %v655, 80
        %v787 = vpop.permute.xlu0 %786
        %788 = vrot.lane.b32.xlu0 %v660, 80
        %v789 = vpop.permute.xlu0 %788
        %790 = vrot.lane.b32.xlu0 %v665, 80
        %v791 = vpop.permute.xlu0 %790
        %795 = vrot.lane.b32.xlu0 %v751, 112
        %v796 = vpop.permute.xlu0 %795
        %797 = vrot.lane.b32.xlu0 %v756, 112
        %v798 = vpop.permute.xlu0 %797
        %799 = vrot.lane.b32.xlu0 %v761, 112
        %v800 = vpop.permute.xlu0 %799
        %804 = vrot.lane.b32.xlu0 %v751, 96
        %v805 = vpop.permute.xlu0 %804
        %806 = vrot.lane.b32.xlu0 %v756, 96
        %v807 = vpop.permute.xlu0 %806
        %808 = vrot.lane.b32.xlu0 %v761, 96
        %v809 = vpop.permute.xlu0 %808
        %813 = vrot.lane.b32.xlu0 %v751, 80
        %v814 = vpop.permute.xlu0 %813
        %815 = vrot.lane.b32.xlu0 %v756, 80
        %v816 = vpop.permute.xlu0 %815
        %817 = vrot.lane.b32.xlu0 %v761, 80
        %v818 = vpop.permute.xlu0 %817
        %vm822 = vcmask 130048
        %v823 = vsel %vm822, %v577, 0
        %v825 = vsel %vm822, %v655, 0
        %v827 = vsel %vm822, %v660, 0
        %v829 = vsel %vm822, %v665, 0
        %831 = vmatprep.subr.mxu0 0.0
        %832 = vmatpush1.xpose.msra.mxu0 %v825
        %833 = vmatprep.subr.mxu0 0.0
        %834 = vmatpush1.xpose.msra.mxu0 %v827
        %835 = vmatprep.subr.mxu0 0.0
        %836 = vmatpush1.xpose.msra.mxu0 %v829
        %837 = vmatprep.subr.mxu0 0.0
        %838 = vmatpush1.xpose.msra.mxu0 0.0
        %839 = vmatprep.subr.mxu0 0.0
        %840 = vmatpush1.xpose.msra.mxu0 0.0
        %841 = vmatprep.subr.mxu0 0.0
        %842 = vmatpush1.xpose.msra.mxu0 0.0
        %843 = vmatprep.subr.mxu0 0.0
        %844 = vmatpush1.xpose.msra.mxu0 0.0
        %845 = vmatprep.subr.mxu0 0.0
        %846 = vmatpush1.xpose.msra.mxu0 0.0
        %847 = vmatprep.subr.mxu0 0.0
        %848 = vmatpush1.xpose.msra.mxu0 0.0
        %849 = vmatprep.subr.mxu0 0.0
        %850 = vmatpush1.xpose.msra.mxu0 0.0
        %851 = vmatprep.subr.mxu0 0.0
        %852 = vmatpush1.xpose.msra.mxu0 0.0
        %853 = vmatprep.subr.mxu0 0.0
        %854 = vmatpush1.xpose.msra.mxu0 0.0
        %855 = vmatprep.subr.mxu0 0.0
        %856 = vmatpush1.xpose.msra.mxu0 0.0
        %857 = vmatprep.subr.mxu0 0.0
        %858 = vmatpush1.xpose.msra.mxu0 0.0
        %859 = vmatprep.subr.mxu0 0.0
        %860 = vmatpush1.xpose.msra.mxu0 0.0
        %861 = vmatprep.subr.mxu0 0.0
        %862 = vmatpush1.xpose.msra.mxu0 0.0
        %863 = vmatprep.subr.mxu0 0.0
        %864 = vmatpush1.xpose.msra.mxu0 0.0
        %865 = vmatprep.subr.mxu0 0.0
        %866 = vmatpush1.xpose.msra.mxu0 0.0
        %867 = vmatprep.subr.mxu0 0.0
        %868 = vmatpush1.xpose.msra.mxu0 0.0
        %869 = vmatprep.subr.mxu0 0.0
        %870 = vmatpush1.xpose.msra.mxu0 0.0
        %871 = vmatprep.subr.mxu0 0.0
        %872 = vmatpush1.xpose.msra.mxu0 0.0
        %873 = vmatprep.subr.mxu0 0.0
        %874 = vmatpush1.xpose.msra.mxu0 0.0
        %875 = vmatprep.subr.mxu0 0.0
        %876 = vmatpush1.xpose.msra.mxu0 0.0
        %877 = vmatprep.subr.mxu0 0.0
        %878 = vmatpush1.xpose.msra.mxu0 0.0
        %879 = vmatprep.subr.mxu0 0.0
        %880 = vmatpush1.xpose.msra.mxu0 0.0
        %881 = vmatprep.subr.mxu0 0.0
        %882 = vmatpush1.xpose.msra.mxu0 0.0
        %883 = vmatprep.subr.mxu0 0.0
        %884 = vmatpush1.xpose.msra.mxu0 0.0
        %885 = vmatprep.subr.mxu0 0.0
        %886 = vmatpush1.xpose.msra.mxu0 0.0
        %887 = vmatprep.subr.mxu0 0.0
        %888 = vmatpush1.xpose.msra.mxu0 0.0
        %889 = vmatprep.subr.mxu0 0.0
        %890 = vmatpush1.xpose.msra.mxu0 0.0
        %891 = vmatprep.subr.mxu0 0.0
        %892 = vmatpush1.xpose.msra.mxu0 0.0
        %893 = vmatprep.subr.mxu0 0.0
        %894 = vmatpush1.xpose.msra.mxu0 0.0
        %895 = vmatprep.mubr.f32.mxu0 0.0
        %896 = vmatmul.mubr.f32.gmra.mrb[0].mxu0 %v823
        %v897 = vpop.f32.mrb[0].mxu0
        %v898 = vadd.f32 0.0, %v897
        %v899 = vpop.f32.mrb[0].mxu0
        %900 = vdwg.mxu0
        %v901 = vsel %vm822, %v766, 0
        %v903 = vsel %vm822, %v775, 0
        %v905 = vsel %vm822, %v777, 0
        %v907 = vsel %vm822, %v779, 0
        %909 = vmatprep.subr.mxu0 0.0
        %910 = vmatpush1.xpose.msra.mxu0 %v903
        %911 = vmatprep.subr.mxu0 0.0
        %912 = vmatpush1.xpose.msra.mxu0 %v905
        %913 = vmatprep.subr.mxu0 0.0
        %914 = vmatpush1.xpose.msra.mxu0 %v907
        %915 = vmatprep.subr.mxu0 0.0
        %916 = vmatpush1.xpose.msra.mxu0 0.0
        %917 = vmatprep.subr.mxu0 0.0
        %918 = vmatpush1.xpose.msra.mxu0 0.0
        %919 = vmatprep.subr.mxu0 0.0
        %920 = vmatpush1.xpose.msra.mxu0 0.0
        %921 = vmatprep.subr.mxu0 0.0
        %922 = vmatpush1.xpose.msra.mxu0 0.0
        %923 = vmatprep.subr.mxu0 0.0
        %924 = vmatpush1.xpose.msra.mxu0 0.0
        %925 = vmatprep.subr.mxu0 0.0
        %926 = vmatpush1.xpose.msra.mxu0 0.0
        %927 = vmatprep.subr.mxu0 0.0
        %928 = vmatpush1.xpose.msra.mxu0 0.0
        %929 = vmatprep.subr.mxu0 0.0
        %930 = vmatpush1.xpose.msra.mxu0 0.0
        %931 = vmatprep.subr.mxu0 0.0
        %932 = vmatpush1.xpose.msra.mxu0 0.0
        %933 = vmatprep.subr.mxu0 0.0
        %934 = vmatpush1.xpose.msra.mxu0 0.0
        %935 = vmatprep.subr.mxu0 0.0
        %936 = vmatpush1.xpose.msra.mxu0 0.0
        %937 = vmatprep.subr.mxu0 0.0
        %938 = vmatpush1.xpose.msra.mxu0 0.0
        %939 = vmatprep.subr.mxu0 0.0
        %940 = vmatpush1.xpose.msra.mxu0 0.0
        %941 = vmatprep.subr.mxu0 0.0
        %942 = vmatpush1.xpose.msra.mxu0 0.0
        %943 = vmatprep.subr.mxu0 0.0
        %944 = vmatpush1.xpose.msra.mxu0 0.0
        %945 = vmatprep.subr.mxu0 0.0
        %946 = vmatpush1.xpose.msra.mxu0 0.0
        %947 = vmatprep.subr.mxu0 0.0
        %948 = vmatpush1.xpose.msra.mxu0 0.0
        %949 = vmatprep.subr.mxu0 0.0
        %950 = vmatpush1.xpose.msra.mxu0 0.0
        %951 = vmatprep.subr.mxu0 0.0
        %952 = vmatpush1.xpose.msra.mxu0 0.0
        %953 = vmatprep.subr.mxu0 0.0
        %954 = vmatpush1.xpose.msra.mxu0 0.0
        %955 = vmatprep.subr.mxu0 0.0
        %956 = vmatpush1.xpose.msra.mxu0 0.0
        %957 = vmatprep.subr.mxu0 0.0
        %958 = vmatpush1.xpose.msra.mxu0 0.0
        %959 = vmatprep.subr.mxu0 0.0
        %960 = vmatpush1.xpose.msra.mxu0 0.0
        %961 = vmatprep.subr.mxu0 0.0
        %962 = vmatpush1.xpose.msra.mxu0 0.0
        %963 = vmatprep.subr.mxu0 0.0
        %964 = vmatpush1.xpose.msra.mxu0 0.0
        %965 = vmatprep.subr.mxu0 0.0
        %966 = vmatpush1.xpose.msra.mxu0 0.0
        %967 = vmatprep.subr.mxu0 0.0
        %968 = vmatpush1.xpose.msra.mxu0 0.0
        %969 = vmatprep.subr.mxu0 0.0
        %970 = vmatpush1.xpose.msra.mxu0 0.0
        %971 = vmatprep.subr.mxu0 0.0
        %972 = vmatpush1.xpose.msra.mxu0 0.0
        %973 = vmatprep.mubr.f32.mxu0 0.0
        %974 = vmatmul.mubr.f32.gmra.mrb[0].mxu0 %v901
        %v975 = vpop.f32.mrb[0].mxu0
        %v976 = vadd.f32 0.0, %v975
        %v977 = vpop.f32.mrb[0].mxu0
        %978 = vdwg.mxu0
        %v979 = vsel %vm822, %v768, 0
        %v981 = vsel %vm822, %v781, 0
        %v983 = vsel %vm822, %v783, 0
        %v985 = vsel %vm822, %v785, 0
        %987 = vmatprep.subr.mxu0 0.0
        %988 = vmatpush1.xpose.msra.mxu0 %v981
        %989 = vmatprep.subr.mxu0 0.0
        %990 = vmatpush1.xpose.msra.mxu0 %v983
        %991 = vmatprep.subr.mxu0 0.0
        %992 = vmatpush1.xpose.msra.mxu0 %v985
        %993 = vmatprep.subr.mxu0 0.0
        %994 = vmatpush1.xpose.msra.mxu0 0.0
        %995 = vmatprep.subr.mxu0 0.0
        %996 = vmatpush1.xpose.msra.mxu0 0.0
        %997 = vmatprep.subr.mxu0 0.0
        %998 = vmatpush1.xpose.msra.mxu0 0.0
        %999 = vmatprep.subr.mxu0 0.0
        %1000 = vmatpush1.xpose.msra.mxu0 0.0
        %1001 = vmatprep.subr.mxu0 0.0
        %1002 = vmatpush1.xpose.msra.mxu0 0.0
        %1003 = vmatprep.subr.mxu0 0.0
        %1004 = vmatpush1.xpose.msra.mxu0 0.0
        %1005 = vmatprep.subr.mxu0 0.0
        %1006 = vmatpush1.xpose.msra.mxu0 0.0
        %1007 = vmatprep.subr.mxu0 0.0
        %1008 = vmatpush1.xpose.msra.mxu0 0.0
        %1009 = vmatprep.subr.mxu0 0.0
        %1010 = vmatpush1.xpose.msra.mxu0 0.0
        %1011 = vmatprep.subr.mxu0 0.0
        %1012 = vmatpush1.xpose.msra.mxu0 0.0
        %1013 = vmatprep.subr.mxu0 0.0
        %1014 = vmatpush1.xpose.msra.mxu0 0.0
        %1015 = vmatprep.subr.mxu0 0.0
        %1016 = vmatpush1.xpose.msra.mxu0 0.0
        %1017 = vmatprep.subr.mxu0 0.0
        %1018 = vmatpush1.xpose.msra.mxu0 0.0
        %1019 = vmatprep.subr.mxu0 0.0
        %1020 = vmatpush1.xpose.msra.mxu0 0.0
        %1021 = vmatprep.subr.mxu0 0.0
        %1022 = vmatpush1.xpose.msra.mxu0 0.0
        %1023 = vmatprep.subr.mxu0 0.0
        %1024 = vmatpush1.xpose.msra.mxu0 0.0
        %1025 = vmatprep.subr.mxu0 0.0
        %1026 = vmatpush1.xpose.msra.mxu0 0.0
        %1027 = vmatprep.subr.mxu0 0.0
        %1028 = vmatpush1.xpose.msra.mxu0 0.0
        %1029 = vmatprep.subr.mxu0 0.0
        %1030 = vmatpush1.xpose.msra.mxu0 0.0
        %1031 = vmatprep.subr.mxu0 0.0
        %1032 = vmatpush1.xpose.msra.mxu0 0.0
        %1033 = vmatprep.subr.mxu0 0.0
        %1034 = vmatpush1.xpose.msra.mxu0 0.0
        %1035 = vmatprep.subr.mxu0 0.0
        %1036 = vmatpush1.xpose.msra.mxu0 0.0
        %1037 = vmatprep.subr.mxu0 0.0
        %1038 = vmatpush1.xpose.msra.mxu0 0.0
        %1039 = vmatprep.subr.mxu0 0.0
        %1040 = vmatpush1.xpose.msra.mxu0 0.0
        %1041 = vmatprep.subr.mxu0 0.0
        %1042 = vmatpush1.xpose.msra.mxu0 0.0
        %1043 = vmatprep.subr.mxu0 0.0
        %1044 = vmatpush1.xpose.msra.mxu0 0.0
        %1045 = vmatprep.subr.mxu0 0.0
        %1046 = vmatpush1.xpose.msra.mxu0 0.0
        %1047 = vmatprep.subr.mxu0 0.0
        %1048 = vmatpush1.xpose.msra.mxu0 0.0
        %1049 = vmatprep.subr.mxu0 0.0
        %1050 = vmatpush1.xpose.msra.mxu0 0.0
        %1051 = vmatprep.mubr.f32.mxu0 0.0
        %1052 = vmatmul.mubr.f32.gmra.mrb[0].mxu0 %v979
        %v1053 = vpop.f32.mrb[0].mxu0
        %v1054 = vadd.f32 0.0, %v1053
        %v1055 = vpop.f32.mrb[0].mxu0
        %1056 = vdwg.mxu0
        %v1057 = vsel %vm822, %v770, 0
        %v1059 = vsel %vm822, %v787, 0
        %v1061 = vsel %vm822, %v789, 0
        %v1063 = vsel %vm822, %v791, 0
        %1065 = vmatprep.subr.mxu0 0.0
        %1066 = vmatpush1.xpose.msra.mxu0 %v1059
        %1067 = vmatprep.subr.mxu0 0.0
        %1068 = vmatpush1.xpose.msra.mxu0 %v1061
        %1069 = vmatprep.subr.mxu0 0.0
        %1070 = vmatpush1.xpose.msra.mxu0 %v1063
        %1071 = vmatprep.subr.mxu0 0.0
        %1072 = vmatpush1.xpose.msra.mxu0 0.0
        %1073 = vmatprep.subr.mxu0 0.0
        %1074 = vmatpush1.xpose.msra.mxu0 0.0
        %1075 = vmatprep.subr.mxu0 0.0
        %1076 = vmatpush1.xpose.msra.mxu0 0.0
        %1077 = vmatprep.subr.mxu0 0.0
        %1078 = vmatpush1.xpose.msra.mxu0 0.0
        %1079 = vmatprep.subr.mxu0 0.0
        %1080 = vmatpush1.xpose.msra.mxu0 0.0
        %1081 = vmatprep.subr.mxu0 0.0
        %1082 = vmatpush1.xpose.msra.mxu0 0.0
        %1083 = vmatprep.subr.mxu0 0.0
        %1084 = vmatpush1.xpose.msra.mxu0 0.0
        %1085 = vmatprep.subr.mxu0 0.0
        %1086 = vmatpush1.xpose.msra.mxu0 0.0
        %1087 = vmatprep.subr.mxu0 0.0
        %1088 = vmatpush1.xpose.msra.mxu0 0.0
        %1089 = vmatprep.subr.mxu0 0.0
        %1090 = vmatpush1.xpose.msra.mxu0 0.0
        %1091 = vmatprep.subr.mxu0 0.0
        %1092 = vmatpush1.xpose.msra.mxu0 0.0
        %1093 = vmatprep.subr.mxu0 0.0
        %1094 = vmatpush1.xpose.msra.mxu0 0.0
        %1095 = vmatprep.subr.mxu0 0.0
        %1096 = vmatpush1.xpose.msra.mxu0 0.0
        %1097 = vmatprep.subr.mxu0 0.0
        %1098 = vmatpush1.xpose.msra.mxu0 0.0
        %1099 = vmatprep.subr.mxu0 0.0
        %1100 = vmatpush1.xpose.msra.mxu0 0.0
        %1101 = vmatprep.subr.mxu0 0.0
        %1102 = vmatpush1.xpose.msra.mxu0 0.0
        %1103 = vmatprep.subr.mxu0 0.0
        %1104 = vmatpush1.xpose.msra.mxu0 0.0
        %1105 = vmatprep.subr.mxu0 0.0
        %1106 = vmatpush1.xpose.msra.mxu0 0.0
        %1107 = vmatprep.subr.mxu0 0.0
        %1108 = vmatpush1.xpose.msra.mxu0 0.0
        %1109 = vmatprep.subr.mxu0 0.0
        %1110 = vmatpush1.xpose.msra.mxu0 0.0
        %1111 = vmatprep.subr.mxu0 0.0
        %1112 = vmatpush1.xpose.msra.mxu0 0.0
        %1113 = vmatprep.subr.mxu0 0.0
        %1114 = vmatpush1.xpose.msra.mxu0 0.0
        %1115 = vmatprep.subr.mxu0 0.0
        %1116 = vmatpush1.xpose.msra.mxu0 0.0
        %1117 = vmatprep.subr.mxu0 0.0
        %1118 = vmatpush1.xpose.msra.mxu0 0.0
        %1119 = vmatprep.subr.mxu0 0.0
        %1120 = vmatpush1.xpose.msra.mxu0 0.0
        %1121 = vmatprep.subr.mxu0 0.0
        %1122 = vmatpush1.xpose.msra.mxu0 0.0
        %1123 = vmatprep.subr.mxu0 0.0
        %1124 = vmatpush1.xpose.msra.mxu0 0.0
        %1125 = vmatprep.subr.mxu0 0.0
        %1126 = vmatpush1.xpose.msra.mxu0 0.0
        %1127 = vmatprep.subr.mxu0 0.0
        %1128 = vmatpush1.xpose.msra.mxu0 0.0
        %1129 = vmatprep.mubr.f32.mxu0 0.0
        %1130 = vmatmul.mubr.f32.gmra.mrb[0].mxu0 %v1057
        %v1131 = vpop.f32.mrb[0].mxu0
        %v1132 = vadd.f32 0.0, %v1131
        %v1133 = vpop.f32.mrb[0].mxu0
        %1134 = vdwg.mxu0
        %vm1135 = vcmask 195584
        %v1136 = vsel %vm1135, %v898, -inf
        %1137 = vmax.xlane.f32.xlu0 %v1136
        %v1138 = vpop.xlane.xlu0 %1137
        %v1139 = vsel %vm1135, %v976, -inf
        %1140 = vmax.xlane.f32.xlu0 %v1139
        %v1141 = vpop.xlane.xlu0 %1140
        %v1142 = vsel %vm1135, %v1054, -inf
        %1143 = vmax.xlane.f32.xlu0 %v1142
        %v1144 = vpop.xlane.xlu0 %1143
        %v1145 = vsel %vm1135, %v1132, -inf
        %1146 = vmax.xlane.f32.xlu0 %v1145
        %v1147 = vpop.xlane.xlu0 %1146
        %v1148 = vsub.f32 %v898, %v1138
        %v1149 = vsub.f32 %v976, %v1141
        %v1150 = vsub.f32 %v1054, %v1144
        %v1151 = vsub.f32 %v1132, %v1147
        %v1152 = vmul.f32 %v1148, 1.442695
        %v1153 = vpow.pop %v1152
        %v1154 = vmul.f32 %v1149, 1.442695
        %v1155 = vpow.pop %v1154
        %v1156 = vmul.f32 %v1150, 1.442695
        %v1157 = vpow.pop %v1156
        %v1158 = vmul.f32 %v1151, 1.442695
        %v1159 = vpow.pop %v1158
        %v1160 = vsel %vm1135, %v1153, 0.0
        %1161 = vadd.xlane.f32.xlu0 %v1160
        %v1162 = vpop.xlane.xlu0 %1161
        %v1163 = vsel %vm1135, %v1155, 0.0
        %1164 = vadd.xlane.f32.xlu0 %v1163
        %v1165 = vpop.xlane.xlu0 %1164
        %v1166 = vsel %vm1135, %v1157, 0.0
        %1167 = vadd.xlane.f32.xlu0 %v1166
        %v1168 = vpop.xlane.xlu0 %1167
        %v1169 = vsel %vm1135, %v1159, 0.0
        %1170 = vadd.xlane.f32.xlu0 %v1169
        %v1171 = vpop.xlane.xlu0 %1170
        %v1172 = vrcp.pop %v1162
        %v1173 = vrcp.pop %v1165
        %v1174 = vrcp.pop %v1168
        %v1175 = vrcp.pop %v1171
        %v1176 = vmul.f32 %v1153, %v1172
        %v1177 = vmul.f32 %v1155, %v1173
        %v1178 = vmul.f32 %v1157, %v1174
        %v1179 = vmul.f32 %v1159, %v1175
        %v1181 = vsel %vm1135, %v1176, 0
        %1183 = vmatprep.subr.mxu0 0.0
        %1184 = vmatpush1.msra.mxu0 %v751
        %1185 = vmatprep.subr.mxu0 0.0
        %1186 = vmatpush1.msra.mxu0 %v756
        %1187 = vmatprep.subr.mxu0 0.0
        %1188 = vmatpush1.msra.mxu0 %v761
        %1189 = vmatprep.subr.mxu0 0.0
        %1190 = vmatpush1.msra.mxu0 0.0
        %1191 = vmatprep.subr.mxu0 0.0
        %1192 = vmatpush1.msra.mxu0 0.0
        %1193 = vmatprep.subr.mxu0 0.0
        %1194 = vmatpush1.msra.mxu0 0.0
        %1195 = vmatprep.subr.mxu0 0.0
        %1196 = vmatpush1.msra.mxu0 0.0
        %1197 = vmatprep.subr.mxu0 0.0
        %1198 = vmatpush1.msra.mxu0 0.0
        %1199 = vmatprep.subr.mxu0 0.0
        %1200 = vmatpush1.msra.mxu0 0.0
        %1201 = vmatprep.subr.mxu0 0.0
        %1202 = vmatpush1.msra.mxu0 0.0
        %1203 = vmatprep.subr.mxu0 0.0
        %1204 = vmatpush1.msra.mxu0 0.0
        %1205 = vmatprep.subr.mxu0 0.0
        %1206 = vmatpush1.msra.mxu0 0.0
        %1207 = vmatprep.subr.mxu0 0.0
        %1208 = vmatpush1.msra.mxu0 0.0
        %1209 = vmatprep.subr.mxu0 0.0
        %1210 = vmatpush1.msra.mxu0 0.0
        %1211 = vmatprep.subr.mxu0 0.0
        %1212 = vmatpush1.msra.mxu0 0.0
        %1213 = vmatprep.subr.mxu0 0.0
        %1214 = vmatpush1.msra.mxu0 0.0
        %1215 = vmatprep.subr.mxu0 0.0
        %1216 = vmatpush1.msra.mxu0 0.0
        %1217 = vmatprep.subr.mxu0 0.0
        %1218 = vmatpush1.msra.mxu0 0.0
        %1219 = vmatprep.subr.mxu0 0.0
        %1220 = vmatpush1.msra.mxu0 0.0
        %1221 = vmatprep.subr.mxu0 0.0
        %1222 = vmatpush1.msra.mxu0 0.0
        %1223 = vmatprep.subr.mxu0 0.0
        %1224 = vmatpush1.msra.mxu0 0.0
        %1225 = vmatprep.subr.mxu0 0.0
        %1226 = vmatpush1.msra.mxu0 0.0
        %1227 = vmatprep.subr.mxu0 0.0
        %1228 = vmatpush1.msra.mxu0 0.0
        %1229 = vmatprep.subr.mxu0 0.0
        %1230 = vmatpush1.msra.mxu0 0.0
        %1231 = vmatprep.subr.mxu0 0.0
        %1232 = vmatpush1.msra.mxu0 0.0
        %1233 = vmatprep.subr.mxu0 0.0
        %1234 = vmatpush1.msra.mxu0 0.0
        %1235 = vmatprep.subr.mxu0 0.0
        %1236 = vmatpush1.msra.mxu0 0.0
        %1237 = vmatprep.subr.mxu0 0.0
        %1238 = vmatpush1.msra.mxu0 0.0
        %1239 = vmatprep.subr.mxu0 0.0
        %1240 = vmatpush1.msra.mxu0 0.0
        %1241 = vmatprep.subr.mxu0 0.0
        %1242 = vmatpush1.msra.mxu0 0.0
        %1243 = vmatprep.subr.mxu0 0.0
        %1244 = vmatpush1.msra.mxu0 0.0
        %1245 = vmatprep.subr.mxu0 0.0
        %1246 = vmatpush1.msra.mxu0 0.0
        %1247 = vmatprep.mubr.f32.mxu0 0.0
        %1248 = vmatmul.mubr.f32.gmra.mrb[0].mxu0 %v1181
        %v1249 = vpop.f32.mrb[0].mxu0
        %v1250 = vadd.f32 0.0, %v1249
        %v1251 = vpop.f32.mrb[0].mxu0
        %1252 = vdwg.mxu0
        %v1254 = vsel %vm1135, %v1177, 0
        %1256 = vmatprep.subr.mxu0 0.0
        %1257 = vmatpush1.msra.mxu0 %v796
        %1258 = vmatprep.subr.mxu0 0.0
        %1259 = vmatpush1.msra.mxu0 %v798
        %1260 = vmatprep.subr.mxu0 0.0
        %1261 = vmatpush1.msra.mxu0 %v800
        %1262 = vmatprep.subr.mxu0 0.0
        %1263 = vmatpush1.msra.mxu0 0.0
        %1264 = vmatprep.subr.mxu0 0.0
        %1265 = vmatpush1.msra.mxu0 0.0
        %1266 = vmatprep.subr.mxu0 0.0
        %1267 = vmatpush1.msra.mxu0 0.0
        %1268 = vmatprep.subr.mxu0 0.0
        %1269 = vmatpush1.msra.mxu0 0.0
        %1270 = vmatprep.subr.mxu0 0.0
        %1271 = vmatpush1.msra.mxu0 0.0
        %1272 = vmatprep.subr.mxu0 0.0
        %1273 = vmatpush1.msra.mxu0 0.0
        %1274 = vmatprep.subr.mxu0 0.0
        %1275 = vmatpush1.msra.mxu0 0.0
        %1276 = vmatprep.subr.mxu0 0.0
        %1277 = vmatpush1.msra.mxu0 0.0
        %1278 = vmatprep.subr.mxu0 0.0
        %1279 = vmatpush1.msra.mxu0 0.0
        %1280 = vmatprep.subr.mxu0 0.0
        %1281 = vmatpush1.msra.mxu0 0.0
        %1282 = vmatprep.subr.mxu0 0.0
        %1283 = vmatpush1.msra.mxu0 0.0
        %1284 = vmatprep.subr.mxu0 0.0
        %1285 = vmatpush1.msra.mxu0 0.0
        %1286 = vmatprep.subr.mxu0 0.0
        %1287 = vmatpush1.msra.mxu0 0.0
        %1288 = vmatprep.subr.mxu0 0.0
        %1289 = vmatpush1.msra.mxu0 0.0
        %1290 = vmatprep.subr.mxu0 0.0
        %1291 = vmatpush1.msra.mxu0 0.0
        %1292 = vmatprep.subr.mxu0 0.0
        %1293 = vmatpush1.msra.mxu0 0.0
        %1294 = vmatprep.subr.mxu0 0.0
        %1295 = vmatpush1.msra.mxu0 0.0
        %1296 = vmatprep.subr.mxu0 0.0
        %1297 = vmatpush1.msra.mxu0 0.0
        %1298 = vmatprep.subr.mxu0 0.0
        %1299 = vmatpush1.msra.mxu0 0.0
        %1300 = vmatprep.subr.mxu0 0.0
        %1301 = vmatpush1.msra.mxu0 0.0
        %1302 = vmatprep.subr.mxu0 0.0
        %1303 = vmatpush1.msra.mxu0 0.0
        %1304 = vmatprep.subr.mxu0 0.0
        %1305 = vmatpush1.msra.mxu0 0.0
        %1306 = vmatprep.subr.mxu0 0.0
        %1307 = vmatpush1.msra.mxu0 0.0
        %1308 = vmatprep.subr.mxu0 0.0
        %1309 = vmatpush1.msra.mxu0 0.0
        %1310 = vmatprep.subr.mxu0 0.0
        %1311 = vmatpush1.msra.mxu0 0.0
        %1312 = vmatprep.subr.mxu0 0.0
        %1313 = vmatpush1.msra.mxu0 0.0
        %1314 = vmatprep.subr.mxu0 0.0
        %1315 = vmatpush1.msra.mxu0 0.0
        %1316 = vmatprep.subr.mxu0 0.0
        %1317 = vmatpush1.msra.mxu0 0.0
        %1318 = vmatprep.subr.mxu0 0.0
        %1319 = vmatpush1.msra.mxu0 0.0
        %1320 = vmatprep.mubr.f32.mxu0 0.0
        %1321 = vmatmul.mubr.f32.gmra.mrb[0].mxu0 %v1254
        %v1322 = vpop.f32.mrb[0].mxu0
        %v1323 = vadd.f32 0.0, %v1322
        %v1324 = vpop.f32.mrb[0].mxu0
        %1325 = vdwg.mxu0
        %v1327 = vsel %vm1135, %v1178, 0
        %1329 = vmatprep.subr.mxu0 0.0
        %1330 = vmatpush1.msra.mxu0 %v805
        %1331 = vmatprep.subr.mxu0 0.0
        %1332 = vmatpush1.msra.mxu0 %v807
        %1333 = vmatprep.subr.mxu0 0.0
        %1334 = vmatpush1.msra.mxu0 %v809
        %1335 = vmatprep.subr.mxu0 0.0
        %1336 = vmatpush1.msra.mxu0 0.0
        %1337 = vmatprep.subr.mxu0 0.0
        %1338 = vmatpush1.msra.mxu0 0.0
        %1339 = vmatprep.subr.mxu0 0.0
        %1340 = vmatpush1.msra.mxu0 0.0
        %1341 = vmatprep.subr.mxu0 0.0
        %1342 = vmatpush1.msra.mxu0 0.0
        %1343 = vmatprep.subr.mxu0 0.0
        %1344 = vmatpush1.msra.mxu0 0.0
        %1345 = vmatprep.subr.mxu0 0.0
        %1346 = vmatpush1.msra.mxu0 0.0
        %1347 = vmatprep.subr.mxu0 0.0
        %1348 = vmatpush1.msra.mxu0 0.0
        %1349 = vmatprep.subr.mxu0 0.0
        %1350 = vmatpush1.msra.mxu0 0.0
        %1351 = vmatprep.subr.mxu0 0.0
        %1352 = vmatpush1.msra.mxu0 0.0
        %1353 = vmatprep.subr.mxu0 0.0
        %1354 = vmatpush1.msra.mxu0 0.0
        %1355 = vmatprep.subr.mxu0 0.0
        %1356 = vmatpush1.msra.mxu0 0.0
        %1357 = vmatprep.subr.mxu0 0.0
        %1358 = vmatpush1.msra.mxu0 0.0
        %1359 = vmatprep.subr.mxu0 0.0
        %1360 = vmatpush1.msra.mxu0 0.0
        %1361 = vmatprep.subr.mxu0 0.0
        %1362 = vmatpush1.msra.mxu0 0.0
        %1363 = vmatprep.subr.mxu0 0.0
        %1364 = vmatpush1.msra.mxu0 0.0
        %1365 = vmatprep.subr.mxu0 0.0
        %1366 = vmatpush1.msra.mxu0 0.0
        %1367 = vmatprep.subr.mxu0 0.0
        %1368 = vmatpush1.msra.mxu0 0.0
        %1369 = vmatprep.subr.mxu0 0.0
        %1370 = vmatpush1.msra.mxu0 0.0
        %1371 = vmatprep.subr.mxu0 0.0
        %1372 = vmatpush1.msra.mxu0 0.0
        %1373 = vmatprep.subr.mxu0 0.0
        %1374 = vmatpush1.msra.mxu0 0.0
        %1375 = vmatprep.subr.mxu0 0.0
        %1376 = vmatpush1.msra.mxu0 0.0
        %1377 = vmatprep.subr.mxu0 0.0
        %1378 = vmatpush1.msra.mxu0 0.0
        %1379 = vmatprep.subr.mxu0 0.0
        %1380 = vmatpush1.msra.mxu0 0.0
        %1381 = vmatprep.subr.mxu0 0.0
        %1382 = vmatpush1.msra.mxu0 0.0
        %1383 = vmatprep.subr.mxu0 0.0
        %1384 = vmatpush1.msra.mxu0 0.0
        %1385 = vmatprep.subr.mxu0 0.0
        %1386 = vmatpush1.msra.mxu0 0.0
        %1387 = vmatprep.subr.mxu0 0.0
        %1388 = vmatpush1.msra.mxu0 0.0
        %1389 = vmatprep.subr.mxu0 0.0
        %1390 = vmatpush1.msra.mxu0 0.0
        %1391 = vmatprep.subr.mxu0 0.0
        %1392 = vmatpush1.msra.mxu0 0.0
        %1393 = vmatprep.mubr.f32.mxu0 0.0
        %1394 = vmatmul.mubr.f32.gmra.mrb[0].mxu0 %v1327
        %v1395 = vpop.f32.mrb[0].mxu0
        %v1396 = vadd.f32 0.0, %v1395
        %v1397 = vpop.f32.mrb[0].mxu0
        %1398 = vdwg.mxu0
        %v1400 = vsel %vm1135, %v1179, 0
        %1402 = vmatprep.subr.mxu0 0.0
        %1403 = vmatpush1.msra.mxu0 %v814
        %1404 = vmatprep.subr.mxu0 0.0
        %1405 = vmatpush1.msra.mxu0 %v816
        %1406 = vmatprep.subr.mxu0 0.0
        %1407 = vmatpush1.msra.mxu0 %v818
        %1408 = vmatprep.subr.mxu0 0.0
        %1409 = vmatpush1.msra.mxu0 0.0
        %1410 = vmatprep.subr.mxu0 0.0
        %1411 = vmatpush1.msra.mxu0 0.0
        %1412 = vmatprep.subr.mxu0 0.0
        %1413 = vmatpush1.msra.mxu0 0.0
        %1414 = vmatprep.subr.mxu0 0.0
        %1415 = vmatpush1.msra.mxu0 0.0
        %1416 = vmatprep.subr.mxu0 0.0
        %1417 = vmatpush1.msra.mxu0 0.0
        %1418 = vmatprep.subr.mxu0 0.0
        %1419 = vmatpush1.msra.mxu0 0.0
        %1420 = vmatprep.subr.mxu0 0.0
        %1421 = vmatpush1.msra.mxu0 0.0
        %1422 = vmatprep.subr.mxu0 0.0
        %1423 = vmatpush1.msra.mxu0 0.0
        %1424 = vmatprep.subr.mxu0 0.0
        %1425 = vmatpush1.msra.mxu0 0.0
        %1426 = vmatprep.subr.mxu0 0.0
        %1427 = vmatpush1.msra.mxu0 0.0
        %1428 = vmatprep.subr.mxu0 0.0
        %1429 = vmatpush1.msra.mxu0 0.0
        %1430 = vmatprep.subr.mxu0 0.0
        %1431 = vmatpush1.msra.mxu0 0.0
        %1432 = vmatprep.subr.mxu0 0.0
        %1433 = vmatpush1.msra.mxu0 0.0
        %1434 = vmatprep.subr.mxu0 0.0
        %1435 = vmatpush1.msra.mxu0 0.0
        %1436 = vmatprep.subr.mxu0 0.0
        %1437 = vmatpush1.msra.mxu0 0.0
        %1438 = vmatprep.subr.mxu0 0.0
        %1439 = vmatpush1.msra.mxu0 0.0
        %1440 = vmatprep.subr.mxu0 0.0
        %1441 = vmatpush1.msra.mxu0 0.0
        %1442 = vmatprep.subr.mxu0 0.0
        %1443 = vmatpush1.msra.mxu0 0.0
        %1444 = vmatprep.subr.mxu0 0.0
        %1445 = vmatpush1.msra.mxu0 0.0
        %1446 = vmatprep.subr.mxu0 0.0
        %1447 = vmatpush1.msra.mxu0 0.0
        %1448 = vmatprep.subr.mxu0 0.0
        %1449 = vmatpush1.msra.mxu0 0.0
        %1450 = vmatprep.subr.mxu0 0.0
        %1451 = vmatpush1.msra.mxu0 0.0
        %1452 = vmatprep.subr.mxu0 0.0
        %1453 = vmatpush1.msra.mxu0 0.0
        %1454 = vmatprep.subr.mxu0 0.0
        %1455 = vmatpush1.msra.mxu0 0.0
        %1456 = vmatprep.subr.mxu0 0.0
        %1457 = vmatpush1.msra.mxu0 0.0
        %1458 = vmatprep.subr.mxu0 0.0
        %1459 = vmatpush1.msra.mxu0 0.0
        %1460 = vmatprep.subr.mxu0 0.0
        %1461 = vmatpush1.msra.mxu0 0.0
        %1462 = vmatprep.subr.mxu0 0.0
        %1463 = vmatpush1.msra.mxu0 0.0
        %1464 = vmatprep.subr.mxu0 0.0
        %1465 = vmatpush1.msra.mxu0 0.0
        %1466 = vmatprep.mubr.f32.mxu0 0.0
        %1467 = vmatmul.mubr.f32.gmra.mrb[0].mxu0 %v1400
        %v1468 = vpop.f32.mrb[0].mxu0
        %v1469 = vadd.f32 0.0, %v1468
        %v1470 = vpop.f32.mrb[0].mxu0
        %1471 = vdwg.mxu0
        %1473 = vrot.lane.b32.xlu0 %v1323, 16
        %v1474 = vpop.permute.xlu0 %1473
        %1477 = vrot.lane.b32.xlu0 %v1396, 32
        %v1478 = vpop.permute.xlu0 %1477
        %1481 = vrot.lane.b32.xlu0 %v1469, 48
        %v1482 = vpop.permute.xlu0 %1481
        %v1484 = vsel %vm822, %v1250, %v1474
        %v1485 = vsel %vm426, %v1484, %v1478
        %vm1486 = vcmask 392192
        %v1487 = vsel %vm1486, %v1485, %v1482
        %v1488 = vld [vmem:[%s8] sm:$0xff]
        %v1489 = vld [vmem:[%s8 + $0x8] sm:$0xff]
        %v1490 = vld [vmem:[%s8 + $0x10] sm:$0xff]
        %v1491 = vld [vmem:[%s8 + $0x18] sm:$0xff]
        %v1492 = vld [vmem:[%s8 + $0x20] sm:$0xff]
        %v1493 = vld [vmem:[%s8 + $0x28] sm:$0xff]
        %v1494 = vld [vmem:[%s8 + $0x30] sm:$0xff]
        %v1495 = vld [vmem:[%s8 + $0x38] sm:$0xff]
        %vm1496 = vcmask 523264
        %v1498 = vsel %vm1496, %v1487, 0
        %1500 = vmatprep.subr.mxu0 0.0
        %1501 = vmatpush1.msra.mxu0 %v1488
        %1502 = vmatprep.subr.mxu0 0.0
        %1503 = vmatpush1.msra.mxu0 %v1489
        %1504 = vmatprep.subr.mxu0 0.0
        %1505 = vmatpush1.msra.mxu0 %v1490
        %1506 = vmatprep.subr.mxu0 0.0
        %1507 = vmatpush1.msra.mxu0 %v1491
        %1508 = vmatprep.subr.mxu0 0.0
        %1509 = vmatpush1.msra.mxu0 %v1492
        %1510 = vmatprep.subr.mxu0 0.0
        %1511 = vmatpush1.msra.mxu0 %v1493
        %1512 = vmatprep.subr.mxu0 0.0
        %1513 = vmatpush1.msra.mxu0 %v1494
        %1514 = vmatprep.subr.mxu0 0.0
        %1515 = vmatpush1.msra.mxu0 %v1495
        %1516 = vmatprep.subr.mxu0 0.0
        %1517 = vmatpush1.msra.mxu0 0.0
        %1518 = vmatprep.subr.mxu0 0.0
        %1519 = vmatpush1.msra.mxu0 0.0
        %1520 = vmatprep.subr.mxu0 0.0
        %1521 = vmatpush1.msra.mxu0 0.0
        %1522 = vmatprep.subr.mxu0 0.0
        %1523 = vmatpush1.msra.mxu0 0.0
        %1524 = vmatprep.subr.mxu0 0.0
        %1525 = vmatpush1.msra.mxu0 0.0
        %1526 = vmatprep.subr.mxu0 0.0
        %1527 = vmatpush1.msra.mxu0 0.0
        %1528 = vmatprep.subr.mxu0 0.0
        %1529 = vmatpush1.msra.mxu0 0.0
        %1530 = vmatprep.subr.mxu0 0.0
        %1531 = vmatpush1.msra.mxu0 0.0
        %1532 = vmatprep.subr.mxu0 0.0
        %1533 = vmatpush1.msra.mxu0 0.0
        %1534 = vmatprep.subr.mxu0 0.0
        %1535 = vmatpush1.msra.mxu0 0.0
        %1536 = vmatprep.subr.mxu0 0.0
        %1537 = vmatpush1.msra.mxu0 0.0
        %1538 = vmatprep.subr.mxu0 0.0
        %1539 = vmatpush1.msra.mxu0 0.0
        %1540 = vmatprep.subr.mxu0 0.0
        %1541 = vmatpush1.msra.mxu0 0.0
        %1542 = vmatprep.subr.mxu0 0.0
        %1543 = vmatpush1.msra.mxu0 0.0
        %1544 = vmatprep.subr.mxu0 0.0
        %1545 = vmatpush1.msra.mxu0 0.0
        %1546 = vmatprep.subr.mxu0 0.0
        %1547 = vmatpush1.msra.mxu0 0.0
        %1548 = vmatprep.subr.mxu0 0.0
        %1549 = vmatpush1.msra.mxu0 0.0
        %1550 = vmatprep.subr.mxu0 0.0
        %1551 = vmatpush1.msra.mxu0 0.0
        %1552 = vmatprep.subr.mxu0 0.0
        %1553 = vmatpush1.msra.mxu0 0.0
        %1554 = vmatprep.subr.mxu0 0.0
        %1555 = vmatpush1.msra.mxu0 0.0
        %1556 = vmatprep.subr.mxu0 0.0
        %1557 = vmatpush1.msra.mxu0 0.0
        %1558 = vmatprep.subr.mxu0 0.0
        %1559 = vmatpush1.msra.mxu0 0.0
        %1560 = vmatprep.subr.mxu0 0.0
        %1561 = vmatpush1.msra.mxu0 0.0
        %1562 = vmatprep.subr.mxu0 0.0
        %1563 = vmatpush1.msra.mxu0 0.0
        %1564 = vmatprep.mubr.f32.mxu0 0.0
        %1565 = vmatmul.mubr.f32.gmra.mrb[0].mxu0 %v1498
        %v1566 = vpop.f32.mrb[0].mxu0
        %v1567 = vadd.f32 0.0, %v1566
        %v1568 = vpop.f32.mrb[0].mxu0
        %1569 = vdwg.mxu0
        %v1570 = vld [vmem:[%s9] sm:$0x1]
        %v1571 = vld [vmem:[%s10] sm:$0x1]
        %v1572 = vsel %vm426, %v1567, 0.0
        %1573 = vadd.xlane.f32.xlu0 %v1572
        %v1574 = vpop.xlane.xlu0 %1573
        %v1575 = vmul.f32 %v1574, %v433
        %v1576 = vsub.f32 %v1567, %v1575
        %v1577 = vmul.f32 %v1576, %v1576
        %v1578 = vsel %vm426, %v1577, 0.0
        %1579 = vadd.xlane.f32.xlu0 %v1578
        %v1580 = vpop.xlane.xlu0 %1579
        %v1581 = vmul.f32 %v1580, %v433
        %v1582 = vadd.f32 %v1581, 1e-05
        %v1583 = vrsqrt.pop %v1582
        %v1584 = vmul.f32 %v1576, %v1583
        %v1586 = vlaneseq
        %v1587 = vshrl.u32 %v1586, 7
        %v1588 = vsub.s32 0, %v1587
        %v1589 = vrot.slane %v1570, %v1588
        %v1591 = vmul.f32 %v1584, %v1589
        %v1593 = vlaneseq
        %v1594 = vshrl.u32 %v1593, 7
        %v1595 = vsub.s32 0, %v1594
        %v1596 = vrot.slane %v1571, %v1595
        %v1598 = vadd.f32 %v1591, %v1596
        %1599 = vst.msk [vmem:[%s416] sm:$0xff] %vm426, %v1598
        %s1600 = sand.u32 %s277, 1
        %s1601 = scalar_lea.sflag [#allocation4], %s1600
        %s1602 = sand.u32 %s277, 1
        %s1603 = smul.addr %s1602, 8
        %s1604 = scalar_lea.vmem [#allocation5], %s1603
        // Predicated region
        $region69: #{tpu_custom_call.1} parent=63 // pred_check
          %p1605 = pneg %p287
        $region70: #{tpu_custom_call.1} parent=63 // pred_check_branch
          %1607 = sbr.rel (%p1605) target = $region72
        $region71: #{tpu_custom_call.1} parent=63 // pred_region
          %s1609 = ssub.s32 128, 128
          %1610 = vsyncadd %s1601, %s1609
          %s1611 = smul.addr %s28, 128
          %s1612 = scalar_lea.hbm %s11, %s1611
          %s1614 = sshll.u32 %s1604, 4
          %s1615 = int_to_ptr.vmem [resolvable:$true] %s1614
          %1617 = dma.vmem_to_hbm [thread:$0]  %s1615, 128, %s1612, %s1601
        $region72: #{tpu_custom_call.1} parent=63 // pred_fallthru
          _
      $region64: #{tpu_custom_call.1} parent=5 // pred_fallthru
        _
      %p1618 = scmp.le.s32.totalorder 2, %s23
      // Predicated region
      $region73: #{tpu_custom_call.1} parent=5 // pred_check
        %p1619 = pneg %p1618
      $region74: #{tpu_custom_call.1} parent=5 // pred_check_branch
        %1621 = sbr.rel (%p1619) target = $region76
      $region75: #{tpu_custom_call.1} parent=5 // pred_region
        %s1622 = ssub.s32 %s23, 2
        // Predicated region
        $region77: #{tpu_custom_call.1} parent=75 // pred_check
          %p1623 = pneg %p293
        $region78: #{tpu_custom_call.1} parent=75 // pred_check_branch
          %1625 = sbr.rel (%p1623) target = $region80
        $region79: #{tpu_custom_call.1} parent=75 // pred_region
          %s1626 = sand.u32 %s278, 1
          %s1627 = scalar_lea.sflag [#allocation4], %s1626
          %s1628 = sand.u32 %s278, 1
          %s1629 = smul.addr %s1628, 8
          %s1630 = scalar_lea.vmem [#allocation5], %s1629
          %1631 = dma.done %s1627, 128
        $region80: #{tpu_custom_call.1} parent=75 // pred_fallthru
          _
      $region76: #{tpu_custom_call.1} parent=5 // pred_fallthru
        _
    $region6: #{tpu_custom_call.1} parent=1 // loop_footer
      %s27 = sadd.s32 1, %s23
    $region7: #{tpu_custom_call.1} parent=1 // loop_footer_branch
      %22 = sbr.rel target = $region3
    $region8: #{tpu_custom_call.1} parent=1 // loop_exit
      _
    %1632 = vsyncpa [#allocation3], 1
    %s1633 = scalar_lea.sflag [#allocation3], 1
    %1634 = vsyncpa %s1633, 1
    %1635 = vsyncpa [#allocation4], 1
    %s1636 = scalar_lea.sflag [#allocation4], 1
    %1637 = vsyncpa %s1636, 1

</llo_original>
